<compile_context>
chip_gen: v7x
topology: tpu7x:2x2x1
jax: 0.10.0
libtpu: 0.0.40
codegen_flags: <defaults>
</compile_context>

<pallas_src>
import math
import functools

import jax
import jax.numpy as jnp
from jax.experimental import pallas as pl
from jax.experimental.pallas import tpu as pltpu


_SQRT2_INV = 1.0 / math.sqrt(2.0)
_NEG_BIG = -1e30


def _resgnn_kernel(x_ref, ef_ref, mb_ref,
                   wlr1_ref, blr1_ref, we1_ref, att1_ref, bo1_ref, g1_ref, b1_ref,
                   wlr2_ref, blr2_ref, we2_ref, att2_ref, bo2_ref, g2_ref, b2_ref,
                   out_ref, *, num_heads, negative_slope=0.2):
    """Fused ResGNN block: GELU(LN2(gat2(GELU(LN1(gat1(x))))) + x), whole graph in VMEM."""
    N, D = x_ref.shape
    H = num_heads
    HD = H * D

    ef = ef_ref[...]                                   # [N*N, E] bf16, row (dst*N + src)
    mb = mb_ref[...]                                   # [N*N, 1]  additive softmax bias
    head_iota = jax.lax.broadcasted_iota(jnp.int32, (1, 1, H), 2)

    def gat_layer(x, wlr_ref, blr_ref, we_ref, att_ref, bo_ref, gamma_ref, beta_ref, residual):
        # ---- fused lin_l || lin_r projection: one 2*HD-wide MXU pass -------------------
        g = jnp.dot(x.astype(jnp.bfloat16), wlr_ref[...],
                    preferred_element_type=jnp.float32) + blr_ref[...]        # [N, 2HD]
        gl = g[:, :HD]                                                        # lin_l(x_j)
        gr = g[:, HD:]                                                        # lin_r(x_i)
        ge = jnp.dot(ef, we_ref[...], preferred_element_type=jnp.float32)     # [N*N, HD]

        # ---- GATv2 logits: a . LeakyReLU(x_i + x_j + e_ij), lane-packed over heads -----
        comb = gr[:, None, :] + gl[None, :, :] + ge.reshape(N, N, HD)         # [dst, src, HD]
        comb = jnp.where(comb > 0, comb, negative_slope * comb)
        score = jnp.dot(comb.reshape(N * N, HD), att_ref[...],
                        preferred_element_type=jnp.float32)                   # [N*N, H]
        score = (score + mb).reshape(N, N, H)

        # ---- masked softmax over source nodes (axis 1), per (dst, head) ----------------
        score = score - jnp.max(score, axis=1, keepdims=True)
        p = jnp.exp(score)
        denom = jnp.maximum(jnp.sum(p, axis=1, keepdims=True), 1e-20)
        alpha = p * pl.reciprocal(denom, approx=False)                        # [N, N, H]

        # ---- aggregation on the MXU: one [N,N] x [N,D] matmul per head -----------------
        acc = None
        for h in range(H):
            a_h = jnp.sum(jnp.where(head_iota == h, alpha, 0.0), axis=-1)     # [N, N]
            g_h = gl[:, h * D:(h + 1) * D]                                    # [N, D]
            part = jnp.dot(a_h, g_h, preferred_element_type=jnp.float32)
            acc = part if acc is None else acc + part
        agg = acc * (1.0 / H) + bo_ref[...]                                   # head mean + bias

        # ---- LayerNorm (+ optional residual) + exact-erf GELU (all f32) ----------------
        mu = jnp.mean(agg, axis=-1, keepdims=True)
        var = jnp.mean((agg - mu) ** 2, axis=-1, keepdims=True)
        y = (agg - mu) * jax.lax.rsqrt(var + 1e-5) * gamma_ref[...] + beta_ref[...]
        if residual is not None:
            y = y + residual
        return 0.5 * y * (1.0 + jax.lax.erf(y * _SQRT2_INV))

    x = x_ref[...]
    h1 = gat_layer(x, wlr1_ref, blr1_ref, we1_ref, att1_ref, bo1_ref, g1_ref, b1_ref,
                   residual=None)                        # GELU(LN1(gnn1(x)))
    out_ref[...] = gat_layer(h1, wlr2_ref, blr2_ref, we2_ref, att2_ref, bo2_ref, g2_ref, b2_ref,
                             residual=x)                 # GELU(LN2(gnn2(h1)) + x)


def _const_spec(a):
    """Whole-array block (grid=(1,)): DMA'd once, resident for the whole call."""
    zeros = (0,) * a.ndim
    return pl.BlockSpec(a.shape, lambda i: zeros)


def _build_dense_edges(edge_index, edge_attr, num_nodes):
    """PyG semantics: add self-loops with fill_value='mean' (input assumed loop/dup free)."""
    src, dst = edge_index[0], edge_index[1]
    edge_dim = edge_attr.shape[-1]
    sums = jnp.zeros((num_nodes, edge_dim), jnp.float32).at[dst].add(edge_attr)
    counts = jnp.zeros((num_nodes,), jnp.float32).at[dst].add(1.0)
    loop_attr = sums / jnp.maximum(counts, 1.0)[:, None]           # scatter-mean over targets

    ef = jnp.zeros((num_nodes, num_nodes, edge_dim), jnp.float32).at[dst, src].set(edge_attr)
    mask = jnp.zeros((num_nodes, num_nodes), jnp.float32).at[dst, src].set(1.0)
    diag = jnp.arange(num_nodes)
    ef = ef.at[diag, diag].set(loop_attr)
    mask = mask.at[diag, diag].set(1.0)

    mask_bias = jnp.where(mask > 0, 0.0, _NEG_BIG).reshape(num_nodes * num_nodes, 1)
    return ef.reshape(num_nodes * num_nodes, edge_dim), mask_bias.astype(jnp.float32)


def resgnn_block(h, edge_index, edge_attr, params, *, num_heads):
    N, D = h.shape
    H = num_heads

    ef, mask_bias = _build_dense_edges(edge_index, edge_attr, N)
    ef = ef.astype(jnp.bfloat16)                                   # MXU operand only

    (wl1, bl1, wr1, br1, we1, att1, bo1, g1, be1,
     wl2, bl2, wr2, br2, we2, att2, bo2, g2, be2) = params

    eye_h = jnp.eye(H, dtype=jnp.float32)

    def prep(wl, bl, wr, br, we, att, bo):
        wlr = jnp.concatenate([wl, wr], axis=1).astype(jnp.bfloat16)       # [D, 2*H*D]
        blr = jnp.concatenate([bl, br], axis=1)                            # [1, 2*H*D]
        # Block-diagonal attention matrix: attbd[h*D+d, h'] = att[h, d] * (h == h')
        attbd = (att[:, :, None] * eye_h[:, None, :]).reshape(H * D, H)
        return (wlr, blr, we.astype(jnp.bfloat16), attbd, bo)

    p1 = prep(wl1, bl1, wr1, br1, we1, att1, bo1)
    p2 = prep(wl2, bl2, wr2, br2, we2, att2, bo2)

    inputs = (h, ef, mask_bias, *p1, g1, be1, *p2, g2, be2)

    return pl.pallas_call(
        functools.partial(_resgnn_kernel, num_heads=H),
        grid=(1,),                                        # whole graph fits VMEM: one step
        in_specs=[_const_spec(a) for a in inputs],
        out_specs=pl.BlockSpec((N, D), lambda i: (0, 0)),
        out_shape=jax.ShapeDtypeStruct((N, D), jnp.float32),
        compiler_params=pltpu.CompilerParams(
            dimension_semantics=("arbitrary",)),
    )(*inputs)


def init_params(key, model_dim, num_heads, edge_dim):
    D, H, E = model_dim, num_heads, edge_dim

    def glorot(k, fan_in, fan_out, shape):
        lim = math.sqrt(6.0 / (fan_in + fan_out))
        return jax.random.uniform(k, shape, jnp.float32, -lim, lim)

    def gnn_params(k):
        k0, k1, k2, k3 = jax.random.split(k, 4)
        wl = glorot(k0, D, H * D, (D, H * D))          # lin_l weight (pre-transposed)
        bl = jnp.zeros((1, H * D), jnp.float32)
        wr = glorot(k1, D, H * D, (D, H * D))          # lin_r weight (pre-transposed)
        br = jnp.zeros((1, H * D), jnp.float32)
        we = glorot(k2, E, H * D, (E, H * D))          # lin_edge weight (pre-transposed, no bias)
        att = glorot(k3, D, 1, (H, D))                 # attention vector a, per head
        bo = jnp.zeros((1, D), jnp.float32)            # output bias (concat=False)
        return (wl, bl, wr, br, we, att, bo)

    k1, k2 = jax.random.split(key, 2)
    p1 = gnn_params(k1)
    p2 = gnn_params(k2)
    norm1 = (jnp.ones((1, D), jnp.float32), jnp.zeros((1, D), jnp.float32))
    norm2 = (jnp.ones((1, D), jnp.float32), jnp.zeros((1, D), jnp.float32))
    return p1 + norm1 + p2 + norm2


if __name__ == "__main__":
    N, MODEL_DIM, NUM_HEADS, EDGE_DIM = 16, 32, 4, 8     # H*D = 128 lanes

    key = jax.random.PRNGKey(0)
    kh, ke, kp = jax.random.split(key, 3)

    h = jax.random.normal(kh, (N, MODEL_DIM), jnp.float32)

    # deterministic graph: ring edges + skip-3 edges (no self-loops, no duplicates)
    idx = jnp.arange(N)
    src = jnp.concatenate([idx, idx]).astype(jnp.int32)
    dst = jnp.concatenate([(idx + 1) % N, (idx + 3) % N]).astype(jnp.int32)
    edge_index = jnp.stack([src, dst])                   # [2, 32]
    edge_attr = jax.random.normal(ke, (edge_index.shape[1], EDGE_DIM), jnp.float32)

    params = init_params(kp, MODEL_DIM, NUM_HEADS, EDGE_DIM)

    fn = jax.jit(functools.partial(resgnn_block, num_heads=NUM_HEADS))
    out = jax.block_until_ready(fn(h, edge_index, edge_attr, params))

    assert out.shape == (N, MODEL_DIM)
    assert bool(jnp.all(jnp.isfinite(out)))
    print("KERNEL_OK")
</pallas_src>

<mosaic_0001>
module attributes {stable_mosaic.version = 11 : i64} {
  func.func private @main(%arg0: i32) attributes {dimension_semantics = [#tpu.dimension_semantics<core_parallel>], iteration_bounds = array<i64: 2>, tpu.core_type = #tpu.core_type<sc_scalar_subcore>, window_params = []} {
    return
  }
}

module attributes {stable_mosaic.version = 11 : i64} {
  func.func private @main(%arg0: i32) attributes {dimension_semantics = [#tpu.dimension_semantics<core_parallel>], iteration_bounds = array<i64: 2>, tpu.core_type = #tpu.core_type<sc_scalar_subcore>, window_params = []} {
    return
  }
}

module attributes {stable_mosaic.version = 11 : i64} {
  func.func @_resgnn_kernel(%arg0: i32, %arg1: memref<16x32xf32, #tpu.memory_space<vmem>>, %arg2: memref<256x8xbf16, #tpu.memory_space<vmem>>, %arg3: memref<256x1xf32, #tpu.memory_space<vmem>>, %arg4: memref<32x256xbf16, #tpu.memory_space<vmem>>, %arg5: memref<1x256xf32, #tpu.memory_space<vmem>>, %arg6: memref<8x128xbf16, #tpu.memory_space<vmem>>, %arg7: memref<128x4xf32, #tpu.memory_space<vmem>>, %arg8: memref<1x32xf32, #tpu.memory_space<vmem>>, %arg9: memref<1x32xf32, #tpu.memory_space<vmem>>, %arg10: memref<1x32xf32, #tpu.memory_space<vmem>>, %arg11: memref<32x256xbf16, #tpu.memory_space<vmem>>, %arg12: memref<1x256xf32, #tpu.memory_space<vmem>>, %arg13: memref<8x128xbf16, #tpu.memory_space<vmem>>, %arg14: memref<128x4xf32, #tpu.memory_space<vmem>>, %arg15: memref<1x32xf32, #tpu.memory_space<vmem>>, %arg16: memref<1x32xf32, #tpu.memory_space<vmem>>, %arg17: memref<1x32xf32, #tpu.memory_space<vmem>>, %arg18: memref<16x32xf32, #tpu.memory_space<vmem>>) attributes {dimension_semantics = [#tpu.dimension_semantics<arbitrary>], iteration_bounds = array<i64: 1>, scalar_prefetch = 0 : i64, scratch_operands = 0 : i64, tpu.core_type = #tpu.core_type<tc>, window_params = [{pipeline_mode = #tpu.pipeline_mode<synchronous>, transform_indices = @transform_0, window_bounds = array<i64: 16, 32>}, {pipeline_mode = #tpu.pipeline_mode<synchronous>, transform_indices = @transform_1, window_bounds = array<i64: 256, 8>}, {pipeline_mode = #tpu.pipeline_mode<synchronous>, transform_indices = @transform_2, window_bounds = array<i64: 256, 1>}, {pipeline_mode = #tpu.pipeline_mode<synchronous>, transform_indices = @transform_3, window_bounds = array<i64: 32, 256>}, {pipeline_mode = #tpu.pipeline_mode<synchronous>, transform_indices = @transform_4, window_bounds = array<i64: 1, 256>}, {pipeline_mode = #tpu.pipeline_mode<synchronous>, transform_indices = @transform_5, window_bounds = array<i64: 8, 128>}, {pipeline_mode = #tpu.pipeline_mode<synchronous>, transform_indices = @transform_6, window_bounds = array<i64: 128, 4>}, {pipeline_mode = #tpu.pipeline_mode<synchronous>, transform_indices = @transform_7, window_bounds = array<i64: 1, 32>}, {pipeline_mode = #tpu.pipeline_mode<synchronous>, transform_indices = @transform_8, window_bounds = array<i64: 1, 32>}, {pipeline_mode = #tpu.pipeline_mode<synchronous>, transform_indices = @transform_9, window_bounds = array<i64: 1, 32>}, {pipeline_mode = #tpu.pipeline_mode<synchronous>, transform_indices = @transform_10, window_bounds = array<i64: 32, 256>}, {pipeline_mode = #tpu.pipeline_mode<synchronous>, transform_indices = @transform_11, window_bounds = array<i64: 1, 256>}, {pipeline_mode = #tpu.pipeline_mode<synchronous>, transform_indices = @transform_12, window_bounds = array<i64: 8, 128>}, {pipeline_mode = #tpu.pipeline_mode<synchronous>, transform_indices = @transform_13, window_bounds = array<i64: 128, 4>}, {pipeline_mode = #tpu.pipeline_mode<synchronous>, transform_indices = @transform_14, window_bounds = array<i64: 1, 32>}, {pipeline_mode = #tpu.pipeline_mode<synchronous>, transform_indices = @transform_15, window_bounds = array<i64: 1, 32>}, {pipeline_mode = #tpu.pipeline_mode<synchronous>, transform_indices = @transform_16, window_bounds = array<i64: 1, 32>}, {pipeline_mode = #tpu.pipeline_mode<synchronous>, transform_indices = @transform_17, window_bounds = array<i64: 16, 32>}]} {
    %c0 = arith.constant 0 : index
    %c0_0 = arith.constant 0 : index
    %0 = vector.load %arg2[%c0, %c0_0] : memref<256x8xbf16, #tpu.memory_space<vmem>>, vector<256x8xbf16>
    %c0_1 = arith.constant 0 : index
    %c0_2 = arith.constant 0 : index
    %1 = vector.load %arg3[%c0_1, %c0_2] : memref<256x1xf32, #tpu.memory_space<vmem>>, vector<256x1xf32>
    %2 = tpu.iota {dimensions = array<i32: 2>} : vector<1x1x4xi32>
    %c0_3 = arith.constant 0 : index
    %c0_4 = arith.constant 0 : index
    %3 = vector.load %arg1[%c0_3, %c0_4] : memref<16x32xf32, #tpu.memory_space<vmem>>, vector<16x32xf32>
    %4 = arith.truncf %3 : vector<16x32xf32> to vector<16x32xbf16>
    %c0_5 = arith.constant 0 : index
    %c0_6 = arith.constant 0 : index
    %5 = vector.load %arg4[%c0_5, %c0_6] : memref<32x256xbf16, #tpu.memory_space<vmem>>, vector<32x256xbf16>
    %cst = arith.constant dense<0.000000e+00> : vector<16x256xf32>
    %6 = tpu.matmul %4, %5, %cst {dimension_numbers = #tpu.dot_dimension_numbers<[1], [0], [0], [1], [0, 0, 1, 1], [], []>} : vector<16x32xbf16>, vector<32x256xbf16>, vector<16x256xf32> -> vector<16x256xf32>
    %c0_7 = arith.constant 0 : index
    %c0_8 = arith.constant 0 : index
    %7 = vector.load %arg5[%c0_7, %c0_8] : memref<1x256xf32, #tpu.memory_space<vmem>>, vector<1x256xf32>
    %8 = vector.broadcast %7 : vector<1x256xf32> to vector<16x256xf32>
    %9 = arith.addf %6, %8 : vector<16x256xf32>
    %10 = vector.extract_strided_slice %9 {offsets = [0, 0], sizes = [16, 128], strides = [1, 1]} : vector<16x256xf32> to vector<16x128xf32>
    %11 = vector.extract_strided_slice %9 {offsets = [0, 128], sizes = [16, 128], strides = [1, 1]} : vector<16x256xf32> to vector<16x128xf32>
    %c0_9 = arith.constant 0 : index
    %c0_10 = arith.constant 0 : index
    %12 = vector.load %arg6[%c0_9, %c0_10] : memref<8x128xbf16, #tpu.memory_space<vmem>>, vector<8x128xbf16>
    %cst_11 = arith.constant dense<0.000000e+00> : vector<256x128xf32>
    %13 = tpu.matmul %0, %12, %cst_11 {dimension_numbers = #tpu.dot_dimension_numbers<[1], [0], [0], [1], [0, 0, 1, 1], [], []>} : vector<256x8xbf16>, vector<8x128xbf16>, vector<256x128xf32> -> vector<256x128xf32>
    %14 = vector.shape_cast %11 : vector<16x128xf32> to vector<16x1x128xf32>
    %15 = vector.shape_cast %10 : vector<16x128xf32> to vector<1x16x128xf32>
    %16 = vector.broadcast %14 : vector<16x1x128xf32> to vector<16x16x128xf32>
    %17 = vector.broadcast %15 : vector<1x16x128xf32> to vector<16x16x128xf32>
    %18 = arith.addf %16, %17 : vector<16x16x128xf32>
    %19 = vector.shape_cast %13 : vector<256x128xf32> to vector<16x16x128xf32>
    %20 = arith.addf %18, %19 : vector<16x16x128xf32>
    %cst_12 = arith.constant 0.000000e+00 : f32
    %21 = vector.broadcast %cst_12 : f32 to vector<16x16x128xf32>
    %22 = arith.cmpf ogt, %20, %21 : vector<16x16x128xf32>
    %cst_13 = arith.constant 2.000000e-01 : f32
    %23 = vector.broadcast %cst_13 : f32 to vector<16x16x128xf32>
    %24 = arith.mulf %23, %20 : vector<16x16x128xf32>
    %25 = arith.select %22, %20, %24 : vector<16x16x128xi1>, vector<16x16x128xf32>
    %26 = vector.shape_cast %25 : vector<16x16x128xf32> to vector<256x128xf32>
    %c0_14 = arith.constant 0 : index
    %c0_15 = arith.constant 0 : index
    %27 = vector.load %arg7[%c0_14, %c0_15] : memref<128x4xf32, #tpu.memory_space<vmem>>, vector<128x4xf32>
    %cst_16 = arith.constant dense<0.000000e+00> : vector<256x4xf32>
    %28 = tpu.matmul %26, %27, %cst_16 {dimension_numbers = #tpu.dot_dimension_numbers<[1], [0], [0], [1], [0, 0, 1, 1], [], []>} : vector<256x128xf32>, vector<128x4xf32>, vector<256x4xf32> -> vector<256x4xf32>
    %29 = vector.broadcast %1 : vector<256x1xf32> to vector<256x4xf32>
    %30 = arith.addf %28, %29 : vector<256x4xf32>
    %31 = vector.shape_cast %30 : vector<256x4xf32> to vector<16x16x4xf32>
    %cst_17 = arith.constant dense<0xFF800000> : vector<16x4xf32>
    %32 = vector.multi_reduction <maximumf>, %31, %cst_17 [1] : vector<16x16x4xf32> to vector<16x4xf32>
    %33 = vector.shape_cast %32 : vector<16x4xf32> to vector<16x1x4xf32>
    %34 = vector.broadcast %33 : vector<16x1x4xf32> to vector<16x16x4xf32>
    %35 = arith.subf %31, %34 : vector<16x16x4xf32>
    %36 = math.exp %35 : vector<16x16x4xf32>
    %cst_18 = arith.constant dense<0.000000e+00> : vector<16x4xf32>
    %37 = vector.multi_reduction <add>, %36, %cst_18 [1] : vector<16x16x4xf32> to vector<16x4xf32>
    %38 = vector.shape_cast %37 : vector<16x4xf32> to vector<16x1x4xf32>
    %cst_19 = arith.constant 9.99999968E-21 : f32
    %39 = vector.broadcast %cst_19 : f32 to vector<16x1x4xf32>
    %40 = arith.maximumf %38, %39 : vector<16x1x4xf32>
    %41 = tpu.reciprocal %40 : vector<16x1x4xf32> -> vector<16x1x4xf32>
    %42 = vector.broadcast %41 : vector<16x1x4xf32> to vector<16x16x4xf32>
    %43 = arith.mulf %36, %42 : vector<16x16x4xf32>
    %c0_i32 = arith.constant 0 : i32
    %44 = vector.broadcast %c0_i32 : i32 to vector<1x1x4xi32>
    %45 = arith.cmpi eq, %2, %44 : vector<1x1x4xi32>
    %cst_20 = arith.constant 0.000000e+00 : f32
    %46 = vector.shape_cast %45 : vector<1x1x4xi1> to vector<1x1x4xi1>
    %47 = vector.broadcast %46 : vector<1x1x4xi1> to vector<16x16x4xi1>
    %48 = vector.broadcast %cst_20 : f32 to vector<16x16x4xf32>
    %49 = arith.select %47, %43, %48 : vector<16x16x4xi1>, vector<16x16x4xf32>
    %cst_21 = arith.constant dense<0.000000e+00> : vector<16x16xf32>
    %50 = vector.multi_reduction <add>, %49, %cst_21 [2] : vector<16x16x4xf32> to vector<16x16xf32>
    %51 = vector.extract_strided_slice %10 {offsets = [0, 0], sizes = [16, 32], strides = [1, 1]} : vector<16x128xf32> to vector<16x32xf32>
    %cst_22 = arith.constant dense<0.000000e+00> : vector<16x32xf32>
    %52 = tpu.matmul %50, %51, %cst_22 {dimension_numbers = #tpu.dot_dimension_numbers<[1], [0], [0], [1], [0, 0, 1, 1], [], []>} : vector<16x16xf32>, vector<16x32xf32>, vector<16x32xf32> -> vector<16x32xf32>
    %c1_i32 = arith.constant 1 : i32
    %53 = vector.broadcast %c1_i32 : i32 to vector<1x1x4xi32>
    %54 = arith.cmpi eq, %2, %53 : vector<1x1x4xi32>
    %cst_23 = arith.constant 0.000000e+00 : f32
    %55 = vector.shape_cast %54 : vector<1x1x4xi1> to vector<1x1x4xi1>
    %56 = vector.broadcast %55 : vector<1x1x4xi1> to vector<16x16x4xi1>
    %57 = vector.broadcast %cst_23 : f32 to vector<16x16x4xf32>
    %58 = arith.select %56, %43, %57 : vector<16x16x4xi1>, vector<16x16x4xf32>
    %cst_24 = arith.constant dense<0.000000e+00> : vector<16x16xf32>
    %59 = vector.multi_reduction <add>, %58, %cst_24 [2] : vector<16x16x4xf32> to vector<16x16xf32>
    %60 = vector.extract_strided_slice %10 {offsets = [0, 32], sizes = [16, 32], strides = [1, 1]} : vector<16x128xf32> to vector<16x32xf32>
    %cst_25 = arith.constant dense<0.000000e+00> : vector<16x32xf32>
    %61 = tpu.matmul %59, %60, %cst_25 {dimension_numbers = #tpu.dot_dimension_numbers<[1], [0], [0], [1], [0, 0, 1, 1], [], []>} : vector<16x16xf32>, vector<16x32xf32>, vector<16x32xf32> -> vector<16x32xf32>
    %62 = arith.addf %52, %61 : vector<16x32xf32>
    %c2_i32 = arith.constant 2 : i32
    %63 = vector.broadcast %c2_i32 : i32 to vector<1x1x4xi32>
    %64 = arith.cmpi eq, %2, %63 : vector<1x1x4xi32>
    %cst_26 = arith.constant 0.000000e+00 : f32
    %65 = vector.shape_cast %64 : vector<1x1x4xi1> to vector<1x1x4xi1>
    %66 = vector.broadcast %65 : vector<1x1x4xi1> to vector<16x16x4xi1>
    %67 = vector.broadcast %cst_26 : f32 to vector<16x16x4xf32>
    %68 = arith.select %66, %43, %67 : vector<16x16x4xi1>, vector<16x16x4xf32>
    %cst_27 = arith.constant dense<0.000000e+00> : vector<16x16xf32>
    %69 = vector.multi_reduction <add>, %68, %cst_27 [2] : vector<16x16x4xf32> to vector<16x16xf32>
    %70 = vector.extract_strided_slice %10 {offsets = [0, 64], sizes = [16, 32], strides = [1, 1]} : vector<16x128xf32> to vector<16x32xf32>
    %cst_28 = arith.constant dense<0.000000e+00> : vector<16x32xf32>
    %71 = tpu.matmul %69, %70, %cst_28 {dimension_numbers = #tpu.dot_dimension_numbers<[1], [0], [0], [1], [0, 0, 1, 1], [], []>} : vector<16x16xf32>, vector<16x32xf32>, vector<16x32xf32> -> vector<16x32xf32>
    %72 = arith.addf %62, %71 : vector<16x32xf32>
    %c3_i32 = arith.constant 3 : i32
    %73 = vector.broadcast %c3_i32 : i32 to vector<1x1x4xi32>
    %74 = arith.cmpi eq, %2, %73 : vector<1x1x4xi32>
    %cst_29 = arith.constant 0.000000e+00 : f32
    %75 = vector.shape_cast %74 : vector<1x1x4xi1> to vector<1x1x4xi1>
    %76 = vector.broadcast %75 : vector<1x1x4xi1> to vector<16x16x4xi1>
    %77 = vector.broadcast %cst_29 : f32 to vector<16x16x4xf32>
    %78 = arith.select %76, %43, %77 : vector<16x16x4xi1>, vector<16x16x4xf32>
    %cst_30 = arith.constant dense<0.000000e+00> : vector<16x16xf32>
    %79 = vector.multi_reduction <add>, %78, %cst_30 [2] : vector<16x16x4xf32> to vector<16x16xf32>
    %80 = vector.extract_strided_slice %10 {offsets = [0, 96], sizes = [16, 32], strides = [1, 1]} : vector<16x128xf32> to vector<16x32xf32>
    %cst_31 = arith.constant dense<0.000000e+00> : vector<16x32xf32>
    %81 = tpu.matmul %79, %80, %cst_31 {dimension_numbers = #tpu.dot_dimension_numbers<[1], [0], [0], [1], [0, 0, 1, 1], [], []>} : vector<16x16xf32>, vector<16x32xf32>, vector<16x32xf32> -> vector<16x32xf32>
    %82 = arith.addf %72, %81 : vector<16x32xf32>
    %cst_32 = arith.constant 2.500000e-01 : f32
    %83 = vector.broadcast %cst_32 : f32 to vector<16x32xf32>
    %84 = arith.mulf %82, %83 : vector<16x32xf32>
    %c0_33 = arith.constant 0 : index
    %c0_34 = arith.constant 0 : index
    %85 = vector.load %arg8[%c0_33, %c0_34] : memref<1x32xf32, #tpu.memory_space<vmem>>, vector<1x32xf32>
    %86 = vector.broadcast %85 : vector<1x32xf32> to vector<16x32xf32>
    %87 = arith.addf %84, %86 : vector<16x32xf32>
    %cst_35 = arith.constant dense<0.000000e+00> : vector<16xf32>
    %88 = vector.multi_reduction <add>, %87, %cst_35 [1] : vector<16x32xf32> to vector<16xf32>
    %89 = vector.shape_cast %88 : vector<16xf32> to vector<16x1xf32>
    %cst_36 = arith.constant 3.200000e+01 : f32
    %90 = vector.broadcast %cst_36 : f32 to vector<16x1xf32>
    %91 = arith.divf %89, %90 : vector<16x1xf32>
    %92 = vector.broadcast %91 : vector<16x1xf32> to vector<16x32xf32>
    %93 = arith.subf %87, %92 : vector<16x32xf32>
    %94 = arith.mulf %93, %93 : vector<16x32xf32>
    %cst_37 = arith.constant dense<0.000000e+00> : vector<16xf32>
    %95 = vector.multi_reduction <add>, %94, %cst_37 [1] : vector<16x32xf32> to vector<16xf32>
    %96 = vector.shape_cast %95 : vector<16xf32> to vector<16x1xf32>
    %cst_38 = arith.constant 3.200000e+01 : f32
    %97 = vector.broadcast %cst_38 : f32 to vector<16x1xf32>
    %98 = arith.divf %96, %97 : vector<16x1xf32>
    %99 = vector.broadcast %91 : vector<16x1xf32> to vector<16x32xf32>
    %100 = arith.subf %87, %99 : vector<16x32xf32>
    %cst_39 = arith.constant 9.99999974E-6 : f32
    %101 = vector.broadcast %cst_39 : f32 to vector<16x1xf32>
    %102 = arith.addf %98, %101 : vector<16x1xf32>
    %103 = math.rsqrt %102 : vector<16x1xf32>
    %104 = vector.broadcast %103 : vector<16x1xf32> to vector<16x32xf32>
    %105 = arith.mulf %100, %104 : vector<16x32xf32>
    %c0_40 = arith.constant 0 : index
    %c0_41 = arith.constant 0 : index
    %106 = vector.load %arg9[%c0_40, %c0_41] : memref<1x32xf32, #tpu.memory_space<vmem>>, vector<1x32xf32>
    %107 = vector.broadcast %106 : vector<1x32xf32> to vector<16x32xf32>
    %108 = arith.mulf %105, %107 : vector<16x32xf32>
    %c0_42 = arith.constant 0 : index
    %c0_43 = arith.constant 0 : index
    %109 = vector.load %arg10[%c0_42, %c0_43] : memref<1x32xf32, #tpu.memory_space<vmem>>, vector<1x32xf32>
    %110 = vector.broadcast %109 : vector<1x32xf32> to vector<16x32xf32>
    %111 = arith.addf %108, %110 : vector<16x32xf32>
    %cst_44 = arith.constant 5.000000e-01 : f32
    %112 = vector.broadcast %cst_44 : f32 to vector<16x32xf32>
    %113 = arith.mulf %112, %111 : vector<16x32xf32>
    %cst_45 = arith.constant 0.707106769 : f32
    %114 = vector.broadcast %cst_45 : f32 to vector<16x32xf32>
    %115 = arith.mulf %111, %114 : vector<16x32xf32>
    %116 = math.erf %115 : vector<16x32xf32>
    %cst_46 = arith.constant 1.000000e+00 : f32
    %117 = vector.broadcast %cst_46 : f32 to vector<16x32xf32>
    %118 = arith.addf %117, %116 : vector<16x32xf32>
    %119 = arith.mulf %113, %118 : vector<16x32xf32>
    %120 = arith.truncf %119 : vector<16x32xf32> to vector<16x32xbf16>
    %c0_47 = arith.constant 0 : index
    %c0_48 = arith.constant 0 : index
    %121 = vector.load %arg11[%c0_47, %c0_48] : memref<32x256xbf16, #tpu.memory_space<vmem>>, vector<32x256xbf16>
    %cst_49 = arith.constant dense<0.000000e+00> : vector<16x256xf32>
    %122 = tpu.matmul %120, %121, %cst_49 {dimension_numbers = #tpu.dot_dimension_numbers<[1], [0], [0], [1], [0, 0, 1, 1], [], []>} : vector<16x32xbf16>, vector<32x256xbf16>, vector<16x256xf32> -> vector<16x256xf32>
    %c0_50 = arith.constant 0 : index
    %c0_51 = arith.constant 0 : index
    %123 = vector.load %arg12[%c0_50, %c0_51] : memref<1x256xf32, #tpu.memory_space<vmem>>, vector<1x256xf32>
    %124 = vector.broadcast %123 : vector<1x256xf32> to vector<16x256xf32>
    %125 = arith.addf %122, %124 : vector<16x256xf32>
    %126 = vector.extract_strided_slice %125 {offsets = [0, 0], sizes = [16, 128], strides = [1, 1]} : vector<16x256xf32> to vector<16x128xf32>
    %127 = vector.extract_strided_slice %125 {offsets = [0, 128], sizes = [16, 128], strides = [1, 1]} : vector<16x256xf32> to vector<16x128xf32>
    %c0_52 = arith.constant 0 : index
    %c0_53 = arith.constant 0 : index
    %128 = vector.load %arg13[%c0_52, %c0_53] : memref<8x128xbf16, #tpu.memory_space<vmem>>, vector<8x128xbf16>
    %cst_54 = arith.constant dense<0.000000e+00> : vector<256x128xf32>
    %129 = tpu.matmul %0, %128, %cst_54 {dimension_numbers = #tpu.dot_dimension_numbers<[1], [0], [0], [1], [0, 0, 1, 1], [], []>} : vector<256x8xbf16>, vector<8x128xbf16>, vector<256x128xf32> -> vector<256x128xf32>
    %130 = vector.shape_cast %127 : vector<16x128xf32> to vector<16x1x128xf32>
    %131 = vector.shape_cast %126 : vector<16x128xf32> to vector<1x16x128xf32>
    %132 = vector.broadcast %130 : vector<16x1x128xf32> to vector<16x16x128xf32>
    %133 = vector.broadcast %131 : vector<1x16x128xf32> to vector<16x16x128xf32>
    %134 = arith.addf %132, %133 : vector<16x16x128xf32>
    %135 = vector.shape_cast %129 : vector<256x128xf32> to vector<16x16x128xf32>
    %136 = arith.addf %134, %135 : vector<16x16x128xf32>
    %cst_55 = arith.constant 0.000000e+00 : f32
    %137 = vector.broadcast %cst_55 : f32 to vector<16x16x128xf32>
    %138 = arith.cmpf ogt, %136, %137 : vector<16x16x128xf32>
    %cst_56 = arith.constant 2.000000e-01 : f32
    %139 = vector.broadcast %cst_56 : f32 to vector<16x16x128xf32>
    %140 = arith.mulf %139, %136 : vector<16x16x128xf32>
    %141 = arith.select %138, %136, %140 : vector<16x16x128xi1>, vector<16x16x128xf32>
    %142 = vector.shape_cast %141 : vector<16x16x128xf32> to vector<256x128xf32>
    %c0_57 = arith.constant 0 : index
    %c0_58 = arith.constant 0 : index
    %143 = vector.load %arg14[%c0_57, %c0_58] : memref<128x4xf32, #tpu.memory_space<vmem>>, vector<128x4xf32>
    %cst_59 = arith.constant dense<0.000000e+00> : vector<256x4xf32>
    %144 = tpu.matmul %142, %143, %cst_59 {dimension_numbers = #tpu.dot_dimension_numbers<[1], [0], [0], [1], [0, 0, 1, 1], [], []>} : vector<256x128xf32>, vector<128x4xf32>, vector<256x4xf32> -> vector<256x4xf32>
    %145 = vector.broadcast %1 : vector<256x1xf32> to vector<256x4xf32>
    %146 = arith.addf %144, %145 : vector<256x4xf32>
    %147 = vector.shape_cast %146 : vector<256x4xf32> to vector<16x16x4xf32>
    %cst_60 = arith.constant dense<0xFF800000> : vector<16x4xf32>
    %148 = vector.multi_reduction <maximumf>, %147, %cst_60 [1] : vector<16x16x4xf32> to vector<16x4xf32>
    %149 = vector.shape_cast %148 : vector<16x4xf32> to vector<16x1x4xf32>
    %150 = vector.broadcast %149 : vector<16x1x4xf32> to vector<16x16x4xf32>
    %151 = arith.subf %147, %150 : vector<16x16x4xf32>
    %152 = math.exp %151 : vector<16x16x4xf32>
    %cst_61 = arith.constant dense<0.000000e+00> : vector<16x4xf32>
    %153 = vector.multi_reduction <add>, %152, %cst_61 [1] : vector<16x16x4xf32> to vector<16x4xf32>
    %154 = vector.shape_cast %153 : vector<16x4xf32> to vector<16x1x4xf32>
    %cst_62 = arith.constant 9.99999968E-21 : f32
    %155 = vector.broadcast %cst_62 : f32 to vector<16x1x4xf32>
    %156 = arith.maximumf %154, %155 : vector<16x1x4xf32>
    %157 = tpu.reciprocal %156 : vector<16x1x4xf32> -> vector<16x1x4xf32>
    %158 = vector.broadcast %157 : vector<16x1x4xf32> to vector<16x16x4xf32>
    %159 = arith.mulf %152, %158 : vector<16x16x4xf32>
    %c0_i32_63 = arith.constant 0 : i32
    %160 = vector.broadcast %c0_i32_63 : i32 to vector<1x1x4xi32>
    %161 = arith.cmpi eq, %2, %160 : vector<1x1x4xi32>
    %cst_64 = arith.constant 0.000000e+00 : f32
    %162 = vector.shape_cast %161 : vector<1x1x4xi1> to vector<1x1x4xi1>
    %163 = vector.broadcast %162 : vector<1x1x4xi1> to vector<16x16x4xi1>
    %164 = vector.broadcast %cst_64 : f32 to vector<16x16x4xf32>
    %165 = arith.select %163, %159, %164 : vector<16x16x4xi1>, vector<16x16x4xf32>
    %cst_65 = arith.constant dense<0.000000e+00> : vector<16x16xf32>
    %166 = vector.multi_reduction <add>, %165, %cst_65 [2] : vector<16x16x4xf32> to vector<16x16xf32>
    %167 = vector.extract_strided_slice %126 {offsets = [0, 0], sizes = [16, 32], strides = [1, 1]} : vector<16x128xf32> to vector<16x32xf32>
    %cst_66 = arith.constant dense<0.000000e+00> : vector<16x32xf32>
    %168 = tpu.matmul %166, %167, %cst_66 {dimension_numbers = #tpu.dot_dimension_numbers<[1], [0], [0], [1], [0, 0, 1, 1], [], []>} : vector<16x16xf32>, vector<16x32xf32>, vector<16x32xf32> -> vector<16x32xf32>
    %c1_i32_67 = arith.constant 1 : i32
    %169 = vector.broadcast %c1_i32_67 : i32 to vector<1x1x4xi32>
    %170 = arith.cmpi eq, %2, %169 : vector<1x1x4xi32>
    %cst_68 = arith.constant 0.000000e+00 : f32
    %171 = vector.shape_cast %170 : vector<1x1x4xi1> to vector<1x1x4xi1>
    %172 = vector.broadcast %171 : vector<1x1x4xi1> to vector<16x16x4xi1>
    %173 = vector.broadcast %cst_68 : f32 to vector<16x16x4xf32>
    %174 = arith.select %172, %159, %173 : vector<16x16x4xi1>, vector<16x16x4xf32>
    %cst_69 = arith.constant dense<0.000000e+00> : vector<16x16xf32>
    %175 = vector.multi_reduction <add>, %174, %cst_69 [2] : vector<16x16x4xf32> to vector<16x16xf32>
    %176 = vector.extract_strided_slice %126 {offsets = [0, 32], sizes = [16, 32], strides = [1, 1]} : vector<16x128xf32> to vector<16x32xf32>
    %cst_70 = arith.constant dense<0.000000e+00> : vector<16x32xf32>
    %177 = tpu.matmul %175, %176, %cst_70 {dimension_numbers = #tpu.dot_dimension_numbers<[1], [0], [0], [1], [0, 0, 1, 1], [], []>} : vector<16x16xf32>, vector<16x32xf32>, vector<16x32xf32> -> vector<16x32xf32>
    %178 = arith.addf %168, %177 : vector<16x32xf32>
    %c2_i32_71 = arith.constant 2 : i32
    %179 = vector.broadcast %c2_i32_71 : i32 to vector<1x1x4xi32>
    %180 = arith.cmpi eq, %2, %179 : vector<1x1x4xi32>
    %cst_72 = arith.constant 0.000000e+00 : f32
    %181 = vector.shape_cast %180 : vector<1x1x4xi1> to vector<1x1x4xi1>
    %182 = vector.broadcast %181 : vector<1x1x4xi1> to vector<16x16x4xi1>
    %183 = vector.broadcast %cst_72 : f32 to vector<16x16x4xf32>
    %184 = arith.select %182, %159, %183 : vector<16x16x4xi1>, vector<16x16x4xf32>
    %cst_73 = arith.constant dense<0.000000e+00> : vector<16x16xf32>
    %185 = vector.multi_reduction <add>, %184, %cst_73 [2] : vector<16x16x4xf32> to vector<16x16xf32>
    %186 = vector.extract_strided_slice %126 {offsets = [0, 64], sizes = [16, 32], strides = [1, 1]} : vector<16x128xf32> to vector<16x32xf32>
    %cst_74 = arith.constant dense<0.000000e+00> : vector<16x32xf32>
    %187 = tpu.matmul %185, %186, %cst_74 {dimension_numbers = #tpu.dot_dimension_numbers<[1], [0], [0], [1], [0, 0, 1, 1], [], []>} : vector<16x16xf32>, vector<16x32xf32>, vector<16x32xf32> -> vector<16x32xf32>
    %188 = arith.addf %178, %187 : vector<16x32xf32>
    %c3_i32_75 = arith.constant 3 : i32
    %189 = vector.broadcast %c3_i32_75 : i32 to vector<1x1x4xi32>
    %190 = arith.cmpi eq, %2, %189 : vector<1x1x4xi32>
    %cst_76 = arith.constant 0.000000e+00 : f32
    %191 = vector.shape_cast %190 : vector<1x1x4xi1> to vector<1x1x4xi1>
    %192 = vector.broadcast %191 : vector<1x1x4xi1> to vector<16x16x4xi1>
    %193 = vector.broadcast %cst_76 : f32 to vector<16x16x4xf32>
    %194 = arith.select %192, %159, %193 : vector<16x16x4xi1>, vector<16x16x4xf32>
    %cst_77 = arith.constant dense<0.000000e+00> : vector<16x16xf32>
    %195 = vector.multi_reduction <add>, %194, %cst_77 [2] : vector<16x16x4xf32> to vector<16x16xf32>
    %196 = vector.extract_strided_slice %126 {offsets = [0, 96], sizes = [16, 32], strides = [1, 1]} : vector<16x128xf32> to vector<16x32xf32>
    %cst_78 = arith.constant dense<0.000000e+00> : vector<16x32xf32>
    %197 = tpu.matmul %195, %196, %cst_78 {dimension_numbers = #tpu.dot_dimension_numbers<[1], [0], [0], [1], [0, 0, 1, 1], [], []>} : vector<16x16xf32>, vector<16x32xf32>, vector<16x32xf32> -> vector<16x32xf32>
    %198 = arith.addf %188, %197 : vector<16x32xf32>
    %cst_79 = arith.constant 2.500000e-01 : f32
    %199 = vector.broadcast %cst_79 : f32 to vector<16x32xf32>
    %200 = arith.mulf %198, %199 : vector<16x32xf32>
    %c0_80 = arith.constant 0 : index
    %c0_81 = arith.constant 0 : index
    %201 = vector.load %arg15[%c0_80, %c0_81] : memref<1x32xf32, #tpu.memory_space<vmem>>, vector<1x32xf32>
    %202 = vector.broadcast %201 : vector<1x32xf32> to vector<16x32xf32>
    %203 = arith.addf %200, %202 : vector<16x32xf32>
    %cst_82 = arith.constant dense<0.000000e+00> : vector<16xf32>
    %204 = vector.multi_reduction <add>, %203, %cst_82 [1] : vector<16x32xf32> to vector<16xf32>
    %205 = vector.shape_cast %204 : vector<16xf32> to vector<16x1xf32>
    %cst_83 = arith.constant 3.200000e+01 : f32
    %206 = vector.broadcast %cst_83 : f32 to vector<16x1xf32>
    %207 = arith.divf %205, %206 : vector<16x1xf32>
    %208 = vector.broadcast %207 : vector<16x1xf32> to vector<16x32xf32>
    %209 = arith.subf %203, %208 : vector<16x32xf32>
    %210 = arith.mulf %209, %209 : vector<16x32xf32>
    %cst_84 = arith.constant dense<0.000000e+00> : vector<16xf32>
    %211 = vector.multi_reduction <add>, %210, %cst_84 [1] : vector<16x32xf32> to vector<16xf32>
    %212 = vector.shape_cast %211 : vector<16xf32> to vector<16x1xf32>
    %cst_85 = arith.constant 3.200000e+01 : f32
    %213 = vector.broadcast %cst_85 : f32 to vector<16x1xf32>
    %214 = arith.divf %212, %213 : vector<16x1xf32>
    %215 = vector.broadcast %207 : vector<16x1xf32> to vector<16x32xf32>
    %216 = arith.subf %203, %215 : vector<16x32xf32>
    %cst_86 = arith.constant 9.99999974E-6 : f32
    %217 = vector.broadcast %cst_86 : f32 to vector<16x1xf32>
    %218 = arith.addf %214, %217 : vector<16x1xf32>
    %219 = math.rsqrt %218 : vector<16x1xf32>
    %220 = vector.broadcast %219 : vector<16x1xf32> to vector<16x32xf32>
    %221 = arith.mulf %216, %220 : vector<16x32xf32>
    %c0_87 = arith.constant 0 : index
    %c0_88 = arith.constant 0 : index
    %222 = vector.load %arg16[%c0_87, %c0_88] : memref<1x32xf32, #tpu.memory_space<vmem>>, vector<1x32xf32>
    %223 = vector.broadcast %222 : vector<1x32xf32> to vector<16x32xf32>
    %224 = arith.mulf %221, %223 : vector<16x32xf32>
    %c0_89 = arith.constant 0 : index
    %c0_90 = arith.constant 0 : index
    %225 = vector.load %arg17[%c0_89, %c0_90] : memref<1x32xf32, #tpu.memory_space<vmem>>, vector<1x32xf32>
    %226 = vector.broadcast %225 : vector<1x32xf32> to vector<16x32xf32>
    %227 = arith.addf %224, %226 : vector<16x32xf32>
    %228 = arith.addf %227, %3 : vector<16x32xf32>
    %cst_91 = arith.constant 5.000000e-01 : f32
    %229 = vector.broadcast %cst_91 : f32 to vector<16x32xf32>
    %230 = arith.mulf %229, %228 : vector<16x32xf32>
    %cst_92 = arith.constant 0.707106769 : f32
    %231 = vector.broadcast %cst_92 : f32 to vector<16x32xf32>
    %232 = arith.mulf %228, %231 : vector<16x32xf32>
    %233 = math.erf %232 : vector<16x32xf32>
    %cst_93 = arith.constant 1.000000e+00 : f32
    %234 = vector.broadcast %cst_93 : f32 to vector<16x32xf32>
    %235 = arith.addf %234, %233 : vector<16x32xf32>
    %236 = arith.mulf %230, %235 : vector<16x32xf32>
    %c0_94 = arith.constant 0 : index
    %c0_95 = arith.constant 0 : index
    %237 = vector.load %arg18[%c0_94, %c0_95] : memref<16x32xf32, #tpu.memory_space<vmem>>, vector<16x32xf32>
    tpu.vector_store %arg18[%c0_94, %c0_95], %236 {strides = array<i32>} : memref<16x32xf32, #tpu.memory_space<vmem>>, vector<16x32xf32>,
    return
  }
  func.func @transform_0(%arg0: i32) -> (i32, i32) {
    %c0_i32 = arith.constant 0 : i32
    %c0_i32_0 = arith.constant 0 : i32
    %c0_i32_1 = arith.constant 0 : i32
    return %c0_i32, %c0_i32_0 : i32, i32
  }
  func.func @transform_1(%arg0: i32) -> (i32, i32) {
    %c0_i32 = arith.constant 0 : i32
    %c0_i32_0 = arith.constant 0 : i32
    %c0_i32_1 = arith.constant 0 : i32
    return %c0_i32, %c0_i32_0 : i32, i32
  }
  func.func @transform_2(%arg0: i32) -> (i32, i32) {
    %c0_i32 = arith.constant 0 : i32
    %c0_i32_0 = arith.constant 0 : i32
    %c0_i32_1 = arith.constant 0 : i32
    return %c0_i32, %c0_i32_0 : i32, i32
  }
  func.func @transform_3(%arg0: i32) -> (i32, i32) {
    %c0_i32 = arith.constant 0 : i32
    %c0_i32_0 = arith.constant 0 : i32
    %c0_i32_1 = arith.constant 0 : i32
    return %c0_i32, %c0_i32_0 : i32, i32
  }
  func.func @transform_4(%arg0: i32) -> (i32, i32) {
    %c0_i32 = arith.constant 0 : i32
    %c0_i32_0 = arith.constant 0 : i32
    %c0_i32_1 = arith.constant 0 : i32
    return %c0_i32, %c0_i32_0 : i32, i32
  }
  func.func @transform_5(%arg0: i32) -> (i32, i32) {
    %c0_i32 = arith.constant 0 : i32
    %c0_i32_0 = arith.constant 0 : i32
    %c0_i32_1 = arith.constant 0 : i32
    return %c0_i32, %c0_i32_0 : i32, i32
  }
  func.func @transform_6(%arg0: i32) -> (i32, i32) {
    %c0_i32 = arith.constant 0 : i32
    %c0_i32_0 = arith.constant 0 : i32
    %c0_i32_1 = arith.constant 0 : i32
    return %c0_i32, %c0_i32_0 : i32, i32
  }
  func.func @transform_7(%arg0: i32) -> (i32, i32) {
    %c0_i32 = arith.constant 0 : i32
    %c0_i32_0 = arith.constant 0 : i32
    %c0_i32_1 = arith.constant 0 : i32
    return %c0_i32, %c0_i32_0 : i32, i32
  }
  func.func @transform_8(%arg0: i32) -> (i32, i32) {
    %c0_i32 = arith.constant 0 : i32
    %c0_i32_0 = arith.constant 0 : i32
    %c0_i32_1 = arith.constant 0 : i32
    return %c0_i32, %c0_i32_0 : i32, i32
  }
  func.func @transform_9(%arg0: i32) -> (i32, i32) {
    %c0_i32 = arith.constant 0 : i32
    %c0_i32_0 = arith.constant 0 : i32
    %c0_i32_1 = arith.constant 0 : i32
    return %c0_i32, %c0_i32_0 : i32, i32
  }
  func.func @transform_10(%arg0: i32) -> (i32, i32) {
    %c0_i32 = arith.constant 0 : i32
    %c0_i32_0 = arith.constant 0 : i32
    %c0_i32_1 = arith.constant 0 : i32
    return %c0_i32, %c0_i32_0 : i32, i32
  }
  func.func @transform_11(%arg0: i32) -> (i32, i32) {
    %c0_i32 = arith.constant 0 : i32
    %c0_i32_0 = arith.constant 0 : i32
    %c0_i32_1 = arith.constant 0 : i32
    return %c0_i32, %c0_i32_0 : i32, i32
  }
  func.func @transform_12(%arg0: i32) -> (i32, i32) {
    %c0_i32 = arith.constant 0 : i32
    %c0_i32_0 = arith.constant 0 : i32
    %c0_i32_1 = arith.constant 0 : i32
    return %c0_i32, %c0_i32_0 : i32, i32
  }
  func.func @transform_13(%arg0: i32) -> (i32, i32) {
    %c0_i32 = arith.constant 0 : i32
    %c0_i32_0 = arith.constant 0 : i32
    %c0_i32_1 = arith.constant 0 : i32
    return %c0_i32, %c0_i32_0 : i32, i32
  }
  func.func @transform_14(%arg0: i32) -> (i32, i32) {
    %c0_i32 = arith.constant 0 : i32
    %c0_i32_0 = arith.constant 0 : i32
    %c0_i32_1 = arith.constant 0 : i32
    return %c0_i32, %c0_i32_0 : i32, i32
  }
  func.func @transform_15(%arg0: i32) -> (i32, i32) {
    %c0_i32 = arith.constant 0 : i32
    %c0_i32_0 = arith.constant 0 : i32
    %c0_i32_1 = arith.constant 0 : i32
    return %c0_i32, %c0_i32_0 : i32, i32
  }
  func.func @transform_16(%arg0: i32) -> (i32, i32) {
    %c0_i32 = arith.constant 0 : i32
    %c0_i32_0 = arith.constant 0 : i32
    %c0_i32_1 = arith.constant 0 : i32
    return %c0_i32, %c0_i32_0 : i32, i32
  }
  func.func @transform_17(%arg0: i32) -> (i32, i32) {
    %c0_i32 = arith.constant 0 : i32
    %c0_i32_0 = arith.constant 0 : i32
    %c0_i32_1 = arith.constant 0 : i32
    return %c0_i32, %c0_i32_0 : i32, i32
  }
}

</mosaic_0001>

<llo_original>
// kernel: resgnn_block.1
$region0: #{resgnn_block.1}
  #allocation0 [shape = 'u32[]', space=smem, size = 0x4, offset = 0x4, fixed_abs, tag = 'smem constant byte address 0x4 - core index']
  #allocation1 [shape = 'u32[144,128]{1,0:T(1,128)}', space=vmem, size = 0x12000, scoped, tag = 'internal scratch']
  %s0 = inlined_call_operand.vmem [shape: f32[16,32], index: 0, kind: input, shape index: {}]
  %s1 = inlined_call_operand.vmem [shape: bf16[256,8], index: 1, kind: input, shape index: {}]
  %s2 = inlined_call_operand.vmem [shape: f32[256,1], index: 2, kind: input, shape index: {}]
  %s3 = inlined_call_operand.vmem [shape: bf16[32,256], index: 3, kind: input, shape index: {}]
  %s4 = inlined_call_operand.vmem [shape: f32[1,256], index: 4, kind: input, shape index: {}]
  %s5 = inlined_call_operand.vmem [shape: bf16[8,128], index: 5, kind: input, shape index: {}]
  %s6 = inlined_call_operand.vmem [shape: f32[128,4], index: 6, kind: input, shape index: {}]
  %s7 = inlined_call_operand.vmem [shape: f32[1,32], index: 7, kind: input, shape index: {}]
  %s8 = inlined_call_operand.vmem [shape: f32[1,32], index: 8, kind: input, shape index: {}]
  %s9 = inlined_call_operand.vmem [shape: f32[1,32], index: 9, kind: input, shape index: {}]
  %s10 = inlined_call_operand.vmem [shape: bf16[32,256], index: 10, kind: input, shape index: {}]
  %s11 = inlined_call_operand.vmem [shape: f32[1,256], index: 11, kind: input, shape index: {}]
  %s12 = inlined_call_operand.vmem [shape: bf16[8,128], index: 12, kind: input, shape index: {}]
  %s13 = inlined_call_operand.vmem [shape: f32[128,4], index: 13, kind: input, shape index: {}]
  %s14 = inlined_call_operand.vmem [shape: f32[1,32], index: 14, kind: input, shape index: {}]
  %s15 = inlined_call_operand.vmem [shape: f32[1,32], index: 15, kind: input, shape index: {}]
  %s16 = inlined_call_operand.vmem [shape: f32[1,32], index: 16, kind: input, shape index: {}]
  %s17 = inlined_call_operand.hbm [shape: f32[16,32], index: 17, kind: output, shape index: {}]
  %s18 = sld [smem:[#allocation0]]
  $region78: #{resgnn_block.1} parent=0
    _
  %s20 = ssub.s32 1, %s18
  %s21 = scalar_select 0, %s20, %s18
  $region1: #{resgnn_block.1} parent=0
    #allocation2 [shape = 'u8[8192]{0}', space=vmem, size = 0x2000, scoped, tag = 'output window, operand 0, single buffered']
    #allocation3 [shape = 's32[1]{0}', space=sflag, size = 0x4, scoped, tag = 'scoped memory for resgnn_block.1']
    %22 = vsyncpa [#allocation3], 0
    // Predicated region
    $region2: #{resgnn_block.1} parent=1 // pred_check
      _
    $region3: #{resgnn_block.1} parent=1 // pred_check_branch
      %24 = sbr.rel (0) target = $region5
    $region4: #{resgnn_block.1} parent=1 // pred_region
      _
    $region5: #{resgnn_block.1} parent=1 // pred_fallthru
      _
    // Predicated region
    $region6: #{resgnn_block.1} parent=1 // pred_check
      _
    $region7: #{resgnn_block.1} parent=1 // pred_check_branch
      %26 = sbr.rel (0) target = $region9
    $region8: #{resgnn_block.1} parent=1 // pred_region
      _
    $region9: #{resgnn_block.1} parent=1 // pred_fallthru
      _
    // Predicated region
    $region10: #{resgnn_block.1} parent=1 // pred_check
      _
    $region11: #{resgnn_block.1} parent=1 // pred_check_branch
      %28 = sbr.rel (0) target = $region13
    $region12: #{resgnn_block.1} parent=1 // pred_region
      _
    $region13: #{resgnn_block.1} parent=1 // pred_fallthru
      _
    // Predicated region
    $region14: #{resgnn_block.1} parent=1 // pred_check
      _
    $region15: #{resgnn_block.1} parent=1 // pred_check_branch
      %30 = sbr.rel (0) target = $region17
    $region16: #{resgnn_block.1} parent=1 // pred_region
      _
    $region17: #{resgnn_block.1} parent=1 // pred_fallthru
      _
    // Predicated region
    $region18: #{resgnn_block.1} parent=1 // pred_check
      _
    $region19: #{resgnn_block.1} parent=1 // pred_check_branch
      %32 = sbr.rel (0) target = $region21
    $region20: #{resgnn_block.1} parent=1 // pred_region
      _
    $region21: #{resgnn_block.1} parent=1 // pred_fallthru
      _
    // Predicated region
    $region22: #{resgnn_block.1} parent=1 // pred_check
      _
    $region23: #{resgnn_block.1} parent=1 // pred_check_branch
      %34 = sbr.rel (0) target = $region25
    $region24: #{resgnn_block.1} parent=1 // pred_region
      _
    $region25: #{resgnn_block.1} parent=1 // pred_fallthru
      _
    // Predicated region
    $region26: #{resgnn_block.1} parent=1 // pred_check
      _
    $region27: #{resgnn_block.1} parent=1 // pred_check_branch
      %36 = sbr.rel (0) target = $region29
    $region28: #{resgnn_block.1} parent=1 // pred_region
      _
    $region29: #{resgnn_block.1} parent=1 // pred_fallthru
      _
    // Predicated region
    $region30: #{resgnn_block.1} parent=1 // pred_check
      _
    $region31: #{resgnn_block.1} parent=1 // pred_check_branch
      %38 = sbr.rel (0) target = $region33
    $region32: #{resgnn_block.1} parent=1 // pred_region
      _
    $region33: #{resgnn_block.1} parent=1 // pred_fallthru
      _
    // Predicated region
    $region34: #{resgnn_block.1} parent=1 // pred_check
      _
    $region35: #{resgnn_block.1} parent=1 // pred_check_branch
      %40 = sbr.rel (0) target = $region37
    $region36: #{resgnn_block.1} parent=1 // pred_region
      _
    $region37: #{resgnn_block.1} parent=1 // pred_fallthru
      _
    // Predicated region
    $region38: #{resgnn_block.1} parent=1 // pred_check
      _
    $region39: #{resgnn_block.1} parent=1 // pred_check_branch
      %42 = sbr.rel (0) target = $region41
    $region40: #{resgnn_block.1} parent=1 // pred_region
      _
    $region41: #{resgnn_block.1} parent=1 // pred_fallthru
      _
    // Predicated region
    $region42: #{resgnn_block.1} parent=1 // pred_check
      _
    $region43: #{resgnn_block.1} parent=1 // pred_check_branch
      %44 = sbr.rel (0) target = $region45
    $region44: #{resgnn_block.1} parent=1 // pred_region
      _
    $region45: #{resgnn_block.1} parent=1 // pred_fallthru
      _
    // Predicated region
    $region46: #{resgnn_block.1} parent=1 // pred_check
      _
    $region47: #{resgnn_block.1} parent=1 // pred_check_branch
      %46 = sbr.rel (0) target = $region49
    $region48: #{resgnn_block.1} parent=1 // pred_region
      _
    $region49: #{resgnn_block.1} parent=1 // pred_fallthru
      _
    // Predicated region
    $region50: #{resgnn_block.1} parent=1 // pred_check
      _
    $region51: #{resgnn_block.1} parent=1 // pred_check_branch
      %48 = sbr.rel (0) target = $region53
    $region52: #{resgnn_block.1} parent=1 // pred_region
      _
    $region53: #{resgnn_block.1} parent=1 // pred_fallthru
      _
    // Predicated region
    $region54: #{resgnn_block.1} parent=1 // pred_check
      _
    $region55: #{resgnn_block.1} parent=1 // pred_check_branch
      %50 = sbr.rel (0) target = $region57
    $region56: #{resgnn_block.1} parent=1 // pred_region
      _
    $region57: #{resgnn_block.1} parent=1 // pred_fallthru
      _
    // Predicated region
    $region58: #{resgnn_block.1} parent=1 // pred_check
      _
    $region59: #{resgnn_block.1} parent=1 // pred_check_branch
      %52 = sbr.rel (0) target = $region61
    $region60: #{resgnn_block.1} parent=1 // pred_region
      _
    $region61: #{resgnn_block.1} parent=1 // pred_fallthru
      _
    // Predicated region
    $region62: #{resgnn_block.1} parent=1 // pred_check
      _
    $region63: #{resgnn_block.1} parent=1 // pred_check_branch
      %54 = sbr.rel (0) target = $region65
    $region64: #{resgnn_block.1} parent=1 // pred_region
      _
    $region65: #{resgnn_block.1} parent=1 // pred_fallthru
      _
    // Predicated region
    $region66: #{resgnn_block.1} parent=1 // pred_check
      _
    $region67: #{resgnn_block.1} parent=1 // pred_check_branch
      %56 = sbr.rel (0) target = $region69
    $region68: #{resgnn_block.1} parent=1 // pred_region
      _
    $region69: #{resgnn_block.1} parent=1 // pred_fallthru
      _
    %v58 = vld [vmem:[%s1] sm:$0xf]
    %v59 = vld [vmem:[%s1 + $0x4] sm:$0xf]
    %v60 = vld [vmem:[%s1 + $0x8] sm:$0xf]
    %v61 = vld [vmem:[%s1 + $0xc] sm:$0xf]
    %v62 = vld [vmem:[%s1 + $0x10] sm:$0xf]
    %v63 = vld [vmem:[%s1 + $0x14] sm:$0xf]
    %v64 = vld [vmem:[%s1 + $0x18] sm:$0xf]
    %v65 = vld [vmem:[%s1 + $0x1c] sm:$0xf]
    %v66 = vld [vmem:[%s1 + $0x20] sm:$0xf]
    %v67 = vld [vmem:[%s1 + $0x24] sm:$0xf]
    %v68 = vld [vmem:[%s1 + $0x28] sm:$0xf]
    %v69 = vld [vmem:[%s1 + $0x2c] sm:$0xf]
    %v70 = vld [vmem:[%s1 + $0x30] sm:$0xf]
    %v71 = vld [vmem:[%s1 + $0x34] sm:$0xf]
    %v72 = vld [vmem:[%s1 + $0x38] sm:$0xf]
    %v73 = vld [vmem:[%s1 + $0x3c] sm:$0xf]
    %v74 = vld [vmem:[%s1 + $0x40] sm:$0xf]
    %v75 = vld [vmem:[%s1 + $0x44] sm:$0xf]
    %v76 = vld [vmem:[%s1 + $0x48] sm:$0xf]
    %v77 = vld [vmem:[%s1 + $0x4c] sm:$0xf]
    %v78 = vld [vmem:[%s1 + $0x50] sm:$0xf]
    %v79 = vld [vmem:[%s1 + $0x54] sm:$0xf]
    %v80 = vld [vmem:[%s1 + $0x58] sm:$0xf]
    %v81 = vld [vmem:[%s1 + $0x5c] sm:$0xf]
    %v82 = vld [vmem:[%s1 + $0x60] sm:$0xf]
    %v83 = vld [vmem:[%s1 + $0x64] sm:$0xf]
    %v84 = vld [vmem:[%s1 + $0x68] sm:$0xf]
    %v85 = vld [vmem:[%s1 + $0x6c] sm:$0xf]
    %v86 = vld [vmem:[%s1 + $0x70] sm:$0xf]
    %v87 = vld [vmem:[%s1 + $0x74] sm:$0xf]
    %v88 = vld [vmem:[%s1 + $0x78] sm:$0xf]
    %v89 = vld [vmem:[%s1 + $0x7c] sm:$0xf]
    %v90 = vld [vmem:[%s2] sm:$0xff]
    %v91 = vld [vmem:[%s2 + $0x8] sm:$0xff]
    %v92 = vld [vmem:[%s2 + $0x10] sm:$0xff]
    %v93 = vld [vmem:[%s2 + $0x18] sm:$0xff]
    %v94 = vld [vmem:[%s2 + $0x20] sm:$0xff]
    %v95 = vld [vmem:[%s2 + $0x28] sm:$0xff]
    %v96 = vld [vmem:[%s2 + $0x30] sm:$0xff]
    %v97 = vld [vmem:[%s2 + $0x38] sm:$0xff]
    %v98 = vld [vmem:[%s2 + $0x40] sm:$0xff]
    %v99 = vld [vmem:[%s2 + $0x48] sm:$0xff]
    %v100 = vld [vmem:[%s2 + $0x50] sm:$0xff]
    %v101 = vld [vmem:[%s2 + $0x58] sm:$0xff]
    %v102 = vld [vmem:[%s2 + $0x60] sm:$0xff]
    %v103 = vld [vmem:[%s2 + $0x68] sm:$0xff]
    %v104 = vld [vmem:[%s2 + $0x70] sm:$0xff]
    %v105 = vld [vmem:[%s2 + $0x78] sm:$0xff]
    %v106 = vld [vmem:[%s2 + $0x80] sm:$0xff]
    %v107 = vld [vmem:[%s2 + $0x88] sm:$0xff]
    %v108 = vld [vmem:[%s2 + $0x90] sm:$0xff]
    %v109 = vld [vmem:[%s2 + $0x98] sm:$0xff]
    %v110 = vld [vmem:[%s2 + $0xa0] sm:$0xff]
    %v111 = vld [vmem:[%s2 + $0xa8] sm:$0xff]
    %v112 = vld [vmem:[%s2 + $0xb0] sm:$0xff]
    %v113 = vld [vmem:[%s2 + $0xb8] sm:$0xff]
    %v114 = vld [vmem:[%s2 + $0xc0] sm:$0xff]
    %v115 = vld [vmem:[%s2 + $0xc8] sm:$0xff]
    %v116 = vld [vmem:[%s2 + $0xd0] sm:$0xff]
    %v117 = vld [vmem:[%s2 + $0xd8] sm:$0xff]
    %v118 = vld [vmem:[%s2 + $0xe0] sm:$0xff]
    %v119 = vld [vmem:[%s2 + $0xe8] sm:$0xff]
    %v120 = vld [vmem:[%s2 + $0xf0] sm:$0xff]
    %v121 = vld [vmem:[%s2 + $0xf8] sm:$0xff]
    %v122 = vlaneseq
    %v123 = vand.u32 %v122, 127
    %v124 = vld [vmem:[%s0] sm:$0xff]
    %v125 = vld [vmem:[%s0 + $0x8] sm:$0xff]
    %v126 = vpack.c.bf16 %v125, %v124
    %v127 = vld [vmem:[%s3] sm:$0xff]
    %v128 = vld [vmem:[%s3 + $0x8] sm:$0xff]
    %v129 = vld [vmem:[%s3 + $0x10] sm:$0xff]
    %v130 = vld [vmem:[%s3 + $0x18] sm:$0xff]
    %v131 = vld [vmem:[%s4] sm:$0x3]
    %v133 = vlaneseq
    %v134 = vshrl.u32 %v133, 7
    %v135 = vsub.s32 0, %v134
    %v136 = vrot.slane %v131, %v135
    %v137 = vlaneseq
    %v138 = vshrl.u32 %v137, 7
    %v139 = vsub.s32 1, %v138
    %v140 = vrot.slane %v131, %v139
    %v147 = vunpack.c.l.b16 %v127
    %v148 = vunpack.c.h.b16 %v127
    %v149 = vunpack.c.l.b16 %v128
    %v150 = vunpack.c.h.b16 %v128
    %v151 = vunpack.c.l.b16 %v129
    %v152 = vunpack.c.h.b16 %v129
    %v153 = vunpack.c.l.b16 %v130
    %v154 = vunpack.c.h.b16 %v130
    %v155 = vpack.c.b16 %v149, %v147
    %v156 = vpack.c.b16 %v150, %v148
    %v157 = vpack.c.b16 %v153, %v151
    %v158 = vpack.c.b16 %v154, %v152
    %vm163 = vcmask 261120
    %v165 = vsel %vm163, %v126, 0
    %167 = vmatprep.subr.bf16.mxu0 %v156
    %168 = vmatpush1.bf16.msra.mxu0 %v155
    %169 = vmatprep.subr.bf16.mxu0 %v158
    %170 = vmatpush1.bf16.msra.mxu0 %v157
    %171 = vmatprep.subr.bf16.mxu0 0
    %172 = vmatpush1.bf16.msra.mxu0 0
    %173 = vmatprep.subr.bf16.mxu0 0
    %174 = vmatpush1.bf16.msra.mxu0 0
    %175 = vmatprep.subr.bf16.mxu0 0
    %176 = vmatpush1.bf16.msra.mxu0 0
    %177 = vmatprep.subr.bf16.mxu0 0
    %178 = vmatpush1.bf16.msra.mxu0 0
    %179 = vmatprep.subr.bf16.mxu0 0
    %180 = vmatpush1.bf16.msra.mxu0 0
    %181 = vmatprep.subr.bf16.mxu0 0
    %182 = vmatpush1.bf16.msra.mxu0 0
    %183 = vmatprep.subr.bf16.mxu0 0
    %184 = vmatpush1.bf16.msra.mxu0 0
    %185 = vmatprep.subr.bf16.mxu0 0
    %186 = vmatpush1.bf16.msra.mxu0 0
    %187 = vmatprep.subr.bf16.mxu0 0
    %188 = vmatpush1.bf16.msra.mxu0 0
    %189 = vmatprep.subr.bf16.mxu0 0
    %190 = vmatpush1.bf16.msra.mxu0 0
    %191 = vmatprep.subr.bf16.mxu0 0
    %192 = vmatpush1.bf16.msra.mxu0 0
    %193 = vmatprep.subr.bf16.mxu0 0
    %194 = vmatpush1.bf16.msra.mxu0 0
    %195 = vmatprep.subr.bf16.mxu0 0
    %196 = vmatpush1.bf16.msra.mxu0 0
    %197 = vmatprep.subr.bf16.mxu0 0
    %198 = vmatpush1.bf16.msra.mxu0 0
    %199 = vmatprep.mubr.bf16.mxu0 0
    %200 = vmatmul.mubr.bf16.gmra.mrb[0].mxu0 %v165
    %v201 = vpop.f32.mrb[0].mxu0
    %v202 = vadd.f32 %v136, %v201
    %v203 = vpop.f32.mrb[0].mxu0
    %v204 = vadd.f32 %v140, %v203
    %v205 = vpop.f32.mrb[0].mxu0
    %v206 = vadd.f32 %v136, %v205
    %v207 = vpop.f32.mrb[0].mxu0
    %v208 = vadd.f32 %v140, %v207
    %209 = vdwg.mxu0
    %v210 = vld [vmem:[%s5] sm:$0xf]
    %v243 = vunpack.c.l.b16 %v58
    %v244 = vunpack.c.l.b16 %v59
    %v245 = vunpack.c.l.b16 %v60
    %v246 = vunpack.c.l.b16 %v61
    %v247 = vunpack.c.l.b16 %v62
    %v248 = vunpack.c.l.b16 %v63
    %v249 = vunpack.c.l.b16 %v64
    %v250 = vunpack.c.l.b16 %v65
    %v251 = vunpack.c.l.b16 %v66
    %v252 = vunpack.c.l.b16 %v67
    %v253 = vunpack.c.l.b16 %v68
    %v254 = vunpack.c.l.b16 %v69
    %v255 = vunpack.c.l.b16 %v70
    %v256 = vunpack.c.l.b16 %v71
    %v257 = vunpack.c.l.b16 %v72
    %v258 = vunpack.c.l.b16 %v73
    %v259 = vunpack.c.l.b16 %v74
    %v260 = vunpack.c.l.b16 %v75
    %v261 = vunpack.c.l.b16 %v76
    %v262 = vunpack.c.l.b16 %v77
    %v263 = vunpack.c.l.b16 %v78
    %v264 = vunpack.c.l.b16 %v79
    %v265 = vunpack.c.l.b16 %v80
    %v266 = vunpack.c.l.b16 %v81
    %v267 = vunpack.c.l.b16 %v82
    %v268 = vunpack.c.l.b16 %v83
    %v269 = vunpack.c.l.b16 %v84
    %v270 = vunpack.c.l.b16 %v85
    %v271 = vunpack.c.l.b16 %v86
    %v272 = vunpack.c.l.b16 %v87
    %v273 = vunpack.c.l.b16 %v88
    %v274 = vunpack.c.l.b16 %v89
    %v275 = vpack.c.b16 %v244, %v243
    %v276 = vpack.c.b16 %v246, %v245
    %v277 = vpack.c.b16 %v248, %v247
    %v278 = vpack.c.b16 %v250, %v249
    %v279 = vpack.c.b16 %v252, %v251
    %v280 = vpack.c.b16 %v254, %v253
    %v281 = vpack.c.b16 %v256, %v255
    %v282 = vpack.c.b16 %v258, %v257
    %v283 = vpack.c.b16 %v260, %v259
    %v284 = vpack.c.b16 %v262, %v261
    %v285 = vpack.c.b16 %v264, %v263
    %v286 = vpack.c.b16 %v266, %v265
    %v287 = vpack.c.b16 %v268, %v267
    %v288 = vpack.c.b16 %v270, %v269
    %v289 = vpack.c.b16 %v272, %v271
    %v290 = vpack.c.b16 %v274, %v273
    %vm291 = vcmask 64512
    %v293 = vsel %vm291, %v275, 0
    %v296 = vsel %vm291, %v276, 0
    %v299 = vsel %vm291, %v277, 0
    %v302 = vsel %vm291, %v278, 0
    %v305 = vsel %vm291, %v279, 0
    %v308 = vsel %vm291, %v280, 0
    %v311 = vsel %vm291, %v281, 0
    %v314 = vsel %vm291, %v282, 0
    %v317 = vsel %vm291, %v283, 0
    %v320 = vsel %vm291, %v284, 0
    %v323 = vsel %vm291, %v285, 0
    %v326 = vsel %vm291, %v286, 0
    %v329 = vsel %vm291, %v287, 0
    %v332 = vsel %vm291, %v288, 0
    %v335 = vsel %vm291, %v289, 0
    %v338 = vsel %vm291, %v290, 0
    %vm340 = vcmask 1043456
    %v342 = vsel %vm340, %v210, 0
    %344 = vmatprep.subr.bf16.mxu0 0
    %345 = vmatpush1.bf16.msra.mxu0 %v342
    %346 = vmatprep.subr.bf16.mxu0 0
    %347 = vmatpush1.bf16.msra.mxu0 0
    %348 = vmatprep.subr.bf16.mxu0 0
    %349 = vmatpush1.bf16.msra.mxu0 0
    %350 = vmatprep.subr.bf16.mxu0 0
    %351 = vmatpush1.bf16.msra.mxu0 0
    %352 = vmatprep.subr.bf16.mxu0 0
    %353 = vmatpush1.bf16.msra.mxu0 0
    %354 = vmatprep.subr.bf16.mxu0 0
    %355 = vmatpush1.bf16.msra.mxu0 0
    %356 = vmatprep.subr.bf16.mxu0 0
    %357 = vmatpush1.bf16.msra.mxu0 0
    %358 = vmatprep.subr.bf16.mxu0 0
    %359 = vmatpush1.bf16.msra.mxu0 0
    %360 = vmatprep.subr.bf16.mxu0 0
    %361 = vmatpush1.bf16.msra.mxu0 0
    %362 = vmatprep.subr.bf16.mxu0 0
    %363 = vmatpush1.bf16.msra.mxu0 0
    %364 = vmatprep.subr.bf16.mxu0 0
    %365 = vmatpush1.bf16.msra.mxu0 0
    %366 = vmatprep.subr.bf16.mxu0 0
    %367 = vmatpush1.bf16.msra.mxu0 0
    %368 = vmatprep.subr.bf16.mxu0 0
    %369 = vmatpush1.bf16.msra.mxu0 0
    %370 = vmatprep.subr.bf16.mxu0 0
    %371 = vmatpush1.bf16.msra.mxu0 0
    %372 = vmatprep.subr.bf16.mxu0 0
    %373 = vmatpush1.bf16.msra.mxu0 0
    %374 = vmatprep.subr.bf16.mxu0 0
    %375 = vmatpush1.bf16.msra.mxu0 0
    %376 = vmatprep.mubr.bf16.mxu0 0
    %377 = vmatmul.mubr.bf16.gmra.mrb[0].mxu0 %v293
    %v378 = vpop.f32.mrb[0].mxu0
    %v379 = vadd.f32 0.0, %v378
    %v380 = vpop.f32.mrb[0].mxu0
    %v381 = vpop.f32.mrb[0].mxu0
    %v382 = vadd.f32 0.0, %v381
    %v383 = vpop.f32.mrb[0].mxu0
    %384 = vmatprep.mubr.bf16.mxu0 0
    %385 = vmatmul.mubr.bf16.gmra.mrb[0].mxu0 %v296
    %v386 = vpop.f32.mrb[0].mxu0
    %v387 = vadd.f32 0.0, %v386
    %v388 = vpop.f32.mrb[0].mxu0
    %v389 = vpop.f32.mrb[0].mxu0
    %v390 = vadd.f32 0.0, %v389
    %v391 = vpop.f32.mrb[0].mxu0
    %392 = vmatprep.mubr.bf16.mxu0 0
    %393 = vmatmul.mubr.bf16.gmra.mrb[0].mxu0 %v299
    %v394 = vpop.f32.mrb[0].mxu0
    %v395 = vadd.f32 0.0, %v394
    %v396 = vpop.f32.mrb[0].mxu0
    %v397 = vpop.f32.mrb[0].mxu0
    %v398 = vadd.f32 0.0, %v397
    %v399 = vpop.f32.mrb[0].mxu0
    %400 = vmatprep.mubr.bf16.mxu0 0
    %401 = vmatmul.mubr.bf16.gmra.mrb[0].mxu0 %v302
    %v402 = vpop.f32.mrb[0].mxu0
    %v403 = vadd.f32 0.0, %v402
    %v404 = vpop.f32.mrb[0].mxu0
    %v405 = vpop.f32.mrb[0].mxu0
    %v406 = vadd.f32 0.0, %v405
    %v407 = vpop.f32.mrb[0].mxu0
    %408 = vmatprep.mubr.bf16.mxu0 0
    %409 = vmatmul.mubr.bf16.gmra.mrb[0].mxu0 %v305
    %v410 = vpop.f32.mrb[0].mxu0
    %v411 = vadd.f32 0.0, %v410
    %v412 = vpop.f32.mrb[0].mxu0
    %v413 = vpop.f32.mrb[0].mxu0
    %v414 = vadd.f32 0.0, %v413
    %v415 = vpop.f32.mrb[0].mxu0
    %416 = vmatprep.mubr.bf16.mxu0 0
    %417 = vmatmul.mubr.bf16.gmra.mrb[0].mxu0 %v308
    %v418 = vpop.f32.mrb[0].mxu0
    %v419 = vadd.f32 0.0, %v418
    %v420 = vpop.f32.mrb[0].mxu0
    %v421 = vpop.f32.mrb[0].mxu0
    %v422 = vadd.f32 0.0, %v421
    %v423 = vpop.f32.mrb[0].mxu0
    %424 = vmatprep.mubr.bf16.mxu0 0
    %425 = vmatmul.mubr.bf16.gmra.mrb[0].mxu0 %v311
    %v426 = vpop.f32.mrb[0].mxu0
    %v427 = vadd.f32 0.0, %v426
    %v428 = vpop.f32.mrb[0].mxu0
    %v429 = vpop.f32.mrb[0].mxu0
    %v430 = vadd.f32 0.0, %v429
    %v431 = vpop.f32.mrb[0].mxu0
    %432 = vmatprep.mubr.bf16.mxu0 0
    %433 = vmatmul.mubr.bf16.gmra.mrb[0].mxu0 %v314
    %v434 = vpop.f32.mrb[0].mxu0
    %v435 = vadd.f32 0.0, %v434
    %v436 = vpop.f32.mrb[0].mxu0
    %v437 = vpop.f32.mrb[0].mxu0
    %v438 = vadd.f32 0.0, %v437
    %v439 = vpop.f32.mrb[0].mxu0
    %440 = vmatprep.mubr.bf16.mxu0 0
    %441 = vmatmul.mubr.bf16.gmra.mrb[0].mxu0 %v317
    %v442 = vpop.f32.mrb[0].mxu0
    %v443 = vadd.f32 0.0, %v442
    %v444 = vpop.f32.mrb[0].mxu0
    %v445 = vpop.f32.mrb[0].mxu0
    %v446 = vadd.f32 0.0, %v445
    %v447 = vpop.f32.mrb[0].mxu0
    %448 = vmatprep.mubr.bf16.mxu0 0
    %449 = vmatmul.mubr.bf16.gmra.mrb[0].mxu0 %v320
    %v450 = vpop.f32.mrb[0].mxu0
    %v451 = vadd.f32 0.0, %v450
    %v452 = vpop.f32.mrb[0].mxu0
    %v453 = vpop.f32.mrb[0].mxu0
    %v454 = vadd.f32 0.0, %v453
    %v455 = vpop.f32.mrb[0].mxu0
    %456 = vmatprep.mubr.bf16.mxu0 0
    %457 = vmatmul.mubr.bf16.gmra.mrb[0].mxu0 %v323
    %v458 = vpop.f32.mrb[0].mxu0
    %v459 = vadd.f32 0.0, %v458
    %v460 = vpop.f32.mrb[0].mxu0
    %v461 = vpop.f32.mrb[0].mxu0
    %v462 = vadd.f32 0.0, %v461
    %v463 = vpop.f32.mrb[0].mxu0
    %464 = vmatprep.mubr.bf16.mxu0 0
    %465 = vmatmul.mubr.bf16.gmra.mrb[0].mxu0 %v326
    %v466 = vpop.f32.mrb[0].mxu0
    %v467 = vadd.f32 0.0, %v466
    %v468 = vpop.f32.mrb[0].mxu0
    %v469 = vpop.f32.mrb[0].mxu0
    %v470 = vadd.f32 0.0, %v469
    %v471 = vpop.f32.mrb[0].mxu0
    %472 = vmatprep.mubr.bf16.mxu0 0
    %473 = vmatmul.mubr.bf16.gmra.mrb[0].mxu0 %v329
    %v474 = vpop.f32.mrb[0].mxu0
    %v475 = vadd.f32 0.0, %v474
    %v476 = vpop.f32.mrb[0].mxu0
    %v477 = vpop.f32.mrb[0].mxu0
    %v478 = vadd.f32 0.0, %v477
    %v479 = vpop.f32.mrb[0].mxu0
    %480 = vmatprep.mubr.bf16.mxu0 0
    %481 = vmatmul.mubr.bf16.gmra.mrb[0].mxu0 %v332
    %v482 = vpop.f32.mrb[0].mxu0
    %v483 = vadd.f32 0.0, %v482
    %v484 = vpop.f32.mrb[0].mxu0
    %v485 = vpop.f32.mrb[0].mxu0
    %v486 = vadd.f32 0.0, %v485
    %v487 = vpop.f32.mrb[0].mxu0
    %488 = vmatprep.mubr.bf16.mxu0 0
    %489 = vmatmul.mubr.bf16.gmra.mrb[0].mxu0 %v335
    %v490 = vpop.f32.mrb[0].mxu0
    %v491 = vadd.f32 0.0, %v490
    %v492 = vpop.f32.mrb[0].mxu0
    %v493 = vpop.f32.mrb[0].mxu0
    %v494 = vadd.f32 0.0, %v493
    %v495 = vpop.f32.mrb[0].mxu0
    %496 = vmatprep.mubr.bf16.mxu0 0
    %497 = vmatmul.mubr.bf16.gmra.mrb[0].mxu0 %v338
    %v498 = vpop.f32.mrb[0].mxu0
    %v499 = vadd.f32 0.0, %v498
    %v500 = vpop.f32.mrb[0].mxu0
    %v501 = vpop.f32.mrb[0].mxu0
    %v502 = vadd.f32 0.0, %v501
    %v503 = vpop.f32.mrb[0].mxu0
    %504 = vdwg.mxu0
    %v507 = vcombine.high %v204, %v204
    %v509 = vunpack.c.l.s4 1966171168
    %v510 = vunpack.c.0.s8 %v509
    %v511 = vlaneseq
    %v512 = vshrl.u32 %v511, 7
    %v513 = vsub.s32 %v510, %v512
    %v514 = vrot.slane %v204, %v513
    %v516 = vunpack.c.l.s4 1966171168
    %v517 = vunpack.c.0.s8 %v516
    %v518 = vlaneseq
    %v519 = vshrl.u32 %v518, 7
    %v520 = vsub.s32 %v517, %v519
    %v521 = vrot.slane %v507, %v520
    %v522 = vcombine.high %v514, %v514
    %v523 = vcombine.high %v521, %v521
    %v525 = vunpack.c.l.s4 1966171168
    %v526 = vunpack.c.0.s8 %v525
    %v527 = vlaneseq
    %v528 = vshrl.u32 %v527, 7
    %v529 = vsub.s32 %v526, %v528
    %v530 = vrot.slane %v514, %v529
    %v532 = vunpack.c.l.s4 1966171168
    %v533 = vunpack.c.0.s8 %v532
    %v534 = vlaneseq
    %v535 = vshrl.u32 %v534, 7
    %v536 = vsub.s32 %v533, %v535
    %v537 = vrot.slane %v521, %v536
    %v539 = vunpack.c.l.s4 1966171168
    %v540 = vunpack.c.0.s8 %v539
    %v541 = vlaneseq
    %v542 = vshrl.u32 %v541, 7
    %v543 = vsub.s32 %v540, %v542
    %v544 = vrot.slane %v522, %v543
    %v546 = vunpack.c.l.s4 1966171168
    %v547 = vunpack.c.0.s8 %v546
    %v548 = vlaneseq
    %v549 = vshrl.u32 %v548, 7
    %v550 = vsub.s32 %v547, %v549
    %v551 = vrot.slane %v523, %v550
    %v552 = vcombine.high %v530, %v530
    %v553 = vcombine.high %v537, %v537
    %v554 = vcombine.high %v544, %v544
    %v555 = vcombine.high %v551, %v551
    %v556 = vcombine.high %v208, %v208
    %v558 = vunpack.c.l.s4 1966171168
    %v559 = vunpack.c.0.s8 %v558
    %v560 = vlaneseq
    %v561 = vshrl.u32 %v560, 7
    %v562 = vsub.s32 %v559, %v561
    %v563 = vrot.slane %v208, %v562
    %v565 = vunpack.c.l.s4 1966171168
    %v566 = vunpack.c.0.s8 %v565
    %v567 = vlaneseq
    %v568 = vshrl.u32 %v567, 7
    %v569 = vsub.s32 %v566, %v568
    %v570 = vrot.slane %v556, %v569
    %v571 = vcombine.high %v563, %v563
    %v572 = vcombine.high %v570, %v570
    %v574 = vunpack.c.l.s4 1966171168
    %v575 = vunpack.c.0.s8 %v574
    %v576 = vlaneseq
    %v577 = vshrl.u32 %v576, 7
    %v578 = vsub.s32 %v575, %v577
    %v579 = vrot.slane %v563, %v578
    %v581 = vunpack.c.l.s4 1966171168
    %v582 = vunpack.c.0.s8 %v581
    %v583 = vlaneseq
    %v584 = vshrl.u32 %v583, 7
    %v585 = vsub.s32 %v582, %v584
    %v586 = vrot.slane %v570, %v585
    %v588 = vunpack.c.l.s4 1966171168
    %v589 = vunpack.c.0.s8 %v588
    %v590 = vlaneseq
    %v591 = vshrl.u32 %v590, 7
    %v592 = vsub.s32 %v589, %v591
    %v593 = vrot.slane %v571, %v592
    %v595 = vunpack.c.l.s4 1966171168
    %v596 = vunpack.c.0.s8 %v595
    %v597 = vlaneseq
    %v598 = vshrl.u32 %v597, 7
    %v599 = vsub.s32 %v596, %v598
    %v600 = vrot.slane %v572, %v599
    %v601 = vcombine.high %v579, %v579
    %v602 = vcombine.high %v586, %v586
    %v603 = vcombine.high %v593, %v593
    %v604 = vcombine.high %v600, %v600
    %v605 = vlaneseq
    %v606 = vshrl.u32 %v605, 7
    %v607 = vsub.s32 0, %v606
    %v608 = vrot.slane %v530, %v607
    %v609 = vlaneseq
    %v610 = vshrl.u32 %v609, 7
    %v611 = vsub.s32 0, %v610
    %v612 = vrot.slane %v544, %v611
    %v613 = vlaneseq
    %v614 = vshrl.u32 %v613, 7
    %v615 = vsub.s32 0, %v614
    %v616 = vrot.slane %v552, %v615
    %v617 = vlaneseq
    %v618 = vshrl.u32 %v617, 7
    %v619 = vsub.s32 0, %v618
    %v620 = vrot.slane %v554, %v619
    %v621 = vlaneseq
    %v622 = vshrl.u32 %v621, 7
    %v623 = vsub.s32 0, %v622
    %v624 = vrot.slane %v537, %v623
    %v625 = vlaneseq
    %v626 = vshrl.u32 %v625, 7
    %v627 = vsub.s32 0, %v626
    %v628 = vrot.slane %v551, %v627
    %v629 = vlaneseq
    %v630 = vshrl.u32 %v629, 7
    %v631 = vsub.s32 0, %v630
    %v632 = vrot.slane %v553, %v631
    %v633 = vlaneseq
    %v634 = vshrl.u32 %v633, 7
    %v635 = vsub.s32 0, %v634
    %v636 = vrot.slane %v555, %v635
    %v637 = vlaneseq
    %v638 = vshrl.u32 %v637, 7
    %v639 = vsub.s32 0, %v638
    %v640 = vrot.slane %v579, %v639
    %v641 = vlaneseq
    %v642 = vshrl.u32 %v641, 7
    %v643 = vsub.s32 0, %v642
    %v644 = vrot.slane %v593, %v643
    %v645 = vlaneseq
    %v646 = vshrl.u32 %v645, 7
    %v647 = vsub.s32 0, %v646
    %v648 = vrot.slane %v601, %v647
    %v649 = vlaneseq
    %v650 = vshrl.u32 %v649, 7
    %v651 = vsub.s32 0, %v650
    %v652 = vrot.slane %v603, %v651
    %v653 = vlaneseq
    %v654 = vshrl.u32 %v653, 7
    %v655 = vsub.s32 0, %v654
    %v656 = vrot.slane %v586, %v655
    %v657 = vlaneseq
    %v658 = vshrl.u32 %v657, 7
    %v659 = vsub.s32 0, %v658
    %v660 = vrot.slane %v600, %v659
    %v661 = vlaneseq
    %v662 = vshrl.u32 %v661, 7
    %v663 = vsub.s32 0, %v662
    %v664 = vrot.slane %v602, %v663
    %v665 = vlaneseq
    %v666 = vshrl.u32 %v665, 7
    %v667 = vsub.s32 0, %v666
    %v668 = vrot.slane %v604, %v667
    %v685 = vadd.f32 %v608, %v202
    %v686 = vadd.f32 %v608, %v206
    %v687 = vadd.f32 %v612, %v202
    %v688 = vadd.f32 %v612, %v206
    %v689 = vadd.f32 %v616, %v202
    %v690 = vadd.f32 %v616, %v206
    %v691 = vadd.f32 %v620, %v202
    %v692 = vadd.f32 %v620, %v206
    %v693 = vadd.f32 %v624, %v202
    %v694 = vadd.f32 %v624, %v206
    %v695 = vadd.f32 %v628, %v202
    %v696 = vadd.f32 %v628, %v206
    %v697 = vadd.f32 %v632, %v202
    %v698 = vadd.f32 %v632, %v206
    %v699 = vadd.f32 %v636, %v202
    %v700 = vadd.f32 %v636, %v206
    %v701 = vadd.f32 %v640, %v202
    %v702 = vadd.f32 %v640, %v206
    %v703 = vadd.f32 %v644, %v202
    %v704 = vadd.f32 %v644, %v206
    %v705 = vadd.f32 %v648, %v202
    %v706 = vadd.f32 %v648, %v206
    %v707 = vadd.f32 %v652, %v202
    %v708 = vadd.f32 %v652, %v206
    %v709 = vadd.f32 %v656, %v202
    %v710 = vadd.f32 %v656, %v206
    %v711 = vadd.f32 %v660, %v202
    %v712 = vadd.f32 %v660, %v206
    %v713 = vadd.f32 %v664, %v202
    %v714 = vadd.f32 %v664, %v206
    %v715 = vadd.f32 %v668, %v202
    %v716 = vadd.f32 %v668, %v206
    %v717 = vadd.f32 %v685, %v379
    %v718 = vadd.f32 %v686, %v382
    %v719 = vadd.f32 %v687, %v387
    %v720 = vadd.f32 %v688, %v390
    %v721 = vadd.f32 %v689, %v395
    %v722 = vadd.f32 %v690, %v398
    %v723 = vadd.f32 %v691, %v403
    %v724 = vadd.f32 %v692, %v406
    %v725 = vadd.f32 %v693, %v411
    %v726 = vadd.f32 %v694, %v414
    %v727 = vadd.f32 %v695, %v419
    %v728 = vadd.f32 %v696, %v422
    %v729 = vadd.f32 %v697, %v427
    %v730 = vadd.f32 %v698, %v430
    %v731 = vadd.f32 %v699, %v435
    %v732 = vadd.f32 %v700, %v438
    %v733 = vadd.f32 %v701, %v443
    %v734 = vadd.f32 %v702, %v446
    %v735 = vadd.f32 %v703, %v451
    %v736 = vadd.f32 %v704, %v454
    %v737 = vadd.f32 %v705, %v459
    %v738 = vadd.f32 %v706, %v462
    %v739 = vadd.f32 %v707, %v467
    %v740 = vadd.f32 %v708, %v470
    %v741 = vadd.f32 %v709, %v475
    %v742 = vadd.f32 %v710, %v478
    %v743 = vadd.f32 %v711, %v483
    %v744 = vadd.f32 %v712, %v486
    %v745 = vadd.f32 %v713, %v491
    %v746 = vadd.f32 %v714, %v494
    %v747 = vadd.f32 %v715, %v499
    %v748 = vadd.f32 %v716, %v502
    %vm749 = vcmp.gt.f32.partialorder %v717, 0.0
    %vm750 = vcmp.gt.f32.partialorder %v718, 0.0
    %vm751 = vcmp.gt.f32.partialorder %v719, 0.0
    %vm752 = vcmp.gt.f32.partialorder %v720, 0.0
    %vm753 = vcmp.gt.f32.partialorder %v721, 0.0
    %vm754 = vcmp.gt.f32.partialorder %v722, 0.0
    %vm755 = vcmp.gt.f32.partialorder %v723, 0.0
    %vm756 = vcmp.gt.f32.partialorder %v724, 0.0
    %vm757 = vcmp.gt.f32.partialorder %v725, 0.0
    %vm758 = vcmp.gt.f32.partialorder %v726, 0.0
    %vm759 = vcmp.gt.f32.partialorder %v727, 0.0
    %vm760 = vcmp.gt.f32.partialorder %v728, 0.0
    %vm761 = vcmp.gt.f32.partialorder %v729, 0.0
    %vm762 = vcmp.gt.f32.partialorder %v730, 0.0
    %vm763 = vcmp.gt.f32.partialorder %v731, 0.0
    %vm764 = vcmp.gt.f32.partialorder %v732, 0.0
    %vm765 = vcmp.gt.f32.partialorder %v733, 0.0
    %vm766 = vcmp.gt.f32.partialorder %v734, 0.0
    %vm767 = vcmp.gt.f32.partialorder %v735, 0.0
    %vm768 = vcmp.gt.f32.partialorder %v736, 0.0
    %vm769 = vcmp.gt.f32.partialorder %v737, 0.0
    %vm770 = vcmp.gt.f32.partialorder %v738, 0.0
    %vm771 = vcmp.gt.f32.partialorder %v739, 0.0
    %vm772 = vcmp.gt.f32.partialorder %v740, 0.0
    %vm773 = vcmp.gt.f32.partialorder %v741, 0.0
    %vm774 = vcmp.gt.f32.partialorder %v742, 0.0
    %vm775 = vcmp.gt.f32.partialorder %v743, 0.0
    %vm776 = vcmp.gt.f32.partialorder %v744, 0.0
    %vm777 = vcmp.gt.f32.partialorder %v745, 0.0
    %vm778 = vcmp.gt.f32.partialorder %v746, 0.0
    %vm779 = vcmp.gt.f32.partialorder %v747, 0.0
    %vm780 = vcmp.gt.f32.partialorder %v748, 0.0
    %v781 = vmul.f32 %v717, 0.2
    %v782 = vmul.f32 %v718, 0.2
    %v783 = vmul.f32 %v719, 0.2
    %v784 = vmul.f32 %v720, 0.2
    %v785 = vmul.f32 %v721, 0.2
    %v786 = vmul.f32 %v722, 0.2
    %v787 = vmul.f32 %v723, 0.2
    %v788 = vmul.f32 %v724, 0.2
    %v789 = vmul.f32 %v725, 0.2
    %v790 = vmul.f32 %v726, 0.2
    %v791 = vmul.f32 %v727, 0.2
    %v792 = vmul.f32 %v728, 0.2
    %v793 = vmul.f32 %v729, 0.2
    %v794 = vmul.f32 %v730, 0.2
    %v795 = vmul.f32 %v731, 0.2
    %v796 = vmul.f32 %v732, 0.2
    %v797 = vmul.f32 %v733, 0.2
    %v798 = vmul.f32 %v734, 0.2
    %v799 = vmul.f32 %v735, 0.2
    %v800 = vmul.f32 %v736, 0.2
    %v801 = vmul.f32 %v737, 0.2
    %v802 = vmul.f32 %v738, 0.2
    %v803 = vmul.f32 %v739, 0.2
    %v804 = vmul.f32 %v740, 0.2
    %v805 = vmul.f32 %v741, 0.2
    %v806 = vmul.f32 %v742, 0.2
    %v807 = vmul.f32 %v743, 0.2
    %v808 = vmul.f32 %v744, 0.2
    %v809 = vmul.f32 %v745, 0.2
    %v810 = vmul.f32 %v746, 0.2
    %v811 = vmul.f32 %v747, 0.2
    %v812 = vmul.f32 %v748, 0.2
    %v813 = vsel %vm749, %v717, %v781
    %v814 = vsel %vm750, %v718, %v782
    %v815 = vsel %vm751, %v719, %v783
    %v816 = vsel %vm752, %v720, %v784
    %v817 = vsel %vm753, %v721, %v785
    %v818 = vsel %vm754, %v722, %v786
    %v819 = vsel %vm755, %v723, %v787
    %v820 = vsel %vm756, %v724, %v788
    %v821 = vsel %vm757, %v725, %v789
    %v822 = vsel %vm758, %v726, %v790
    %v823 = vsel %vm759, %v727, %v791
    %v824 = vsel %vm760, %v728, %v792
    %v825 = vsel %vm761, %v729, %v793
    %v826 = vsel %vm762, %v730, %v794
    %v827 = vsel %vm763, %v731, %v795
    %v828 = vsel %vm764, %v732, %v796
    %v829 = vsel %vm765, %v733, %v797
    %v830 = vsel %vm766, %v734, %v798
    %v831 = vsel %vm767, %v735, %v799
    %v832 = vsel %vm768, %v736, %v800
    %v833 = vsel %vm769, %v737, %v801
    %v834 = vsel %vm770, %v738, %v802
    %v835 = vsel %vm771, %v739, %v803
    %v836 = vsel %vm772, %v740, %v804
    %v837 = vsel %vm773, %v741, %v805
    %v838 = vsel %vm774, %v742, %v806
    %v839 = vsel %vm775, %v743, %v807
    %v840 = vsel %vm776, %v744, %v808
    %v841 = vsel %vm777, %v745, %v809
    %v842 = vsel %vm778, %v746, %v810
    %v843 = vsel %vm779, %v747, %v811
    %v844 = vsel %vm780, %v748, %v812
    %v845 = vld [vmem:[%s6] sm:$0xff]
    %v846 = vld [vmem:[%s6 + $0x8] sm:$0xff]
    %v847 = vld [vmem:[%s6 + $0x10] sm:$0xff]
    %v848 = vld [vmem:[%s6 + $0x18] sm:$0xff]
    %v849 = vld [vmem:[%s6 + $0x20] sm:$0xff]
    %v850 = vld [vmem:[%s6 + $0x28] sm:$0xff]
    %v851 = vld [vmem:[%s6 + $0x30] sm:$0xff]
    %v852 = vld [vmem:[%s6 + $0x38] sm:$0xff]
    %v853 = vld [vmem:[%s6 + $0x40] sm:$0xff]
    %v854 = vld [vmem:[%s6 + $0x48] sm:$0xff]
    %v855 = vld [vmem:[%s6 + $0x50] sm:$0xff]
    %v856 = vld [vmem:[%s6 + $0x58] sm:$0xff]
    %v857 = vld [vmem:[%s6 + $0x60] sm:$0xff]
    %v858 = vld [vmem:[%s6 + $0x68] sm:$0xff]
    %v859 = vld [vmem:[%s6 + $0x70] sm:$0xff]
    %v860 = vld [vmem:[%s6 + $0x78] sm:$0xff]
    %862 = vset.pattern.permute.xlu0 0
    %863 = vperm.xlu0 %862, %v90
    %v864 = vpop.permute.xlu0 %863
    %867 = vset.pattern.permute.xlu0 0
    %868 = vperm.xlu0 %867, %v91
    %v869 = vpop.permute.xlu0 %868
    %872 = vset.pattern.permute.xlu0 0
    %873 = vperm.xlu0 %872, %v92
    %v874 = vpop.permute.xlu0 %873
    %877 = vset.pattern.permute.xlu0 0
    %878 = vperm.xlu0 %877, %v93
    %v879 = vpop.permute.xlu0 %878
    %882 = vset.pattern.permute.xlu0 0
    %883 = vperm.xlu0 %882, %v94
    %v884 = vpop.permute.xlu0 %883
    %887 = vset.pattern.permute.xlu0 0
    %888 = vperm.xlu0 %887, %v95
    %v889 = vpop.permute.xlu0 %888
    %892 = vset.pattern.permute.xlu0 0
    %893 = vperm.xlu0 %892, %v96
    %v894 = vpop.permute.xlu0 %893
    %897 = vset.pattern.permute.xlu0 0
    %898 = vperm.xlu0 %897, %v97
    %v899 = vpop.permute.xlu0 %898
    %902 = vset.pattern.permute.xlu0 0
    %903 = vperm.xlu0 %902, %v98
    %v904 = vpop.permute.xlu0 %903
    %907 = vset.pattern.permute.xlu0 0
    %908 = vperm.xlu0 %907, %v99
    %v909 = vpop.permute.xlu0 %908
    %912 = vset.pattern.permute.xlu0 0
    %913 = vperm.xlu0 %912, %v100
    %v914 = vpop.permute.xlu0 %913
    %917 = vset.pattern.permute.xlu0 0
    %918 = vperm.xlu0 %917, %v101
    %v919 = vpop.permute.xlu0 %918
    %922 = vset.pattern.permute.xlu0 0
    %923 = vperm.xlu0 %922, %v102
    %v924 = vpop.permute.xlu0 %923
    %927 = vset.pattern.permute.xlu0 0
    %928 = vperm.xlu0 %927, %v103
    %v929 = vpop.permute.xlu0 %928
    %932 = vset.pattern.permute.xlu0 0
    %933 = vperm.xlu0 %932, %v104
    %v934 = vpop.permute.xlu0 %933
    %937 = vset.pattern.permute.xlu0 0
    %938 = vperm.xlu0 %937, %v105
    %v939 = vpop.permute.xlu0 %938
    %942 = vset.pattern.permute.xlu0 0
    %943 = vperm.xlu0 %942, %v106
    %v944 = vpop.permute.xlu0 %943
    %947 = vset.pattern.permute.xlu0 0
    %948 = vperm.xlu0 %947, %v107
    %v949 = vpop.permute.xlu0 %948
    %952 = vset.pattern.permute.xlu0 0
    %953 = vperm.xlu0 %952, %v108
    %v954 = vpop.permute.xlu0 %953
    %957 = vset.pattern.permute.xlu0 0
    %958 = vperm.xlu0 %957, %v109
    %v959 = vpop.permute.xlu0 %958
    %962 = vset.pattern.permute.xlu0 0
    %963 = vperm.xlu0 %962, %v110
    %v964 = vpop.permute.xlu0 %963
    %967 = vset.pattern.permute.xlu0 0
    %968 = vperm.xlu0 %967, %v111
    %v969 = vpop.permute.xlu0 %968
    %972 = vset.pattern.permute.xlu0 0
    %973 = vperm.xlu0 %972, %v112
    %v974 = vpop.permute.xlu0 %973
    %977 = vset.pattern.permute.xlu0 0
    %978 = vperm.xlu0 %977, %v113
    %v979 = vpop.permute.xlu0 %978
    %982 = vset.pattern.permute.xlu0 0
    %983 = vperm.xlu0 %982, %v114
    %v984 = vpop.permute.xlu0 %983
    %987 = vset.pattern.permute.xlu0 0
    %988 = vperm.xlu0 %987, %v115
    %v989 = vpop.permute.xlu0 %988
    %992 = vset.pattern.permute.xlu0 0
    %993 = vperm.xlu0 %992, %v116
    %v994 = vpop.permute.xlu0 %993
    %997 = vset.pattern.permute.xlu0 0
    %998 = vperm.xlu0 %997, %v117
    %v999 = vpop.permute.xlu0 %998
    %1002 = vset.pattern.permute.xlu0 0
    %1003 = vperm.xlu0 %1002, %v118
    %v1004 = vpop.permute.xlu0 %1003
    %1007 = vset.pattern.permute.xlu0 0
    %1008 = vperm.xlu0 %1007, %v119
    %v1009 = vpop.permute.xlu0 %1008
    %1012 = vset.pattern.permute.xlu0 0
    %1013 = vperm.xlu0 %1012, %v120
    %v1014 = vpop.permute.xlu0 %1013
    %1017 = vset.pattern.permute.xlu0 0
    %1018 = vperm.xlu0 %1017, %v121
    %v1019 = vpop.permute.xlu0 %1018
    %1021 = vmatprep.subr.mxu0 0.0
    %1022 = vmatpush1.msra.mxu0 %v845
    %1023 = vmatprep.subr.mxu0 0.0
    %1024 = vmatpush1.msra.mxu0 %v846
    %1025 = vmatprep.subr.mxu0 0.0
    %1026 = vmatpush1.msra.mxu0 %v847
    %1027 = vmatprep.subr.mxu0 0.0
    %1028 = vmatpush1.msra.mxu0 %v848
    %1029 = vmatprep.subr.mxu0 0.0
    %1030 = vmatpush1.msra.mxu0 %v849
    %1031 = vmatprep.subr.mxu0 0.0
    %1032 = vmatpush1.msra.mxu0 %v850
    %1033 = vmatprep.subr.mxu0 0.0
    %1034 = vmatpush1.msra.mxu0 %v851
    %1035 = vmatprep.subr.mxu0 0.0
    %1036 = vmatpush1.msra.mxu0 %v852
    %1037 = vmatprep.subr.mxu0 0.0
    %1038 = vmatpush1.msra.mxu0 %v853
    %1039 = vmatprep.subr.mxu0 0.0
    %1040 = vmatpush1.msra.mxu0 %v854
    %1041 = vmatprep.subr.mxu0 0.0
    %1042 = vmatpush1.msra.mxu0 %v855
    %1043 = vmatprep.subr.mxu0 0.0
    %1044 = vmatpush1.msra.mxu0 %v856
    %1045 = vmatprep.subr.mxu0 0.0
    %1046 = vmatpush1.msra.mxu0 %v857
    %1047 = vmatprep.subr.mxu0 0.0
    %1048 = vmatpush1.msra.mxu0 %v858
    %1049 = vmatprep.subr.mxu0 0.0
    %1050 = vmatpush1.msra.mxu0 %v859
    %1051 = vmatprep.subr.mxu0 0.0
    %1052 = vmatpush1.msra.mxu0 %v860
    %1053 = vmatprep.subr.mxu0 0.0
    %1054 = vmatpush1.msra.mxu0 0.0
    %1055 = vmatprep.subr.mxu0 0.0
    %1056 = vmatpush1.msra.mxu0 0.0
    %1057 = vmatprep.subr.mxu0 0.0
    %1058 = vmatpush1.msra.mxu0 0.0
    %1059 = vmatprep.subr.mxu0 0.0
    %1060 = vmatpush1.msra.mxu0 0.0
    %1061 = vmatprep.subr.mxu0 0.0
    %1062 = vmatpush1.msra.mxu0 0.0
    %1063 = vmatprep.subr.mxu0 0.0
    %1064 = vmatpush1.msra.mxu0 0.0
    %1065 = vmatprep.subr.mxu0 0.0
    %1066 = vmatpush1.msra.mxu0 0.0
    %1067 = vmatprep.subr.mxu0 0.0
    %1068 = vmatpush1.msra.mxu0 0.0
    %1069 = vmatprep.subr.mxu0 0.0
    %1070 = vmatpush1.msra.mxu0 0.0
    %1071 = vmatprep.subr.mxu0 0.0
    %1072 = vmatpush1.msra.mxu0 0.0
    %1073 = vmatprep.subr.mxu0 0.0
    %1074 = vmatpush1.msra.mxu0 0.0
    %1075 = vmatprep.subr.mxu0 0.0
    %1076 = vmatpush1.msra.mxu0 0.0
    %1077 = vmatprep.subr.mxu0 0.0
    %1078 = vmatpush1.msra.mxu0 0.0
    %1079 = vmatprep.subr.mxu0 0.0
    %1080 = vmatpush1.msra.mxu0 0.0
    %1081 = vmatprep.subr.mxu0 0.0
    %1082 = vmatpush1.msra.mxu0 0.0
    %1083 = vmatprep.subr.mxu0 0.0
    %1084 = vmatpush1.msra.mxu0 0.0
    %1085 = vmatprep.mubr.f32.mxu0 0.0
    %1086 = vmatmul.mubr.f32.gmra.mrb[0].mxu0 %v813
    %v1087 = vpop.f32.mrb[0].mxu0
    %v1088 = vadd.f32 %v864, %v1087
    %v1089 = vpop.f32.mrb[0].mxu0
    %1090 = vmatprep.mubr.f32.mxu0 0.0
    %1091 = vmatmul.mubr.f32.gmra.mrb[0].mxu0 %v814
    %v1092 = vpop.f32.mrb[0].mxu0
    %v1093 = vadd.f32 %v869, %v1092
    %v1094 = vpop.f32.mrb[0].mxu0
    %1095 = vmatprep.mubr.f32.mxu0 0.0
    %1096 = vmatmul.mubr.f32.gmra.mrb[0].mxu0 %v815
    %v1097 = vpop.f32.mrb[0].mxu0
    %v1098 = vadd.f32 %v874, %v1097
    %v1099 = vpop.f32.mrb[0].mxu0
    %1100 = vmatprep.mubr.f32.mxu0 0.0
    %1101 = vmatmul.mubr.f32.gmra.mrb[0].mxu0 %v816
    %v1102 = vpop.f32.mrb[0].mxu0
    %v1103 = vadd.f32 %v879, %v1102
    %v1104 = vpop.f32.mrb[0].mxu0
    %1105 = vmatprep.mubr.f32.mxu0 0.0
    %1106 = vmatmul.mubr.f32.gmra.mrb[0].mxu0 %v817
    %v1107 = vpop.f32.mrb[0].mxu0
    %v1108 = vadd.f32 %v884, %v1107
    %v1109 = vpop.f32.mrb[0].mxu0
    %1110 = vmatprep.mubr.f32.mxu0 0.0
    %1111 = vmatmul.mubr.f32.gmra.mrb[0].mxu0 %v818
    %v1112 = vpop.f32.mrb[0].mxu0
    %v1113 = vadd.f32 %v889, %v1112
    %v1114 = vpop.f32.mrb[0].mxu0
    %1115 = vmatprep.mubr.f32.mxu0 0.0
    %1116 = vmatmul.mubr.f32.gmra.mrb[0].mxu0 %v819
    %v1117 = vpop.f32.mrb[0].mxu0
    %v1118 = vadd.f32 %v894, %v1117
    %v1119 = vpop.f32.mrb[0].mxu0
    %1120 = vmatprep.mubr.f32.mxu0 0.0
    %1121 = vmatmul.mubr.f32.gmra.mrb[0].mxu0 %v820
    %v1122 = vpop.f32.mrb[0].mxu0
    %v1123 = vadd.f32 %v899, %v1122
    %v1124 = vpop.f32.mrb[0].mxu0
    %1125 = vmatprep.mubr.f32.mxu0 0.0
    %1126 = vmatmul.mubr.f32.gmra.mrb[0].mxu0 %v821
    %v1127 = vpop.f32.mrb[0].mxu0
    %v1128 = vadd.f32 %v904, %v1127
    %v1129 = vpop.f32.mrb[0].mxu0
    %1130 = vmatprep.mubr.f32.mxu0 0.0
    %1131 = vmatmul.mubr.f32.gmra.mrb[0].mxu0 %v822
    %v1132 = vpop.f32.mrb[0].mxu0
    %v1133 = vadd.f32 %v909, %v1132
    %v1134 = vpop.f32.mrb[0].mxu0
    %1135 = vmatprep.mubr.f32.mxu0 0.0
    %1136 = vmatmul.mubr.f32.gmra.mrb[0].mxu0 %v823
    %v1137 = vpop.f32.mrb[0].mxu0
    %v1138 = vadd.f32 %v914, %v1137
    %v1139 = vpop.f32.mrb[0].mxu0
    %1140 = vmatprep.mubr.f32.mxu0 0.0
    %1141 = vmatmul.mubr.f32.gmra.mrb[0].mxu0 %v824
    %v1142 = vpop.f32.mrb[0].mxu0
    %v1143 = vadd.f32 %v919, %v1142
    %v1144 = vpop.f32.mrb[0].mxu0
    %1145 = vmatprep.mubr.f32.mxu0 0.0
    %1146 = vmatmul.mubr.f32.gmra.mrb[0].mxu0 %v825
    %v1147 = vpop.f32.mrb[0].mxu0
    %v1148 = vadd.f32 %v924, %v1147
    %v1149 = vpop.f32.mrb[0].mxu0
    %1150 = vmatprep.mubr.f32.mxu0 0.0
    %1151 = vmatmul.mubr.f32.gmra.mrb[0].mxu0 %v826
    %v1152 = vpop.f32.mrb[0].mxu0
    %v1153 = vadd.f32 %v929, %v1152
    %v1154 = vpop.f32.mrb[0].mxu0
    %1155 = vmatprep.mubr.f32.mxu0 0.0
    %1156 = vmatmul.mubr.f32.gmra.mrb[0].mxu0 %v827
    %v1157 = vpop.f32.mrb[0].mxu0
    %v1158 = vadd.f32 %v934, %v1157
    %v1159 = vpop.f32.mrb[0].mxu0
    %1160 = vmatprep.mubr.f32.mxu0 0.0
    %1161 = vmatmul.mubr.f32.gmra.mrb[0].mxu0 %v828
    %v1162 = vpop.f32.mrb[0].mxu0
    %v1163 = vadd.f32 %v939, %v1162
    %v1164 = vpop.f32.mrb[0].mxu0
    %1165 = vmatprep.mubr.f32.mxu0 0.0
    %1166 = vmatmul.mubr.f32.gmra.mrb[0].mxu0 %v829
    %v1167 = vpop.f32.mrb[0].mxu0
    %v1168 = vadd.f32 %v944, %v1167
    %v1169 = vpop.f32.mrb[0].mxu0
    %1170 = vmatprep.mubr.f32.mxu0 0.0
    %1171 = vmatmul.mubr.f32.gmra.mrb[0].mxu0 %v830
    %v1172 = vpop.f32.mrb[0].mxu0
    %v1173 = vadd.f32 %v949, %v1172
    %v1174 = vpop.f32.mrb[0].mxu0
    %1175 = vmatprep.mubr.f32.mxu0 0.0
    %1176 = vmatmul.mubr.f32.gmra.mrb[0].mxu0 %v831
    %v1177 = vpop.f32.mrb[0].mxu0
    %v1178 = vadd.f32 %v954, %v1177
    %v1179 = vpop.f32.mrb[0].mxu0
    %1180 = vmatprep.mubr.f32.mxu0 0.0
    %1181 = vmatmul.mubr.f32.gmra.mrb[0].mxu0 %v832
    %v1182 = vpop.f32.mrb[0].mxu0
    %v1183 = vadd.f32 %v959, %v1182
    %v1184 = vpop.f32.mrb[0].mxu0
    %1185 = vmatprep.mubr.f32.mxu0 0.0
    %1186 = vmatmul.mubr.f32.gmra.mrb[0].mxu0 %v833
    %v1187 = vpop.f32.mrb[0].mxu0
    %v1188 = vadd.f32 %v964, %v1187
    %v1189 = vpop.f32.mrb[0].mxu0
    %1190 = vmatprep.mubr.f32.mxu0 0.0
    %1191 = vmatmul.mubr.f32.gmra.mrb[0].mxu0 %v834
    %v1192 = vpop.f32.mrb[0].mxu0
    %v1193 = vadd.f32 %v969, %v1192
    %v1194 = vpop.f32.mrb[0].mxu0
    %1195 = vmatprep.mubr.f32.mxu0 0.0
    %1196 = vmatmul.mubr.f32.gmra.mrb[0].mxu0 %v835
    %v1197 = vpop.f32.mrb[0].mxu0
    %v1198 = vadd.f32 %v974, %v1197
    %v1199 = vpop.f32.mrb[0].mxu0
    %1200 = vmatprep.mubr.f32.mxu0 0.0
    %1201 = vmatmul.mubr.f32.gmra.mrb[0].mxu0 %v836
    %v1202 = vpop.f32.mrb[0].mxu0
    %v1203 = vadd.f32 %v979, %v1202
    %v1204 = vpop.f32.mrb[0].mxu0
    %1205 = vmatprep.mubr.f32.mxu0 0.0
    %1206 = vmatmul.mubr.f32.gmra.mrb[0].mxu0 %v837
    %v1207 = vpop.f32.mrb[0].mxu0
    %v1208 = vadd.f32 %v984, %v1207
    %v1209 = vpop.f32.mrb[0].mxu0
    %1210 = vmatprep.mubr.f32.mxu0 0.0
    %1211 = vmatmul.mubr.f32.gmra.mrb[0].mxu0 %v838
    %v1212 = vpop.f32.mrb[0].mxu0
    %v1213 = vadd.f32 %v989, %v1212
    %v1214 = vpop.f32.mrb[0].mxu0
    %1215 = vmatprep.mubr.f32.mxu0 0.0
    %1216 = vmatmul.mubr.f32.gmra.mrb[0].mxu0 %v839
    %v1217 = vpop.f32.mrb[0].mxu0
    %v1218 = vadd.f32 %v994, %v1217
    %v1219 = vpop.f32.mrb[0].mxu0
    %1220 = vmatprep.mubr.f32.mxu0 0.0
    %1221 = vmatmul.mubr.f32.gmra.mrb[0].mxu0 %v840
    %v1222 = vpop.f32.mrb[0].mxu0
    %v1223 = vadd.f32 %v999, %v1222
    %v1224 = vpop.f32.mrb[0].mxu0
    %1225 = vmatprep.mubr.f32.mxu0 0.0
    %1226 = vmatmul.mubr.f32.gmra.mrb[0].mxu0 %v841
    %v1227 = vpop.f32.mrb[0].mxu0
    %v1228 = vadd.f32 %v1004, %v1227
    %v1229 = vpop.f32.mrb[0].mxu0
    %1230 = vmatprep.mubr.f32.mxu0 0.0
    %1231 = vmatmul.mubr.f32.gmra.mrb[0].mxu0 %v842
    %v1232 = vpop.f32.mrb[0].mxu0
    %v1233 = vadd.f32 %v1009, %v1232
    %v1234 = vpop.f32.mrb[0].mxu0
    %1235 = vmatprep.mubr.f32.mxu0 0.0
    %1236 = vmatmul.mubr.f32.gmra.mrb[0].mxu0 %v843
    %v1237 = vpop.f32.mrb[0].mxu0
    %v1238 = vadd.f32 %v1014, %v1237
    %v1239 = vpop.f32.mrb[0].mxu0
    %1240 = vmatprep.mubr.f32.mxu0 0.0
    %1241 = vmatmul.mubr.f32.gmra.mrb[0].mxu0 %v844
    %v1242 = vpop.f32.mrb[0].mxu0
    %v1243 = vadd.f32 %v1019, %v1242
    %v1244 = vpop.f32.mrb[0].mxu0
    %1245 = vdwg.mxu0
    %vm1246 = vcmask 31744
    %v1247 = vsel %vm1246, %v1088, -inf
    %v1248 = vsel %vm1246, %v1093, -inf
    %v1249 = vmax.f32 %v1247, %v1248
    %v1250 = vrot.slane %v1249, 4
    %v1251 = vmax.f32 %v1249, %v1250
    %v1252 = vrot.slane %v1251, 2
    %v1253 = vmax.f32 %v1251, %v1252
    %v1254 = vrot.slane %v1253, 1
    %v1255 = vmax.f32 %v1253, %v1254
    %v1256 = vsel %vm1246, %v1098, -inf
    %v1257 = vsel %vm1246, %v1103, -inf
    %v1258 = vmax.f32 %v1256, %v1257
    %v1259 = vrot.slane %v1258, 4
    %v1260 = vmax.f32 %v1258, %v1259
    %v1261 = vrot.slane %v1260, 2
    %v1262 = vmax.f32 %v1260, %v1261
    %v1263 = vrot.slane %v1262, 1
    %v1264 = vmax.f32 %v1262, %v1263
    %v1265 = vsel %vm1246, %v1108, -inf
    %v1266 = vsel %vm1246, %v1113, -inf
    %v1267 = vmax.f32 %v1265, %v1266
    %v1268 = vrot.slane %v1267, 4
    %v1269 = vmax.f32 %v1267, %v1268
    %v1270 = vrot.slane %v1269, 2
    %v1271 = vmax.f32 %v1269, %v1270
    %v1272 = vrot.slane %v1271, 1
    %v1273 = vmax.f32 %v1271, %v1272
    %v1274 = vsel %vm1246, %v1118, -inf
    %v1275 = vsel %vm1246, %v1123, -inf
    %v1276 = vmax.f32 %v1274, %v1275
    %v1277 = vrot.slane %v1276, 4
    %v1278 = vmax.f32 %v1276, %v1277
    %v1279 = vrot.slane %v1278, 2
    %v1280 = vmax.f32 %v1278, %v1279
    %v1281 = vrot.slane %v1280, 1
    %v1282 = vmax.f32 %v1280, %v1281
    %v1283 = vsel %vm1246, %v1128, -inf
    %v1284 = vsel %vm1246, %v1133, -inf
    %v1285 = vmax.f32 %v1283, %v1284
    %v1286 = vrot.slane %v1285, 4
    %v1287 = vmax.f32 %v1285, %v1286
    %v1288 = vrot.slane %v1287, 2
    %v1289 = vmax.f32 %v1287, %v1288
    %v1290 = vrot.slane %v1289, 1
    %v1291 = vmax.f32 %v1289, %v1290
    %v1292 = vsel %vm1246, %v1138, -inf
    %v1293 = vsel %vm1246, %v1143, -inf
    %v1294 = vmax.f32 %v1292, %v1293
    %v1295 = vrot.slane %v1294, 4
    %v1296 = vmax.f32 %v1294, %v1295
    %v1297 = vrot.slane %v1296, 2
    %v1298 = vmax.f32 %v1296, %v1297
    %v1299 = vrot.slane %v1298, 1
    %v1300 = vmax.f32 %v1298, %v1299
    %v1301 = vsel %vm1246, %v1148, -inf
    %v1302 = vsel %vm1246, %v1153, -inf
    %v1303 = vmax.f32 %v1301, %v1302
    %v1304 = vrot.slane %v1303, 4
    %v1305 = vmax.f32 %v1303, %v1304
    %v1306 = vrot.slane %v1305, 2
    %v1307 = vmax.f32 %v1305, %v1306
    %v1308 = vrot.slane %v1307, 1
    %v1309 = vmax.f32 %v1307, %v1308
    %v1310 = vsel %vm1246, %v1158, -inf
    %v1311 = vsel %vm1246, %v1163, -inf
    %v1312 = vmax.f32 %v1310, %v1311
    %v1313 = vrot.slane %v1312, 4
    %v1314 = vmax.f32 %v1312, %v1313
    %v1315 = vrot.slane %v1314, 2
    %v1316 = vmax.f32 %v1314, %v1315
    %v1317 = vrot.slane %v1316, 1
    %v1318 = vmax.f32 %v1316, %v1317
    %v1319 = vsel %vm1246, %v1168, -inf
    %v1320 = vsel %vm1246, %v1173, -inf
    %v1321 = vmax.f32 %v1319, %v1320
    %v1322 = vrot.slane %v1321, 4
    %v1323 = vmax.f32 %v1321, %v1322
    %v1324 = vrot.slane %v1323, 2
    %v1325 = vmax.f32 %v1323, %v1324
    %v1326 = vrot.slane %v1325, 1
    %v1327 = vmax.f32 %v1325, %v1326
    %v1328 = vsel %vm1246, %v1178, -inf
    %v1329 = vsel %vm1246, %v1183, -inf
    %v1330 = vmax.f32 %v1328, %v1329
    %v1331 = vrot.slane %v1330, 4
    %v1332 = vmax.f32 %v1330, %v1331
    %v1333 = vrot.slane %v1332, 2
    %v1334 = vmax.f32 %v1332, %v1333
    %v1335 = vrot.slane %v1334, 1
    %v1336 = vmax.f32 %v1334, %v1335
    %v1337 = vsel %vm1246, %v1188, -inf
    %v1338 = vsel %vm1246, %v1193, -inf
    %v1339 = vmax.f32 %v1337, %v1338
    %v1340 = vrot.slane %v1339, 4
    %v1341 = vmax.f32 %v1339, %v1340
    %v1342 = vrot.slane %v1341, 2
    %v1343 = vmax.f32 %v1341, %v1342
    %v1344 = vrot.slane %v1343, 1
    %v1345 = vmax.f32 %v1343, %v1344
    %v1346 = vsel %vm1246, %v1198, -inf
    %v1347 = vsel %vm1246, %v1203, -inf
    %v1348 = vmax.f32 %v1346, %v1347
    %v1349 = vrot.slane %v1348, 4
    %v1350 = vmax.f32 %v1348, %v1349
    %v1351 = vrot.slane %v1350, 2
    %v1352 = vmax.f32 %v1350, %v1351
    %v1353 = vrot.slane %v1352, 1
    %v1354 = vmax.f32 %v1352, %v1353
    %v1355 = vsel %vm1246, %v1208, -inf
    %v1356 = vsel %vm1246, %v1213, -inf
    %v1357 = vmax.f32 %v1355, %v1356
    %v1358 = vrot.slane %v1357, 4
    %v1359 = vmax.f32 %v1357, %v1358
    %v1360 = vrot.slane %v1359, 2
    %v1361 = vmax.f32 %v1359, %v1360
    %v1362 = vrot.slane %v1361, 1
    %v1363 = vmax.f32 %v1361, %v1362
    %v1364 = vsel %vm1246, %v1218, -inf
    %v1365 = vsel %vm1246, %v1223, -inf
    %v1366 = vmax.f32 %v1364, %v1365
    %v1367 = vrot.slane %v1366, 4
    %v1368 = vmax.f32 %v1366, %v1367
    %v1369 = vrot.slane %v1368, 2
    %v1370 = vmax.f32 %v1368, %v1369
    %v1371 = vrot.slane %v1370, 1
    %v1372 = vmax.f32 %v1370, %v1371
    %v1373 = vsel %vm1246, %v1228, -inf
    %v1374 = vsel %vm1246, %v1233, -inf
    %v1375 = vmax.f32 %v1373, %v1374
    %v1376 = vrot.slane %v1375, 4
    %v1377 = vmax.f32 %v1375, %v1376
    %v1378 = vrot.slane %v1377, 2
    %v1379 = vmax.f32 %v1377, %v1378
    %v1380 = vrot.slane %v1379, 1
    %v1381 = vmax.f32 %v1379, %v1380
    %v1382 = vsel %vm1246, %v1238, -inf
    %v1383 = vsel %vm1246, %v1243, -inf
    %v1384 = vmax.f32 %v1382, %v1383
    %v1385 = vrot.slane %v1384, 4
    %v1386 = vmax.f32 %v1384, %v1385
    %v1387 = vrot.slane %v1386, 2
    %v1388 = vmax.f32 %v1386, %v1387
    %v1389 = vrot.slane %v1388, 1
    %v1390 = vmax.f32 %v1388, %v1389
    %v1391 = vsub.f32 %v1088, %v1255
    %v1392 = vsub.f32 %v1093, %v1255
    %v1393 = vsub.f32 %v1098, %v1264
    %v1394 = vsub.f32 %v1103, %v1264
    %v1395 = vsub.f32 %v1108, %v1273
    %v1396 = vsub.f32 %v1113, %v1273
    %v1397 = vsub.f32 %v1118, %v1282
    %v1398 = vsub.f32 %v1123, %v1282
    %v1399 = vsub.f32 %v1128, %v1291
    %v1400 = vsub.f32 %v1133, %v1291
    %v1401 = vsub.f32 %v1138, %v1300
    %v1402 = vsub.f32 %v1143, %v1300
    %v1403 = vsub.f32 %v1148, %v1309
    %v1404 = vsub.f32 %v1153, %v1309
    %v1405 = vsub.f32 %v1158, %v1318
    %v1406 = vsub.f32 %v1163, %v1318
    %v1407 = vsub.f32 %v1168, %v1327
    %v1408 = vsub.f32 %v1173, %v1327
    %v1409 = vsub.f32 %v1178, %v1336
    %v1410 = vsub.f32 %v1183, %v1336
    %v1411 = vsub.f32 %v1188, %v1345
    %v1412 = vsub.f32 %v1193, %v1345
    %v1413 = vsub.f32 %v1198, %v1354
    %v1414 = vsub.f32 %v1203, %v1354
    %v1415 = vsub.f32 %v1208, %v1363
    %v1416 = vsub.f32 %v1213, %v1363
    %v1417 = vsub.f32 %v1218, %v1372
    %v1418 = vsub.f32 %v1223, %v1372
    %v1419 = vsub.f32 %v1228, %v1381
    %v1420 = vsub.f32 %v1233, %v1381
    %v1421 = vsub.f32 %v1238, %v1390
    %v1422 = vsub.f32 %v1243, %v1390
    %v1423 = vmul.f32 %v1391, 1.442695
    %v1424 = vpow.pop %v1423
    %v1425 = vmul.f32 %v1392, 1.442695
    %v1426 = vpow.pop %v1425
    %v1427 = vmul.f32 %v1393, 1.442695
    %v1428 = vpow.pop %v1427
    %v1429 = vmul.f32 %v1394, 1.442695
    %v1430 = vpow.pop %v1429
    %v1431 = vmul.f32 %v1395, 1.442695
    %v1432 = vpow.pop %v1431
    %v1433 = vmul.f32 %v1396, 1.442695
    %v1434 = vpow.pop %v1433
    %v1435 = vmul.f32 %v1397, 1.442695
    %v1436 = vpow.pop %v1435
    %v1437 = vmul.f32 %v1398, 1.442695
    %v1438 = vpow.pop %v1437
    %v1439 = vmul.f32 %v1399, 1.442695
    %v1440 = vpow.pop %v1439
    %v1441 = vmul.f32 %v1400, 1.442695
    %v1442 = vpow.pop %v1441
    %v1443 = vmul.f32 %v1401, 1.442695
    %v1444 = vpow.pop %v1443
    %v1445 = vmul.f32 %v1402, 1.442695
    %v1446 = vpow.pop %v1445
    %v1447 = vmul.f32 %v1403, 1.442695
    %v1448 = vpow.pop %v1447
    %v1449 = vmul.f32 %v1404, 1.442695
    %v1450 = vpow.pop %v1449
    %v1451 = vmul.f32 %v1405, 1.442695
    %v1452 = vpow.pop %v1451
    %v1453 = vmul.f32 %v1406, 1.442695
    %v1454 = vpow.pop %v1453
    %v1455 = vmul.f32 %v1407, 1.442695
    %v1456 = vpow.pop %v1455
    %v1457 = vmul.f32 %v1408, 1.442695
    %v1458 = vpow.pop %v1457
    %v1459 = vmul.f32 %v1409, 1.442695
    %v1460 = vpow.pop %v1459
    %v1461 = vmul.f32 %v1410, 1.442695
    %v1462 = vpow.pop %v1461
    %v1463 = vmul.f32 %v1411, 1.442695
    %v1464 = vpow.pop %v1463
    %v1465 = vmul.f32 %v1412, 1.442695
    %v1466 = vpow.pop %v1465
    %v1467 = vmul.f32 %v1413, 1.442695
    %v1468 = vpow.pop %v1467
    %v1469 = vmul.f32 %v1414, 1.442695
    %v1470 = vpow.pop %v1469
    %v1471 = vmul.f32 %v1415, 1.442695
    %v1472 = vpow.pop %v1471
    %v1473 = vmul.f32 %v1416, 1.442695
    %v1474 = vpow.pop %v1473
    %v1475 = vmul.f32 %v1417, 1.442695
    %v1476 = vpow.pop %v1475
    %v1477 = vmul.f32 %v1418, 1.442695
    %v1478 = vpow.pop %v1477
    %v1479 = vmul.f32 %v1419, 1.442695
    %v1480 = vpow.pop %v1479
    %v1481 = vmul.f32 %v1420, 1.442695
    %v1482 = vpow.pop %v1481
    %v1483 = vmul.f32 %v1421, 1.442695
    %v1484 = vpow.pop %v1483
    %v1485 = vmul.f32 %v1422, 1.442695
    %v1486 = vpow.pop %v1485
    %v1487 = vsel %vm1246, %v1424, 0.0
    %v1488 = vsel %vm1246, %v1426, 0.0
    %v1489 = vadd.f32 %v1487, %v1488
    %v1490 = vrot.slane %v1489, 4
    %v1491 = vadd.f32 %v1489, %v1490
    %v1492 = vrot.slane %v1491, 2
    %v1493 = vadd.f32 %v1491, %v1492
    %v1494 = vrot.slane %v1493, 1
    %v1495 = vadd.f32 %v1493, %v1494
    %v1496 = vsel %vm1246, %v1428, 0.0
    %v1497 = vsel %vm1246, %v1430, 0.0
    %v1498 = vadd.f32 %v1496, %v1497
    %v1499 = vrot.slane %v1498, 4
    %v1500 = vadd.f32 %v1498, %v1499
    %v1501 = vrot.slane %v1500, 2
    %v1502 = vadd.f32 %v1500, %v1501
    %v1503 = vrot.slane %v1502, 1
    %v1504 = vadd.f32 %v1502, %v1503
    %v1505 = vsel %vm1246, %v1432, 0.0
    %v1506 = vsel %vm1246, %v1434, 0.0
    %v1507 = vadd.f32 %v1505, %v1506
    %v1508 = vrot.slane %v1507, 4
    %v1509 = vadd.f32 %v1507, %v1508
    %v1510 = vrot.slane %v1509, 2
    %v1511 = vadd.f32 %v1509, %v1510
    %v1512 = vrot.slane %v1511, 1
    %v1513 = vadd.f32 %v1511, %v1512
    %v1514 = vsel %vm1246, %v1436, 0.0
    %v1515 = vsel %vm1246, %v1438, 0.0
    %v1516 = vadd.f32 %v1514, %v1515
    %v1517 = vrot.slane %v1516, 4
    %v1518 = vadd.f32 %v1516, %v1517
    %v1519 = vrot.slane %v1518, 2
    %v1520 = vadd.f32 %v1518, %v1519
    %v1521 = vrot.slane %v1520, 1
    %v1522 = vadd.f32 %v1520, %v1521
    %v1523 = vsel %vm1246, %v1440, 0.0
    %v1524 = vsel %vm1246, %v1442, 0.0
    %v1525 = vadd.f32 %v1523, %v1524
    %v1526 = vrot.slane %v1525, 4
    %v1527 = vadd.f32 %v1525, %v1526
    %v1528 = vrot.slane %v1527, 2
    %v1529 = vadd.f32 %v1527, %v1528
    %v1530 = vrot.slane %v1529, 1
    %v1531 = vadd.f32 %v1529, %v1530
    %v1532 = vsel %vm1246, %v1444, 0.0
    %v1533 = vsel %vm1246, %v1446, 0.0
    %v1534 = vadd.f32 %v1532, %v1533
    %v1535 = vrot.slane %v1534, 4
    %v1536 = vadd.f32 %v1534, %v1535
    %v1537 = vrot.slane %v1536, 2
    %v1538 = vadd.f32 %v1536, %v1537
    %v1539 = vrot.slane %v1538, 1
    %v1540 = vadd.f32 %v1538, %v1539
    %v1541 = vsel %vm1246, %v1448, 0.0
    %v1542 = vsel %vm1246, %v1450, 0.0
    %v1543 = vadd.f32 %v1541, %v1542
    %v1544 = vrot.slane %v1543, 4
    %v1545 = vadd.f32 %v1543, %v1544
    %v1546 = vrot.slane %v1545, 2
    %v1547 = vadd.f32 %v1545, %v1546
    %v1548 = vrot.slane %v1547, 1
    %v1549 = vadd.f32 %v1547, %v1548
    %v1550 = vsel %vm1246, %v1452, 0.0
    %v1551 = vsel %vm1246, %v1454, 0.0
    %v1552 = vadd.f32 %v1550, %v1551
    %v1553 = vrot.slane %v1552, 4
    %v1554 = vadd.f32 %v1552, %v1553
    %v1555 = vrot.slane %v1554, 2
    %v1556 = vadd.f32 %v1554, %v1555
    %v1557 = vrot.slane %v1556, 1
    %v1558 = vadd.f32 %v1556, %v1557
    %v1559 = vsel %vm1246, %v1456, 0.0
    %v1560 = vsel %vm1246, %v1458, 0.0
    %v1561 = vadd.f32 %v1559, %v1560
    %v1562 = vrot.slane %v1561, 4
    %v1563 = vadd.f32 %v1561, %v1562
    %v1564 = vrot.slane %v1563, 2
    %v1565 = vadd.f32 %v1563, %v1564
    %v1566 = vrot.slane %v1565, 1
    %v1567 = vadd.f32 %v1565, %v1566
    %v1568 = vsel %vm1246, %v1460, 0.0
    %v1569 = vsel %vm1246, %v1462, 0.0
    %v1570 = vadd.f32 %v1568, %v1569
    %v1571 = vrot.slane %v1570, 4
    %v1572 = vadd.f32 %v1570, %v1571
    %v1573 = vrot.slane %v1572, 2
    %v1574 = vadd.f32 %v1572, %v1573
    %v1575 = vrot.slane %v1574, 1
    %v1576 = vadd.f32 %v1574, %v1575
    %v1577 = vsel %vm1246, %v1464, 0.0
    %v1578 = vsel %vm1246, %v1466, 0.0
    %v1579 = vadd.f32 %v1577, %v1578
    %v1580 = vrot.slane %v1579, 4
    %v1581 = vadd.f32 %v1579, %v1580
    %v1582 = vrot.slane %v1581, 2
    %v1583 = vadd.f32 %v1581, %v1582
    %v1584 = vrot.slane %v1583, 1
    %v1585 = vadd.f32 %v1583, %v1584
    %v1586 = vsel %vm1246, %v1468, 0.0
    %v1587 = vsel %vm1246, %v1470, 0.0
    %v1588 = vadd.f32 %v1586, %v1587
    %v1589 = vrot.slane %v1588, 4
    %v1590 = vadd.f32 %v1588, %v1589
    %v1591 = vrot.slane %v1590, 2
    %v1592 = vadd.f32 %v1590, %v1591
    %v1593 = vrot.slane %v1592, 1
    %v1594 = vadd.f32 %v1592, %v1593
    %v1595 = vsel %vm1246, %v1472, 0.0
    %v1596 = vsel %vm1246, %v1474, 0.0
    %v1597 = vadd.f32 %v1595, %v1596
    %v1598 = vrot.slane %v1597, 4
    %v1599 = vadd.f32 %v1597, %v1598
    %v1600 = vrot.slane %v1599, 2
    %v1601 = vadd.f32 %v1599, %v1600
    %v1602 = vrot.slane %v1601, 1
    %v1603 = vadd.f32 %v1601, %v1602
    %v1604 = vsel %vm1246, %v1476, 0.0
    %v1605 = vsel %vm1246, %v1478, 0.0
    %v1606 = vadd.f32 %v1604, %v1605
    %v1607 = vrot.slane %v1606, 4
    %v1608 = vadd.f32 %v1606, %v1607
    %v1609 = vrot.slane %v1608, 2
    %v1610 = vadd.f32 %v1608, %v1609
    %v1611 = vrot.slane %v1610, 1
    %v1612 = vadd.f32 %v1610, %v1611
    %v1613 = vsel %vm1246, %v1480, 0.0
    %v1614 = vsel %vm1246, %v1482, 0.0
    %v1615 = vadd.f32 %v1613, %v1614
    %v1616 = vrot.slane %v1615, 4
    %v1617 = vadd.f32 %v1615, %v1616
    %v1618 = vrot.slane %v1617, 2
    %v1619 = vadd.f32 %v1617, %v1618
    %v1620 = vrot.slane %v1619, 1
    %v1621 = vadd.f32 %v1619, %v1620
    %v1622 = vsel %vm1246, %v1484, 0.0
    %v1623 = vsel %vm1246, %v1486, 0.0
    %v1624 = vadd.f32 %v1622, %v1623
    %v1625 = vrot.slane %v1624, 4
    %v1626 = vadd.f32 %v1624, %v1625
    %v1627 = vrot.slane %v1626, 2
    %v1628 = vadd.f32 %v1626, %v1627
    %v1629 = vrot.slane %v1628, 1
    %v1630 = vadd.f32 %v1628, %v1629
    %v1631 = vmax.f32 %v1495, 1e-20
    %v1632 = vmax.f32 %v1504, 1e-20
    %v1633 = vmax.f32 %v1513, 1e-20
    %v1634 = vmax.f32 %v1522, 1e-20
    %v1635 = vmax.f32 %v1531, 1e-20
    %v1636 = vmax.f32 %v1540, 1e-20
    %v1637 = vmax.f32 %v1549, 1e-20
    %v1638 = vmax.f32 %v1558, 1e-20
    %v1639 = vmax.f32 %v1567, 1e-20
    %v1640 = vmax.f32 %v1576, 1e-20
    %v1641 = vmax.f32 %v1585, 1e-20
    %v1642 = vmax.f32 %v1594, 1e-20
    %v1643 = vmax.f32 %v1603, 1e-20
    %v1644 = vmax.f32 %v1612, 1e-20
    %v1645 = vmax.f32 %v1621, 1e-20
    %v1646 = vmax.f32 %v1630, 1e-20
    %v1647 = vrcp.pop %v1631
    %v1648 = vrcp.pop %v1632
    %v1649 = vrcp.pop %v1633
    %v1650 = vrcp.pop %v1634
    %v1651 = vrcp.pop %v1635
    %v1652 = vrcp.pop %v1636
    %v1653 = vrcp.pop %v1637
    %v1654 = vrcp.pop %v1638
    %v1655 = vrcp.pop %v1639
    %v1656 = vrcp.pop %v1640
    %v1657 = vrcp.pop %v1641
    %v1658 = vrcp.pop %v1642
    %v1659 = vrcp.pop %v1643
    %v1660 = vrcp.pop %v1644
    %v1661 = vrcp.pop %v1645
    %v1662 = vrcp.pop %v1646
    %v1663 = vmul.f32 %v1424, %v1647
    %v1664 = vmul.f32 %v1426, %v1647
    %v1665 = vmul.f32 %v1428, %v1648
    %v1666 = vmul.f32 %v1430, %v1648
    %v1667 = vmul.f32 %v1432, %v1649
    %v1668 = vmul.f32 %v1434, %v1649
    %v1669 = vmul.f32 %v1436, %v1650
    %v1670 = vmul.f32 %v1438, %v1650
    %v1671 = vmul.f32 %v1440, %v1651
    %v1672 = vmul.f32 %v1442, %v1651
    %v1673 = vmul.f32 %v1444, %v1652
    %v1674 = vmul.f32 %v1446, %v1652
    %v1675 = vmul.f32 %v1448, %v1653
    %v1676 = vmul.f32 %v1450, %v1653
    %v1677 = vmul.f32 %v1452, %v1654
    %v1678 = vmul.f32 %v1454, %v1654
    %v1679 = vmul.f32 %v1456, %v1655
    %v1680 = vmul.f32 %v1458, %v1655
    %v1681 = vmul.f32 %v1460, %v1656
    %v1682 = vmul.f32 %v1462, %v1656
    %v1683 = vmul.f32 %v1464, %v1657
    %v1684 = vmul.f32 %v1466, %v1657
    %v1685 = vmul.f32 %v1468, %v1658
    %v1686 = vmul.f32 %v1470, %v1658
    %v1687 = vmul.f32 %v1472, %v1659
    %v1688 = vmul.f32 %v1474, %v1659
    %v1689 = vmul.f32 %v1476, %v1660
    %v1690 = vmul.f32 %v1478, %v1660
    %v1691 = vmul.f32 %v1480, %v1661
    %v1692 = vmul.f32 %v1482, %v1661
    %v1693 = vmul.f32 %v1484, %v1662
    %v1694 = vmul.f32 %v1486, %v1662
    %vm1695 = vcmp.eq.s32.totalorder %v123, 0
    %v1696 = vsel %vm1695, 1, 0
    %vm1697 = vcmp.eq.s32.totalorder %v1696, 1
    %v1698 = vsel %vm1697, %v1663, 0.0
    %v1699 = vsel %vm1697, %v1664, 0.0
    %v1700 = vsel %vm1697, %v1665, 0.0
    %v1701 = vsel %vm1697, %v1666, 0.0
    %v1702 = vsel %vm1697, %v1667, 0.0
    %v1703 = vsel %vm1697, %v1668, 0.0
    %v1704 = vsel %vm1697, %v1669, 0.0
    %v1705 = vsel %vm1697, %v1670, 0.0
    %v1706 = vsel %vm1697, %v1671, 0.0
    %v1707 = vsel %vm1697, %v1672, 0.0
    %v1708 = vsel %vm1697, %v1673, 0.0
    %v1709 = vsel %vm1697, %v1674, 0.0
    %v1710 = vsel %vm1697, %v1675, 0.0
    %v1711 = vsel %vm1697, %v1676, 0.0
    %v1712 = vsel %vm1697, %v1677, 0.0
    %v1713 = vsel %vm1697, %v1678, 0.0
    %v1714 = vsel %vm1697, %v1679, 0.0
    %v1715 = vsel %vm1697, %v1680, 0.0
    %v1716 = vsel %vm1697, %v1681, 0.0
    %v1717 = vsel %vm1697, %v1682, 0.0
    %v1718 = vsel %vm1697, %v1683, 0.0
    %v1719 = vsel %vm1697, %v1684, 0.0
    %v1720 = vsel %vm1697, %v1685, 0.0
    %v1721 = vsel %vm1697, %v1686, 0.0
    %v1722 = vsel %vm1697, %v1687, 0.0
    %v1723 = vsel %vm1697, %v1688, 0.0
    %v1724 = vsel %vm1697, %v1689, 0.0
    %v1725 = vsel %vm1697, %v1690, 0.0
    %v1726 = vsel %vm1697, %v1691, 0.0
    %v1727 = vsel %vm1697, %v1692, 0.0
    %v1728 = vsel %vm1697, %v1693, 0.0
    %v1729 = vsel %vm1697, %v1694, 0.0
    %v1730 = vsel %vm1246, %v1698, 0.0
    %1731 = vadd.xlane.f32.xlu0 %v1730
    %v1732 = vpop.xlane.xlu0 %1731
    %v1733 = vsel %vm1246, %v1699, 0.0
    %1734 = vadd.xlane.f32.xlu0 %v1733
    %v1735 = vpop.xlane.xlu0 %1734
    %v1736 = vsel %vm1246, %v1700, 0.0
    %1737 = vadd.xlane.f32.xlu0 %v1736
    %v1738 = vpop.xlane.xlu0 %1737
    %v1739 = vsel %vm1246, %v1701, 0.0
    %1740 = vadd.xlane.f32.xlu0 %v1739
    %v1741 = vpop.xlane.xlu0 %1740
    %v1742 = vsel %vm1246, %v1702, 0.0
    %1743 = vadd.xlane.f32.xlu0 %v1742
    %v1744 = vpop.xlane.xlu0 %1743
    %v1745 = vsel %vm1246, %v1703, 0.0
    %1746 = vadd.xlane.f32.xlu0 %v1745
    %v1747 = vpop.xlane.xlu0 %1746
    %v1748 = vsel %vm1246, %v1704, 0.0
    %1749 = vadd.xlane.f32.xlu0 %v1748
    %v1750 = vpop.xlane.xlu0 %1749
    %v1751 = vsel %vm1246, %v1705, 0.0
    %1752 = vadd.xlane.f32.xlu0 %v1751
    %v1753 = vpop.xlane.xlu0 %1752
    %v1754 = vsel %vm1246, %v1706, 0.0
    %1755 = vadd.xlane.f32.xlu0 %v1754
    %v1756 = vpop.xlane.xlu0 %1755
    %v1757 = vsel %vm1246, %v1707, 0.0
    %1758 = vadd.xlane.f32.xlu0 %v1757
    %v1759 = vpop.xlane.xlu0 %1758
    %v1760 = vsel %vm1246, %v1708, 0.0
    %1761 = vadd.xlane.f32.xlu0 %v1760
    %v1762 = vpop.xlane.xlu0 %1761
    %v1763 = vsel %vm1246, %v1709, 0.0
    %1764 = vadd.xlane.f32.xlu0 %v1763
    %v1765 = vpop.xlane.xlu0 %1764
    %v1766 = vsel %vm1246, %v1710, 0.0
    %1767 = vadd.xlane.f32.xlu0 %v1766
    %v1768 = vpop.xlane.xlu0 %1767
    %v1769 = vsel %vm1246, %v1711, 0.0
    %1770 = vadd.xlane.f32.xlu0 %v1769
    %v1771 = vpop.xlane.xlu0 %1770
    %v1772 = vsel %vm1246, %v1712, 0.0
    %1773 = vadd.xlane.f32.xlu0 %v1772
    %v1774 = vpop.xlane.xlu0 %1773
    %v1775 = vsel %vm1246, %v1713, 0.0
    %1776 = vadd.xlane.f32.xlu0 %v1775
    %v1777 = vpop.xlane.xlu0 %1776
    %v1778 = vsel %vm1246, %v1714, 0.0
    %1779 = vadd.xlane.f32.xlu0 %v1778
    %v1780 = vpop.xlane.xlu0 %1779
    %v1781 = vsel %vm1246, %v1715, 0.0
    %1782 = vadd.xlane.f32.xlu0 %v1781
    %v1783 = vpop.xlane.xlu0 %1782
    %v1784 = vsel %vm1246, %v1716, 0.0
    %1785 = vadd.xlane.f32.xlu0 %v1784
    %v1786 = vpop.xlane.xlu0 %1785
    %v1787 = vsel %vm1246, %v1717, 0.0
    %1788 = vadd.xlane.f32.xlu0 %v1787
    %v1789 = vpop.xlane.xlu0 %1788
    %v1790 = vsel %vm1246, %v1718, 0.0
    %1791 = vadd.xlane.f32.xlu0 %v1790
    %v1792 = vpop.xlane.xlu0 %1791
    %v1793 = vsel %vm1246, %v1719, 0.0
    %1794 = vadd.xlane.f32.xlu0 %v1793
    %v1795 = vpop.xlane.xlu0 %1794
    %v1796 = vsel %vm1246, %v1720, 0.0
    %1797 = vadd.xlane.f32.xlu0 %v1796
    %v1798 = vpop.xlane.xlu0 %1797
    %v1799 = vsel %vm1246, %v1721, 0.0
    %1800 = vadd.xlane.f32.xlu0 %v1799
    %v1801 = vpop.xlane.xlu0 %1800
    %v1802 = vsel %vm1246, %v1722, 0.0
    %1803 = vadd.xlane.f32.xlu0 %v1802
    %v1804 = vpop.xlane.xlu0 %1803
    %v1805 = vsel %vm1246, %v1723, 0.0
    %1806 = vadd.xlane.f32.xlu0 %v1805
    %v1807 = vpop.xlane.xlu0 %1806
    %v1808 = vsel %vm1246, %v1724, 0.0
    %1809 = vadd.xlane.f32.xlu0 %v1808
    %v1810 = vpop.xlane.xlu0 %1809
    %v1811 = vsel %vm1246, %v1725, 0.0
    %1812 = vadd.xlane.f32.xlu0 %v1811
    %v1813 = vpop.xlane.xlu0 %1812
    %v1814 = vsel %vm1246, %v1726, 0.0
    %1815 = vadd.xlane.f32.xlu0 %v1814
    %v1816 = vpop.xlane.xlu0 %1815
    %v1817 = vsel %vm1246, %v1727, 0.0
    %1818 = vadd.xlane.f32.xlu0 %v1817
    %v1819 = vpop.xlane.xlu0 %1818
    %v1820 = vsel %vm1246, %v1728, 0.0
    %1821 = vadd.xlane.f32.xlu0 %v1820
    %v1822 = vpop.xlane.xlu0 %1821
    %v1823 = vsel %vm1246, %v1729, 0.0
    %1824 = vadd.xlane.f32.xlu0 %v1823
    %v1825 = vpop.xlane.xlu0 %1824
    %vm1826 = vcmp.eq.s32.totalorder %v123, 1
    %v1827 = vsel %vm1826, 1, 0
    %vm1828 = vcmp.eq.s32.totalorder %v1827, 1
    %v1829 = vsel %vm1828, %v1663, 0.0
    %v1830 = vsel %vm1828, %v1664, 0.0
    %v1831 = vsel %vm1828, %v1665, 0.0
    %v1832 = vsel %vm1828, %v1666, 0.0
    %v1833 = vsel %vm1828, %v1667, 0.0
    %v1834 = vsel %vm1828, %v1668, 0.0
    %v1835 = vsel %vm1828, %v1669, 0.0
    %v1836 = vsel %vm1828, %v1670, 0.0
    %v1837 = vsel %vm1828, %v1671, 0.0
    %v1838 = vsel %vm1828, %v1672, 0.0
    %v1839 = vsel %vm1828, %v1673, 0.0
    %v1840 = vsel %vm1828, %v1674, 0.0
    %v1841 = vsel %vm1828, %v1675, 0.0
    %v1842 = vsel %vm1828, %v1676, 0.0
    %v1843 = vsel %vm1828, %v1677, 0.0
    %v1844 = vsel %vm1828, %v1678, 0.0
    %v1845 = vsel %vm1828, %v1679, 0.0
    %v1846 = vsel %vm1828, %v1680, 0.0
    %v1847 = vsel %vm1828, %v1681, 0.0
    %v1848 = vsel %vm1828, %v1682, 0.0
    %v1849 = vsel %vm1828, %v1683, 0.0
    %v1850 = vsel %vm1828, %v1684, 0.0
    %v1851 = vsel %vm1828, %v1685, 0.0
    %v1852 = vsel %vm1828, %v1686, 0.0
    %v1853 = vsel %vm1828, %v1687, 0.0
    %v1854 = vsel %vm1828, %v1688, 0.0
    %v1855 = vsel %vm1828, %v1689, 0.0
    %v1856 = vsel %vm1828, %v1690, 0.0
    %v1857 = vsel %vm1828, %v1691, 0.0
    %v1858 = vsel %vm1828, %v1692, 0.0
    %v1859 = vsel %vm1828, %v1693, 0.0
    %v1860 = vsel %vm1828, %v1694, 0.0
    %v1861 = vsel %vm1246, %v1829, 0.0
    %1862 = vadd.xlane.f32.xlu0 %v1861
    %v1863 = vpop.xlane.xlu0 %1862
    %v1864 = vsel %vm1246, %v1830, 0.0
    %1865 = vadd.xlane.f32.xlu0 %v1864
    %v1866 = vpop.xlane.xlu0 %1865
    %v1867 = vsel %vm1246, %v1831, 0.0
    %1868 = vadd.xlane.f32.xlu0 %v1867
    %v1869 = vpop.xlane.xlu0 %1868
    %v1870 = vsel %vm1246, %v1832, 0.0
    %1871 = vadd.xlane.f32.xlu0 %v1870
    %v1872 = vpop.xlane.xlu0 %1871
    %v1873 = vsel %vm1246, %v1833, 0.0
    %1874 = vadd.xlane.f32.xlu0 %v1873
    %v1875 = vpop.xlane.xlu0 %1874
    %v1876 = vsel %vm1246, %v1834, 0.0
    %1877 = vadd.xlane.f32.xlu0 %v1876
    %v1878 = vpop.xlane.xlu0 %1877
    %v1879 = vsel %vm1246, %v1835, 0.0
    %1880 = vadd.xlane.f32.xlu0 %v1879
    %v1881 = vpop.xlane.xlu0 %1880
    %v1882 = vsel %vm1246, %v1836, 0.0
    %1883 = vadd.xlane.f32.xlu0 %v1882
    %v1884 = vpop.xlane.xlu0 %1883
    %v1885 = vsel %vm1246, %v1837, 0.0
    %1886 = vadd.xlane.f32.xlu0 %v1885
    %v1887 = vpop.xlane.xlu0 %1886
    %v1888 = vsel %vm1246, %v1838, 0.0
    %1889 = vadd.xlane.f32.xlu0 %v1888
    %v1890 = vpop.xlane.xlu0 %1889
    %v1891 = vsel %vm1246, %v1839, 0.0
    %1892 = vadd.xlane.f32.xlu0 %v1891
    %v1893 = vpop.xlane.xlu0 %1892
    %v1894 = vsel %vm1246, %v1840, 0.0
    %1895 = vadd.xlane.f32.xlu0 %v1894
    %v1896 = vpop.xlane.xlu0 %1895
    %v1897 = vsel %vm1246, %v1841, 0.0
    %1898 = vadd.xlane.f32.xlu0 %v1897
    %v1899 = vpop.xlane.xlu0 %1898
    %v1900 = vsel %vm1246, %v1842, 0.0
    %1901 = vadd.xlane.f32.xlu0 %v1900
    %v1902 = vpop.xlane.xlu0 %1901
    %v1903 = vsel %vm1246, %v1843, 0.0
    %1904 = vadd.xlane.f32.xlu0 %v1903
    %v1905 = vpop.xlane.xlu0 %1904
    %v1906 = vsel %vm1246, %v1844, 0.0
    %1907 = vadd.xlane.f32.xlu0 %v1906
    %v1908 = vpop.xlane.xlu0 %1907
    %v1909 = vsel %vm1246, %v1845, 0.0
    %1910 = vadd.xlane.f32.xlu0 %v1909
    %v1911 = vpop.xlane.xlu0 %1910
    %v1912 = vsel %vm1246, %v1846, 0.0
    %1913 = vadd.xlane.f32.xlu0 %v1912
    %v1914 = vpop.xlane.xlu0 %1913
    %v1915 = vsel %vm1246, %v1847, 0.0
    %1916 = vadd.xlane.f32.xlu0 %v1915
    %v1917 = vpop.xlane.xlu0 %1916
    %v1918 = vsel %vm1246, %v1848, 0.0
    %1919 = vadd.xlane.f32.xlu0 %v1918
    %v1920 = vpop.xlane.xlu0 %1919
    %v1921 = vsel %vm1246, %v1849, 0.0
    %1922 = vadd.xlane.f32.xlu0 %v1921
    %v1923 = vpop.xlane.xlu0 %1922
    %v1924 = vsel %vm1246, %v1850, 0.0
    %1925 = vadd.xlane.f32.xlu0 %v1924
    %v1926 = vpop.xlane.xlu0 %1925
    %v1927 = vsel %vm1246, %v1851, 0.0
    %1928 = vadd.xlane.f32.xlu0 %v1927
    %v1929 = vpop.xlane.xlu0 %1928
    %v1930 = vsel %vm1246, %v1852, 0.0
    %1931 = vadd.xlane.f32.xlu0 %v1930
    %v1932 = vpop.xlane.xlu0 %1931
    %v1933 = vsel %vm1246, %v1853, 0.0
    %1934 = vadd.xlane.f32.xlu0 %v1933
    %v1935 = vpop.xlane.xlu0 %1934
    %v1936 = vsel %vm1246, %v1854, 0.0
    %1937 = vadd.xlane.f32.xlu0 %v1936
    %v1938 = vpop.xlane.xlu0 %1937
    %v1939 = vsel %vm1246, %v1855, 0.0
    %1940 = vadd.xlane.f32.xlu0 %v1939
    %v1941 = vpop.xlane.xlu0 %1940
    %v1942 = vsel %vm1246, %v1856, 0.0
    %1943 = vadd.xlane.f32.xlu0 %v1942
    %v1944 = vpop.xlane.xlu0 %1943
    %v1945 = vsel %vm1246, %v1857, 0.0
    %1946 = vadd.xlane.f32.xlu0 %v1945
    %v1947 = vpop.xlane.xlu0 %1946
    %v1948 = vsel %vm1246, %v1858, 0.0
    %1949 = vadd.xlane.f32.xlu0 %v1948
    %v1950 = vpop.xlane.xlu0 %1949
    %v1951 = vsel %vm1246, %v1859, 0.0
    %1952 = vadd.xlane.f32.xlu0 %v1951
    %v1953 = vpop.xlane.xlu0 %1952
    %v1954 = vsel %vm1246, %v1860, 0.0
    %1955 = vadd.xlane.f32.xlu0 %v1954
    %v1956 = vpop.xlane.xlu0 %1955
    %v1989 = vlaneseq
    %v1990 = vshrl.u32 %v1989, 7
    %v1991 = vsub.s32 %v123, %v1990
    %v1992 = vrot.slane %v1863, %v1991
    %v1993 = vadd.s32 %v123, 4294967288
    %v1994 = vlaneseq
    %v1995 = vshrl.u32 %v1994, 7
    %v1996 = vsub.s32 %v1993, %v1995
    %v1997 = vrot.slane %v1866, %v1996
    %vm1998 = vcmask 130112
    %v1999 = vsel %vm1998, %v1997, %v1992
    %v2000 = vlaneseq
    %v2001 = vshrl.u32 %v2000, 7
    %v2002 = vsub.s32 %v123, %v2001
    %v2003 = vrot.slane %v1869, %v2002
    %v2004 = vlaneseq
    %v2005 = vshrl.u32 %v2004, 7
    %v2006 = vsub.s32 %v1993, %v2005
    %v2007 = vrot.slane %v1872, %v2006
    %v2008 = vsel %vm1998, %v2007, %v2003
    %v2009 = vlaneseq
    %v2010 = vshrl.u32 %v2009, 7
    %v2011 = vsub.s32 %v123, %v2010
    %v2012 = vrot.slane %v1875, %v2011
    %v2013 = vlaneseq
    %v2014 = vshrl.u32 %v2013, 7
    %v2015 = vsub.s32 %v1993, %v2014
    %v2016 = vrot.slane %v1878, %v2015
    %v2017 = vsel %vm1998, %v2016, %v2012
    %v2018 = vlaneseq
    %v2019 = vshrl.u32 %v2018, 7
    %v2020 = vsub.s32 %v123, %v2019
    %v2021 = vrot.slane %v1881, %v2020
    %v2022 = vlaneseq
    %v2023 = vshrl.u32 %v2022, 7
    %v2024 = vsub.s32 %v1993, %v2023
    %v2025 = vrot.slane %v1884, %v2024
    %v2026 = vsel %vm1998, %v2025, %v2021
    %v2027 = vlaneseq
    %v2028 = vshrl.u32 %v2027, 7
    %v2029 = vsub.s32 %v123, %v2028
    %v2030 = vrot.slane %v1887, %v2029
    %v2031 = vlaneseq
    %v2032 = vshrl.u32 %v2031, 7
    %v2033 = vsub.s32 %v1993, %v2032
    %v2034 = vrot.slane %v1890, %v2033
    %v2035 = vsel %vm1998, %v2034, %v2030
    %v2036 = vlaneseq
    %v2037 = vshrl.u32 %v2036, 7
    %v2038 = vsub.s32 %v123, %v2037
    %v2039 = vrot.slane %v1893, %v2038
    %v2040 = vlaneseq
    %v2041 = vshrl.u32 %v2040, 7
    %v2042 = vsub.s32 %v1993, %v2041
    %v2043 = vrot.slane %v1896, %v2042
    %v2044 = vsel %vm1998, %v2043, %v2039
    %v2045 = vlaneseq
    %v2046 = vshrl.u32 %v2045, 7
    %v2047 = vsub.s32 %v123, %v2046
    %v2048 = vrot.slane %v1899, %v2047
    %v2049 = vlaneseq
    %v2050 = vshrl.u32 %v2049, 7
    %v2051 = vsub.s32 %v1993, %v2050
    %v2052 = vrot.slane %v1902, %v2051
    %v2053 = vsel %vm1998, %v2052, %v2048
    %v2054 = vlaneseq
    %v2055 = vshrl.u32 %v2054, 7
    %v2056 = vsub.s32 %v123, %v2055
    %v2057 = vrot.slane %v1905, %v2056
    %v2058 = vlaneseq
    %v2059 = vshrl.u32 %v2058, 7
    %v2060 = vsub.s32 %v1993, %v2059
    %v2061 = vrot.slane %v1908, %v2060
    %v2062 = vsel %vm1998, %v2061, %v2057
    %v2063 = vlaneseq
    %v2064 = vshrl.u32 %v2063, 7
    %v2065 = vsub.s32 %v123, %v2064
    %v2066 = vrot.slane %v1911, %v2065
    %v2067 = vlaneseq
    %v2068 = vshrl.u32 %v2067, 7
    %v2069 = vsub.s32 %v1993, %v2068
    %v2070 = vrot.slane %v1914, %v2069
    %v2071 = vsel %vm1998, %v2070, %v2066
    %v2072 = vlaneseq
    %v2073 = vshrl.u32 %v2072, 7
    %v2074 = vsub.s32 %v123, %v2073
    %v2075 = vrot.slane %v1917, %v2074
    %v2076 = vlaneseq
    %v2077 = vshrl.u32 %v2076, 7
    %v2078 = vsub.s32 %v1993, %v2077
    %v2079 = vrot.slane %v1920, %v2078
    %v2080 = vsel %vm1998, %v2079, %v2075
    %v2081 = vlaneseq
    %v2082 = vshrl.u32 %v2081, 7
    %v2083 = vsub.s32 %v123, %v2082
    %v2084 = vrot.slane %v1923, %v2083
    %v2085 = vlaneseq
    %v2086 = vshrl.u32 %v2085, 7
    %v2087 = vsub.s32 %v1993, %v2086
    %v2088 = vrot.slane %v1926, %v2087
    %v2089 = vsel %vm1998, %v2088, %v2084
    %v2090 = vlaneseq
    %v2091 = vshrl.u32 %v2090, 7
    %v2092 = vsub.s32 %v123, %v2091
    %v2093 = vrot.slane %v1929, %v2092
    %v2094 = vlaneseq
    %v2095 = vshrl.u32 %v2094, 7
    %v2096 = vsub.s32 %v1993, %v2095
    %v2097 = vrot.slane %v1932, %v2096
    %v2098 = vsel %vm1998, %v2097, %v2093
    %v2099 = vlaneseq
    %v2100 = vshrl.u32 %v2099, 7
    %v2101 = vsub.s32 %v123, %v2100
    %v2102 = vrot.slane %v1935, %v2101
    %v2103 = vlaneseq
    %v2104 = vshrl.u32 %v2103, 7
    %v2105 = vsub.s32 %v1993, %v2104
    %v2106 = vrot.slane %v1938, %v2105
    %v2107 = vsel %vm1998, %v2106, %v2102
    %v2108 = vlaneseq
    %v2109 = vshrl.u32 %v2108, 7
    %v2110 = vsub.s32 %v123, %v2109
    %v2111 = vrot.slane %v1941, %v2110
    %v2112 = vlaneseq
    %v2113 = vshrl.u32 %v2112, 7
    %v2114 = vsub.s32 %v1993, %v2113
    %v2115 = vrot.slane %v1944, %v2114
    %v2116 = vsel %vm1998, %v2115, %v2111
    %v2117 = vlaneseq
    %v2118 = vshrl.u32 %v2117, 7
    %v2119 = vsub.s32 %v123, %v2118
    %v2120 = vrot.slane %v1947, %v2119
    %v2121 = vlaneseq
    %v2122 = vshrl.u32 %v2121, 7
    %v2123 = vsub.s32 %v1993, %v2122
    %v2124 = vrot.slane %v1950, %v2123
    %v2125 = vsel %vm1998, %v2124, %v2120
    %v2126 = vlaneseq
    %v2127 = vshrl.u32 %v2126, 7
    %v2128 = vsub.s32 %v123, %v2127
    %v2129 = vrot.slane %v1953, %v2128
    %v2130 = vlaneseq
    %v2131 = vshrl.u32 %v2130, 7
    %v2132 = vsub.s32 %v1993, %v2131
    %v2133 = vrot.slane %v1956, %v2132
    %v2134 = vsel %vm1998, %v2133, %v2129
    %vm2135 = vcmask 1041409
    %v2136 = vsel %vm2135, %v2008, %v1999
    %vm2137 = vcmask 1042434
    %v2138 = vsel %vm2137, %v2017, %v2136
    %vm2139 = vcmask 1043459
    %v2140 = vsel %vm2139, %v2026, %v2138
    %vm2141 = vcmask 1044484
    %v2142 = vsel %vm2141, %v2035, %v2140
    %vm2143 = vcmask 1045509
    %v2144 = vsel %vm2143, %v2044, %v2142
    %vm2145 = vcmask 1046534
    %v2146 = vsel %vm2145, %v2053, %v2144
    %vm2147 = vcmask 1047559
    %v2148 = vsel %vm2147, %v2062, %v2146
    %v2149 = vsel %vm2135, %v2080, %v2071
    %v2150 = vsel %vm2137, %v2089, %v2149
    %v2151 = vsel %vm2139, %v2098, %v2150
    %v2152 = vsel %vm2141, %v2107, %v2151
    %v2153 = vsel %vm2143, %v2116, %v2152
    %v2154 = vsel %vm2145, %v2125, %v2153
    %v2155 = vsel %vm2147, %v2134, %v2154
    %2158 = vrot.lane.b32.xlu0 %v202, 96
    %v2159 = vpop.permute.xlu0 %2158
    %2160 = vrot.lane.b32.xlu0 %v206, 96
    %v2161 = vpop.permute.xlu0 %2160
    %vm2164 = vcmask 130048
    %v2165 = vsel %vm2164, %v2148, 0
    %v2167 = vsel %vm2164, %v2155, 0
    %2169 = vmatprep.subr.mxu0 0.0
    %2170 = vmatpush1.msra.mxu0 %v2159
    %2171 = vmatprep.subr.mxu0 0.0
    %2172 = vmatpush1.msra.mxu0 %v2161
    %2173 = vmatprep.subr.mxu0 0.0
    %2174 = vmatpush1.msra.mxu0 0.0
    %2175 = vmatprep.subr.mxu0 0.0
    %2176 = vmatpush1.msra.mxu0 0.0
    %2177 = vmatprep.subr.mxu0 0.0
    %2178 = vmatpush1.msra.mxu0 0.0
    %2179 = vmatprep.subr.mxu0 0.0
    %2180 = vmatpush1.msra.mxu0 0.0
    %2181 = vmatprep.subr.mxu0 0.0
    %2182 = vmatpush1.msra.mxu0 0.0
    %2183 = vmatprep.subr.mxu0 0.0
    %2184 = vmatpush1.msra.mxu0 0.0
    %2185 = vmatprep.subr.mxu0 0.0
    %2186 = vmatpush1.msra.mxu0 0.0
    %2187 = vmatprep.subr.mxu0 0.0
    %2188 = vmatpush1.msra.mxu0 0.0
    %2189 = vmatprep.subr.mxu0 0.0
    %2190 = vmatpush1.msra.mxu0 0.0
    %2191 = vmatprep.subr.mxu0 0.0
    %2192 = vmatpush1.msra.mxu0 0.0
    %2193 = vmatprep.subr.mxu0 0.0
    %2194 = vmatpush1.msra.mxu0 0.0
    %2195 = vmatprep.subr.mxu0 0.0
    %2196 = vmatpush1.msra.mxu0 0.0
    %2197 = vmatprep.subr.mxu0 0.0
    %2198 = vmatpush1.msra.mxu0 0.0
    %2199 = vmatprep.subr.mxu0 0.0
    %2200 = vmatpush1.msra.mxu0 0.0
    %2201 = vmatprep.subr.mxu0 0.0
    %2202 = vmatpush1.msra.mxu0 0.0
    %2203 = vmatprep.subr.mxu0 0.0
    %2204 = vmatpush1.msra.mxu0 0.0
    %2205 = vmatprep.subr.mxu0 0.0
    %2206 = vmatpush1.msra.mxu0 0.0
    %2207 = vmatprep.subr.mxu0 0.0
    %2208 = vmatpush1.msra.mxu0 0.0
    %2209 = vmatprep.subr.mxu0 0.0
    %2210 = vmatpush1.msra.mxu0 0.0
    %2211 = vmatprep.subr.mxu0 0.0
    %2212 = vmatpush1.msra.mxu0 0.0
    %2213 = vmatprep.subr.mxu0 0.0
    %2214 = vmatpush1.msra.mxu0 0.0
    %2215 = vmatprep.subr.mxu0 0.0
    %2216 = vmatpush1.msra.mxu0 0.0
    %2217 = vmatprep.subr.mxu0 0.0
    %2218 = vmatpush1.msra.mxu0 0.0
    %2219 = vmatprep.subr.mxu0 0.0
    %2220 = vmatpush1.msra.mxu0 0.0
    %2221 = vmatprep.subr.mxu0 0.0
    %2222 = vmatpush1.msra.mxu0 0.0
    %2223 = vmatprep.subr.mxu0 0.0
    %2224 = vmatpush1.msra.mxu0 0.0
    %2225 = vmatprep.subr.mxu0 0.0
    %2226 = vmatpush1.msra.mxu0 0.0
    %2227 = vmatprep.subr.mxu0 0.0
    %2228 = vmatpush1.msra.mxu0 0.0
    %2229 = vmatprep.subr.mxu0 0.0
    %2230 = vmatpush1.msra.mxu0 0.0
    %2231 = vmatprep.subr.mxu0 0.0
    %2232 = vmatpush1.msra.mxu0 0.0
    %2233 = vmatprep.mubr.f32.mxu0 0.0
    %2234 = vmatmul.mubr.f32.gmra.mrb[0].mxu0 %v2165
    %v2235 = vpop.f32.mrb[0].mxu0
    %v2236 = vadd.f32 0.0, %v2235
    %v2237 = vpop.f32.mrb[0].mxu0
    %2238 = vmatprep.mubr.f32.mxu0 0.0
    %2239 = vmatmul.mubr.f32.gmra.mrb[0].mxu0 %v2167
    %v2240 = vpop.f32.mrb[0].mxu0
    %v2241 = vadd.f32 0.0, %v2240
    %v2242 = vpop.f32.mrb[0].mxu0
    %2243 = vdwg.mxu0
    %v2276 = vlaneseq
    %v2277 = vshrl.u32 %v2276, 7
    %v2278 = vsub.s32 %v123, %v2277
    %v2279 = vrot.slane %v1732, %v2278
    %v2280 = vlaneseq
    %v2281 = vshrl.u32 %v2280, 7
    %v2282 = vsub.s32 %v1993, %v2281
    %v2283 = vrot.slane %v1735, %v2282
    %v2284 = vsel %vm1998, %v2283, %v2279
    %v2285 = vlaneseq
    %v2286 = vshrl.u32 %v2285, 7
    %v2287 = vsub.s32 %v123, %v2286
    %v2288 = vrot.slane %v1738, %v2287
    %v2289 = vlaneseq
    %v2290 = vshrl.u32 %v2289, 7
    %v2291 = vsub.s32 %v1993, %v2290
    %v2292 = vrot.slane %v1741, %v2291
    %v2293 = vsel %vm1998, %v2292, %v2288
    %v2294 = vlaneseq
    %v2295 = vshrl.u32 %v2294, 7
    %v2296 = vsub.s32 %v123, %v2295
    %v2297 = vrot.slane %v1744, %v2296
    %v2298 = vlaneseq
    %v2299 = vshrl.u32 %v2298, 7
    %v2300 = vsub.s32 %v1993, %v2299
    %v2301 = vrot.slane %v1747, %v2300
    %v2302 = vsel %vm1998, %v2301, %v2297
    %v2303 = vlaneseq
    %v2304 = vshrl.u32 %v2303, 7
    %v2305 = vsub.s32 %v123, %v2304
    %v2306 = vrot.slane %v1750, %v2305
    %v2307 = vlaneseq
    %v2308 = vshrl.u32 %v2307, 7
    %v2309 = vsub.s32 %v1993, %v2308
    %v2310 = vrot.slane %v1753, %v2309
    %v2311 = vsel %vm1998, %v2310, %v2306
    %v2312 = vlaneseq
    %v2313 = vshrl.u32 %v2312, 7
    %v2314 = vsub.s32 %v123, %v2313
    %v2315 = vrot.slane %v1756, %v2314
    %v2316 = vlaneseq
    %v2317 = vshrl.u32 %v2316, 7
    %v2318 = vsub.s32 %v1993, %v2317
    %v2319 = vrot.slane %v1759, %v2318
    %v2320 = vsel %vm1998, %v2319, %v2315
    %v2321 = vlaneseq
    %v2322 = vshrl.u32 %v2321, 7
    %v2323 = vsub.s32 %v123, %v2322
    %v2324 = vrot.slane %v1762, %v2323
    %v2325 = vlaneseq
    %v2326 = vshrl.u32 %v2325, 7
    %v2327 = vsub.s32 %v1993, %v2326
    %v2328 = vrot.slane %v1765, %v2327
    %v2329 = vsel %vm1998, %v2328, %v2324
    %v2330 = vlaneseq
    %v2331 = vshrl.u32 %v2330, 7
    %v2332 = vsub.s32 %v123, %v2331
    %v2333 = vrot.slane %v1768, %v2332
    %v2334 = vlaneseq
    %v2335 = vshrl.u32 %v2334, 7
    %v2336 = vsub.s32 %v1993, %v2335
    %v2337 = vrot.slane %v1771, %v2336
    %v2338 = vsel %vm1998, %v2337, %v2333
    %v2339 = vlaneseq
    %v2340 = vshrl.u32 %v2339, 7
    %v2341 = vsub.s32 %v123, %v2340
    %v2342 = vrot.slane %v1774, %v2341
    %v2343 = vlaneseq
    %v2344 = vshrl.u32 %v2343, 7
    %v2345 = vsub.s32 %v1993, %v2344
    %v2346 = vrot.slane %v1777, %v2345
    %v2347 = vsel %vm1998, %v2346, %v2342
    %v2348 = vlaneseq
    %v2349 = vshrl.u32 %v2348, 7
    %v2350 = vsub.s32 %v123, %v2349
    %v2351 = vrot.slane %v1780, %v2350
    %v2352 = vlaneseq
    %v2353 = vshrl.u32 %v2352, 7
    %v2354 = vsub.s32 %v1993, %v2353
    %v2355 = vrot.slane %v1783, %v2354
    %v2356 = vsel %vm1998, %v2355, %v2351
    %v2357 = vlaneseq
    %v2358 = vshrl.u32 %v2357, 7
    %v2359 = vsub.s32 %v123, %v2358
    %v2360 = vrot.slane %v1786, %v2359
    %v2361 = vlaneseq
    %v2362 = vshrl.u32 %v2361, 7
    %v2363 = vsub.s32 %v1993, %v2362
    %v2364 = vrot.slane %v1789, %v2363
    %v2365 = vsel %vm1998, %v2364, %v2360
    %v2366 = vlaneseq
    %v2367 = vshrl.u32 %v2366, 7
    %v2368 = vsub.s32 %v123, %v2367
    %v2369 = vrot.slane %v1792, %v2368
    %v2370 = vlaneseq
    %v2371 = vshrl.u32 %v2370, 7
    %v2372 = vsub.s32 %v1993, %v2371
    %v2373 = vrot.slane %v1795, %v2372
    %v2374 = vsel %vm1998, %v2373, %v2369
    %v2375 = vlaneseq
    %v2376 = vshrl.u32 %v2375, 7
    %v2377 = vsub.s32 %v123, %v2376
    %v2378 = vrot.slane %v1798, %v2377
    %v2379 = vlaneseq
    %v2380 = vshrl.u32 %v2379, 7
    %v2381 = vsub.s32 %v1993, %v2380
    %v2382 = vrot.slane %v1801, %v2381
    %v2383 = vsel %vm1998, %v2382, %v2378
    %v2384 = vlaneseq
    %v2385 = vshrl.u32 %v2384, 7
    %v2386 = vsub.s32 %v123, %v2385
    %v2387 = vrot.slane %v1804, %v2386
    %v2388 = vlaneseq
    %v2389 = vshrl.u32 %v2388, 7
    %v2390 = vsub.s32 %v1993, %v2389
    %v2391 = vrot.slane %v1807, %v2390
    %v2392 = vsel %vm1998, %v2391, %v2387
    %v2393 = vlaneseq
    %v2394 = vshrl.u32 %v2393, 7
    %v2395 = vsub.s32 %v123, %v2394
    %v2396 = vrot.slane %v1810, %v2395
    %v2397 = vlaneseq
    %v2398 = vshrl.u32 %v2397, 7
    %v2399 = vsub.s32 %v1993, %v2398
    %v2400 = vrot.slane %v1813, %v2399
    %v2401 = vsel %vm1998, %v2400, %v2396
    %v2402 = vlaneseq
    %v2403 = vshrl.u32 %v2402, 7
    %v2404 = vsub.s32 %v123, %v2403
    %v2405 = vrot.slane %v1816, %v2404
    %v2406 = vlaneseq
    %v2407 = vshrl.u32 %v2406, 7
    %v2408 = vsub.s32 %v1993, %v2407
    %v2409 = vrot.slane %v1819, %v2408
    %v2410 = vsel %vm1998, %v2409, %v2405
    %v2411 = vlaneseq
    %v2412 = vshrl.u32 %v2411, 7
    %v2413 = vsub.s32 %v123, %v2412
    %v2414 = vrot.slane %v1822, %v2413
    %v2415 = vlaneseq
    %v2416 = vshrl.u32 %v2415, 7
    %v2417 = vsub.s32 %v1993, %v2416
    %v2418 = vrot.slane %v1825, %v2417
    %v2419 = vsel %vm1998, %v2418, %v2414
    %v2420 = vsel %vm2135, %v2293, %v2284
    %v2421 = vsel %vm2137, %v2302, %v2420
    %v2422 = vsel %vm2139, %v2311, %v2421
    %v2423 = vsel %vm2141, %v2320, %v2422
    %v2424 = vsel %vm2143, %v2329, %v2423
    %v2425 = vsel %vm2145, %v2338, %v2424
    %v2426 = vsel %vm2147, %v2347, %v2425
    %v2427 = vsel %vm2135, %v2365, %v2356
    %v2428 = vsel %vm2137, %v2374, %v2427
    %v2429 = vsel %vm2139, %v2383, %v2428
    %v2430 = vsel %vm2141, %v2392, %v2429
    %v2431 = vsel %vm2143, %v2401, %v2430
    %v2432 = vsel %vm2145, %v2410, %v2431
    %v2433 = vsel %vm2147, %v2419, %v2432
    %v2434 = vsel %vm2164, %v2426, 0
    %v2436 = vsel %vm2164, %v2433, 0
    %2438 = vmatprep.subr.mxu0 0.0
    %2439 = vmatpush1.msra.mxu0 %v202
    %2440 = vmatprep.subr.mxu0 0.0
    %2441 = vmatpush1.msra.mxu0 %v206
    %2442 = vmatprep.subr.mxu0 0.0
    %2443 = vmatpush1.msra.mxu0 0.0
    %2444 = vmatprep.subr.mxu0 0.0
    %2445 = vmatpush1.msra.mxu0 0.0
    %2446 = vmatprep.subr.mxu0 0.0
    %2447 = vmatpush1.msra.mxu0 0.0
    %2448 = vmatprep.subr.mxu0 0.0
    %2449 = vmatpush1.msra.mxu0 0.0
    %2450 = vmatprep.subr.mxu0 0.0
    %2451 = vmatpush1.msra.mxu0 0.0
    %2452 = vmatprep.subr.mxu0 0.0
    %2453 = vmatpush1.msra.mxu0 0.0
    %2454 = vmatprep.subr.mxu0 0.0
    %2455 = vmatpush1.msra.mxu0 0.0
    %2456 = vmatprep.subr.mxu0 0.0
    %2457 = vmatpush1.msra.mxu0 0.0
    %2458 = vmatprep.subr.mxu0 0.0
    %2459 = vmatpush1.msra.mxu0 0.0
    %2460 = vmatprep.subr.mxu0 0.0
    %2461 = vmatpush1.msra.mxu0 0.0
    %2462 = vmatprep.subr.mxu0 0.0
    %2463 = vmatpush1.msra.mxu0 0.0
    %2464 = vmatprep.subr.mxu0 0.0
    %2465 = vmatpush1.msra.mxu0 0.0
    %2466 = vmatprep.subr.mxu0 0.0
    %2467 = vmatpush1.msra.mxu0 0.0
    %2468 = vmatprep.subr.mxu0 0.0
    %2469 = vmatpush1.msra.mxu0 0.0
    %2470 = vmatprep.subr.mxu0 0.0
    %2471 = vmatpush1.msra.mxu0 0.0
    %2472 = vmatprep.subr.mxu0 0.0
    %2473 = vmatpush1.msra.mxu0 0.0
    %2474 = vmatprep.subr.mxu0 0.0
    %2475 = vmatpush1.msra.mxu0 0.0
    %2476 = vmatprep.subr.mxu0 0.0
    %2477 = vmatpush1.msra.mxu0 0.0
    %2478 = vmatprep.subr.mxu0 0.0
    %2479 = vmatpush1.msra.mxu0 0.0
    %2480 = vmatprep.subr.mxu0 0.0
    %2481 = vmatpush1.msra.mxu0 0.0
    %2482 = vmatprep.subr.mxu0 0.0
    %2483 = vmatpush1.msra.mxu0 0.0
    %2484 = vmatprep.subr.mxu0 0.0
    %2485 = vmatpush1.msra.mxu0 0.0
    %2486 = vmatprep.subr.mxu0 0.0
    %2487 = vmatpush1.msra.mxu0 0.0
    %2488 = vmatprep.subr.mxu0 0.0
    %2489 = vmatpush1.msra.mxu0 0.0
    %2490 = vmatprep.subr.mxu0 0.0
    %2491 = vmatpush1.msra.mxu0 0.0
    %2492 = vmatprep.subr.mxu0 0.0
    %2493 = vmatpush1.msra.mxu0 0.0
    %2494 = vmatprep.subr.mxu0 0.0
    %2495 = vmatpush1.msra.mxu0 0.0
    %2496 = vmatprep.subr.mxu0 0.0
    %2497 = vmatpush1.msra.mxu0 0.0
    %2498 = vmatprep.subr.mxu0 0.0
    %2499 = vmatpush1.msra.mxu0 0.0
    %2500 = vmatprep.subr.mxu0 0.0
    %2501 = vmatpush1.msra.mxu0 0.0
    %2502 = vmatprep.mubr.f32.mxu0 0.0
    %2503 = vmatmul.mubr.f32.gmra.mrb[0].mxu0 %v2434
    %v2504 = vpop.f32.mrb[0].mxu0
    %v2505 = vadd.f32 %v2236, %v2504
    %v2506 = vpop.f32.mrb[0].mxu0
    %2507 = vmatprep.mubr.f32.mxu0 0.0
    %2508 = vmatmul.mubr.f32.gmra.mrb[0].mxu0 %v2436
    %v2509 = vpop.f32.mrb[0].mxu0
    %v2510 = vadd.f32 %v2241, %v2509
    %v2511 = vpop.f32.mrb[0].mxu0
    %2512 = vdwg.mxu0
    %vm2513 = vcmp.eq.s32.totalorder %v123, 2
    %v2514 = vsel %vm2513, 1, 0
    %vm2515 = vcmp.eq.s32.totalorder %v2514, 1
    %v2516 = vsel %vm2515, %v1663, 0.0
    %v2517 = vsel %vm2515, %v1664, 0.0
    %v2518 = vsel %vm2515, %v1665, 0.0
    %v2519 = vsel %vm2515, %v1666, 0.0
    %v2520 = vsel %vm2515, %v1667, 0.0
    %v2521 = vsel %vm2515, %v1668, 0.0
    %v2522 = vsel %vm2515, %v1669, 0.0
    %v2523 = vsel %vm2515, %v1670, 0.0
    %v2524 = vsel %vm2515, %v1671, 0.0
    %v2525 = vsel %vm2515, %v1672, 0.0
    %v2526 = vsel %vm2515, %v1673, 0.0
    %v2527 = vsel %vm2515, %v1674, 0.0
    %v2528 = vsel %vm2515, %v1675, 0.0
    %v2529 = vsel %vm2515, %v1676, 0.0
    %v2530 = vsel %vm2515, %v1677, 0.0
    %v2531 = vsel %vm2515, %v1678, 0.0
    %v2532 = vsel %vm2515, %v1679, 0.0
    %v2533 = vsel %vm2515, %v1680, 0.0
    %v2534 = vsel %vm2515, %v1681, 0.0
    %v2535 = vsel %vm2515, %v1682, 0.0
    %v2536 = vsel %vm2515, %v1683, 0.0
    %v2537 = vsel %vm2515, %v1684, 0.0
    %v2538 = vsel %vm2515, %v1685, 0.0
    %v2539 = vsel %vm2515, %v1686, 0.0
    %v2540 = vsel %vm2515, %v1687, 0.0
    %v2541 = vsel %vm2515, %v1688, 0.0
    %v2542 = vsel %vm2515, %v1689, 0.0
    %v2543 = vsel %vm2515, %v1690, 0.0
    %v2544 = vsel %vm2515, %v1691, 0.0
    %v2545 = vsel %vm2515, %v1692, 0.0
    %v2546 = vsel %vm2515, %v1693, 0.0
    %v2547 = vsel %vm2515, %v1694, 0.0
    %v2548 = vsel %vm1246, %v2516, 0.0
    %2549 = vadd.xlane.f32.xlu0 %v2548
    %v2550 = vpop.xlane.xlu0 %2549
    %v2551 = vsel %vm1246, %v2517, 0.0
    %2552 = vadd.xlane.f32.xlu0 %v2551
    %v2553 = vpop.xlane.xlu0 %2552
    %v2554 = vsel %vm1246, %v2518, 0.0
    %2555 = vadd.xlane.f32.xlu0 %v2554
    %v2556 = vpop.xlane.xlu0 %2555
    %v2557 = vsel %vm1246, %v2519, 0.0
    %2558 = vadd.xlane.f32.xlu0 %v2557
    %v2559 = vpop.xlane.xlu0 %2558
    %v2560 = vsel %vm1246, %v2520, 0.0
    %2561 = vadd.xlane.f32.xlu0 %v2560
    %v2562 = vpop.xlane.xlu0 %2561
    %v2563 = vsel %vm1246, %v2521, 0.0
    %2564 = vadd.xlane.f32.xlu0 %v2563
    %v2565 = vpop.xlane.xlu0 %2564
    %v2566 = vsel %vm1246, %v2522, 0.0
    %2567 = vadd.xlane.f32.xlu0 %v2566
    %v2568 = vpop.xlane.xlu0 %2567
    %v2569 = vsel %vm1246, %v2523, 0.0
    %2570 = vadd.xlane.f32.xlu0 %v2569
    %v2571 = vpop.xlane.xlu0 %2570
    %v2572 = vsel %vm1246, %v2524, 0.0
    %2573 = vadd.xlane.f32.xlu0 %v2572
    %v2574 = vpop.xlane.xlu0 %2573
    %v2575 = vsel %vm1246, %v2525, 0.0
    %2576 = vadd.xlane.f32.xlu0 %v2575
    %v2577 = vpop.xlane.xlu0 %2576
    %v2578 = vsel %vm1246, %v2526, 0.0
    %2579 = vadd.xlane.f32.xlu0 %v2578
    %v2580 = vpop.xlane.xlu0 %2579
    %v2581 = vsel %vm1246, %v2527, 0.0
    %2582 = vadd.xlane.f32.xlu0 %v2581
    %v2583 = vpop.xlane.xlu0 %2582
    %v2584 = vsel %vm1246, %v2528, 0.0
    %2585 = vadd.xlane.f32.xlu0 %v2584
    %v2586 = vpop.xlane.xlu0 %2585
    %v2587 = vsel %vm1246, %v2529, 0.0
    %2588 = vadd.xlane.f32.xlu0 %v2587
    %v2589 = vpop.xlane.xlu0 %2588
    %v2590 = vsel %vm1246, %v2530, 0.0
    %2591 = vadd.xlane.f32.xlu0 %v2590
    %v2592 = vpop.xlane.xlu0 %2591
    %v2593 = vsel %vm1246, %v2531, 0.0
    %2594 = vadd.xlane.f32.xlu0 %v2593
    %v2595 = vpop.xlane.xlu0 %2594
    %v2596 = vsel %vm1246, %v2532, 0.0
    %2597 = vadd.xlane.f32.xlu0 %v2596
    %v2598 = vpop.xlane.xlu0 %2597
    %v2599 = vsel %vm1246, %v2533, 0.0
    %2600 = vadd.xlane.f32.xlu0 %v2599
    %v2601 = vpop.xlane.xlu0 %2600
    %v2602 = vsel %vm1246, %v2534, 0.0
    %2603 = vadd.xlane.f32.xlu0 %v2602
    %v2604 = vpop.xlane.xlu0 %2603
    %v2605 = vsel %vm1246, %v2535, 0.0
    %2606 = vadd.xlane.f32.xlu0 %v2605
    %v2607 = vpop.xlane.xlu0 %2606
    %v2608 = vsel %vm1246, %v2536, 0.0
    %2609 = vadd.xlane.f32.xlu0 %v2608
    %v2610 = vpop.xlane.xlu0 %2609
    %v2611 = vsel %vm1246, %v2537, 0.0
    %2612 = vadd.xlane.f32.xlu0 %v2611
    %v2613 = vpop.xlane.xlu0 %2612
    %v2614 = vsel %vm1246, %v2538, 0.0
    %2615 = vadd.xlane.f32.xlu0 %v2614
    %v2616 = vpop.xlane.xlu0 %2615
    %v2617 = vsel %vm1246, %v2539, 0.0
    %2618 = vadd.xlane.f32.xlu0 %v2617
    %v2619 = vpop.xlane.xlu0 %2618
    %v2620 = vsel %vm1246, %v2540, 0.0
    %2621 = vadd.xlane.f32.xlu0 %v2620
    %v2622 = vpop.xlane.xlu0 %2621
    %v2623 = vsel %vm1246, %v2541, 0.0
    %2624 = vadd.xlane.f32.xlu0 %v2623
    %v2625 = vpop.xlane.xlu0 %2624
    %v2626 = vsel %vm1246, %v2542, 0.0
    %2627 = vadd.xlane.f32.xlu0 %v2626
    %v2628 = vpop.xlane.xlu0 %2627
    %v2629 = vsel %vm1246, %v2543, 0.0
    %2630 = vadd.xlane.f32.xlu0 %v2629
    %v2631 = vpop.xlane.xlu0 %2630
    %v2632 = vsel %vm1246, %v2544, 0.0
    %2633 = vadd.xlane.f32.xlu0 %v2632
    %v2634 = vpop.xlane.xlu0 %2633
    %v2635 = vsel %vm1246, %v2545, 0.0
    %2636 = vadd.xlane.f32.xlu0 %v2635
    %v2637 = vpop.xlane.xlu0 %2636
    %v2638 = vsel %vm1246, %v2546, 0.0
    %2639 = vadd.xlane.f32.xlu0 %v2638
    %v2640 = vpop.xlane.xlu0 %2639
    %v2641 = vsel %vm1246, %v2547, 0.0
    %2642 = vadd.xlane.f32.xlu0 %v2641
    %v2643 = vpop.xlane.xlu0 %2642
    %v2676 = vlaneseq
    %v2677 = vshrl.u32 %v2676, 7
    %v2678 = vsub.s32 %v123, %v2677
    %v2679 = vrot.slane %v2550, %v2678
    %v2680 = vlaneseq
    %v2681 = vshrl.u32 %v2680, 7
    %v2682 = vsub.s32 %v1993, %v2681
    %v2683 = vrot.slane %v2553, %v2682
    %v2684 = vsel %vm1998, %v2683, %v2679
    %v2685 = vlaneseq
    %v2686 = vshrl.u32 %v2685, 7
    %v2687 = vsub.s32 %v123, %v2686
    %v2688 = vrot.slane %v2556, %v2687
    %v2689 = vlaneseq
    %v2690 = vshrl.u32 %v2689, 7
    %v2691 = vsub.s32 %v1993, %v2690
    %v2692 = vrot.slane %v2559, %v2691
    %v2693 = vsel %vm1998, %v2692, %v2688
    %v2694 = vlaneseq
    %v2695 = vshrl.u32 %v2694, 7
    %v2696 = vsub.s32 %v123, %v2695
    %v2697 = vrot.slane %v2562, %v2696
    %v2698 = vlaneseq
    %v2699 = vshrl.u32 %v2698, 7
    %v2700 = vsub.s32 %v1993, %v2699
    %v2701 = vrot.slane %v2565, %v2700
    %v2702 = vsel %vm1998, %v2701, %v2697
    %v2703 = vlaneseq
    %v2704 = vshrl.u32 %v2703, 7
    %v2705 = vsub.s32 %v123, %v2704
    %v2706 = vrot.slane %v2568, %v2705
    %v2707 = vlaneseq
    %v2708 = vshrl.u32 %v2707, 7
    %v2709 = vsub.s32 %v1993, %v2708
    %v2710 = vrot.slane %v2571, %v2709
    %v2711 = vsel %vm1998, %v2710, %v2706
    %v2712 = vlaneseq
    %v2713 = vshrl.u32 %v2712, 7
    %v2714 = vsub.s32 %v123, %v2713
    %v2715 = vrot.slane %v2574, %v2714
    %v2716 = vlaneseq
    %v2717 = vshrl.u32 %v2716, 7
    %v2718 = vsub.s32 %v1993, %v2717
    %v2719 = vrot.slane %v2577, %v2718
    %v2720 = vsel %vm1998, %v2719, %v2715
    %v2721 = vlaneseq
    %v2722 = vshrl.u32 %v2721, 7
    %v2723 = vsub.s32 %v123, %v2722
    %v2724 = vrot.slane %v2580, %v2723
    %v2725 = vlaneseq
    %v2726 = vshrl.u32 %v2725, 7
    %v2727 = vsub.s32 %v1993, %v2726
    %v2728 = vrot.slane %v2583, %v2727
    %v2729 = vsel %vm1998, %v2728, %v2724
    %v2730 = vlaneseq
    %v2731 = vshrl.u32 %v2730, 7
    %v2732 = vsub.s32 %v123, %v2731
    %v2733 = vrot.slane %v2586, %v2732
    %v2734 = vlaneseq
    %v2735 = vshrl.u32 %v2734, 7
    %v2736 = vsub.s32 %v1993, %v2735
    %v2737 = vrot.slane %v2589, %v2736
    %v2738 = vsel %vm1998, %v2737, %v2733
    %v2739 = vlaneseq
    %v2740 = vshrl.u32 %v2739, 7
    %v2741 = vsub.s32 %v123, %v2740
    %v2742 = vrot.slane %v2592, %v2741
    %v2743 = vlaneseq
    %v2744 = vshrl.u32 %v2743, 7
    %v2745 = vsub.s32 %v1993, %v2744
    %v2746 = vrot.slane %v2595, %v2745
    %v2747 = vsel %vm1998, %v2746, %v2742
    %v2748 = vlaneseq
    %v2749 = vshrl.u32 %v2748, 7
    %v2750 = vsub.s32 %v123, %v2749
    %v2751 = vrot.slane %v2598, %v2750
    %v2752 = vlaneseq
    %v2753 = vshrl.u32 %v2752, 7
    %v2754 = vsub.s32 %v1993, %v2753
    %v2755 = vrot.slane %v2601, %v2754
    %v2756 = vsel %vm1998, %v2755, %v2751
    %v2757 = vlaneseq
    %v2758 = vshrl.u32 %v2757, 7
    %v2759 = vsub.s32 %v123, %v2758
    %v2760 = vrot.slane %v2604, %v2759
    %v2761 = vlaneseq
    %v2762 = vshrl.u32 %v2761, 7
    %v2763 = vsub.s32 %v1993, %v2762
    %v2764 = vrot.slane %v2607, %v2763
    %v2765 = vsel %vm1998, %v2764, %v2760
    %v2766 = vlaneseq
    %v2767 = vshrl.u32 %v2766, 7
    %v2768 = vsub.s32 %v123, %v2767
    %v2769 = vrot.slane %v2610, %v2768
    %v2770 = vlaneseq
    %v2771 = vshrl.u32 %v2770, 7
    %v2772 = vsub.s32 %v1993, %v2771
    %v2773 = vrot.slane %v2613, %v2772
    %v2774 = vsel %vm1998, %v2773, %v2769
    %v2775 = vlaneseq
    %v2776 = vshrl.u32 %v2775, 7
    %v2777 = vsub.s32 %v123, %v2776
    %v2778 = vrot.slane %v2616, %v2777
    %v2779 = vlaneseq
    %v2780 = vshrl.u32 %v2779, 7
    %v2781 = vsub.s32 %v1993, %v2780
    %v2782 = vrot.slane %v2619, %v2781
    %v2783 = vsel %vm1998, %v2782, %v2778
    %v2784 = vlaneseq
    %v2785 = vshrl.u32 %v2784, 7
    %v2786 = vsub.s32 %v123, %v2785
    %v2787 = vrot.slane %v2622, %v2786
    %v2788 = vlaneseq
    %v2789 = vshrl.u32 %v2788, 7
    %v2790 = vsub.s32 %v1993, %v2789
    %v2791 = vrot.slane %v2625, %v2790
    %v2792 = vsel %vm1998, %v2791, %v2787
    %v2793 = vlaneseq
    %v2794 = vshrl.u32 %v2793, 7
    %v2795 = vsub.s32 %v123, %v2794
    %v2796 = vrot.slane %v2628, %v2795
    %v2797 = vlaneseq
    %v2798 = vshrl.u32 %v2797, 7
    %v2799 = vsub.s32 %v1993, %v2798
    %v2800 = vrot.slane %v2631, %v2799
    %v2801 = vsel %vm1998, %v2800, %v2796
    %v2802 = vlaneseq
    %v2803 = vshrl.u32 %v2802, 7
    %v2804 = vsub.s32 %v123, %v2803
    %v2805 = vrot.slane %v2634, %v2804
    %v2806 = vlaneseq
    %v2807 = vshrl.u32 %v2806, 7
    %v2808 = vsub.s32 %v1993, %v2807
    %v2809 = vrot.slane %v2637, %v2808
    %v2810 = vsel %vm1998, %v2809, %v2805
    %v2811 = vlaneseq
    %v2812 = vshrl.u32 %v2811, 7
    %v2813 = vsub.s32 %v123, %v2812
    %v2814 = vrot.slane %v2640, %v2813
    %v2815 = vlaneseq
    %v2816 = vshrl.u32 %v2815, 7
    %v2817 = vsub.s32 %v1993, %v2816
    %v2818 = vrot.slane %v2643, %v2817
    %v2819 = vsel %vm1998, %v2818, %v2814
    %v2820 = vsel %vm2135, %v2693, %v2684
    %v2821 = vsel %vm2137, %v2702, %v2820
    %v2822 = vsel %vm2139, %v2711, %v2821
    %v2823 = vsel %vm2141, %v2720, %v2822
    %v2824 = vsel %vm2143, %v2729, %v2823
    %v2825 = vsel %vm2145, %v2738, %v2824
    %v2826 = vsel %vm2147, %v2747, %v2825
    %v2827 = vsel %vm2135, %v2765, %v2756
    %v2828 = vsel %vm2137, %v2774, %v2827
    %v2829 = vsel %vm2139, %v2783, %v2828
    %v2830 = vsel %vm2141, %v2792, %v2829
    %v2831 = vsel %vm2143, %v2801, %v2830
    %v2832 = vsel %vm2145, %v2810, %v2831
    %v2833 = vsel %vm2147, %v2819, %v2832
    %2834 = vrot.lane.b32.xlu0 %v202, 64
    %v2835 = vpop.permute.xlu0 %2834
    %2836 = vrot.lane.b32.xlu0 %v206, 64
    %v2837 = vpop.permute.xlu0 %2836
    %v2840 = vsel %vm2164, %v2826, 0
    %v2842 = vsel %vm2164, %v2833, 0
    %2844 = vmatprep.subr.mxu0 0.0
    %2845 = vmatpush1.msra.mxu0 %v2835
    %2846 = vmatprep.subr.mxu0 0.0
    %2847 = vmatpush1.msra.mxu0 %v2837
    %2848 = vmatprep.subr.mxu0 0.0
    %2849 = vmatpush1.msra.mxu0 0.0
    %2850 = vmatprep.subr.mxu0 0.0
    %2851 = vmatpush1.msra.mxu0 0.0
    %2852 = vmatprep.subr.mxu0 0.0
    %2853 = vmatpush1.msra.mxu0 0.0
    %2854 = vmatprep.subr.mxu0 0.0
    %2855 = vmatpush1.msra.mxu0 0.0
    %2856 = vmatprep.subr.mxu0 0.0
    %2857 = vmatpush1.msra.mxu0 0.0
    %2858 = vmatprep.subr.mxu0 0.0
    %2859 = vmatpush1.msra.mxu0 0.0
    %2860 = vmatprep.subr.mxu0 0.0
    %2861 = vmatpush1.msra.mxu0 0.0
    %2862 = vmatprep.subr.mxu0 0.0
    %2863 = vmatpush1.msra.mxu0 0.0
    %2864 = vmatprep.subr.mxu0 0.0
    %2865 = vmatpush1.msra.mxu0 0.0
    %2866 = vmatprep.subr.mxu0 0.0
    %2867 = vmatpush1.msra.mxu0 0.0
    %2868 = vmatprep.subr.mxu0 0.0
    %2869 = vmatpush1.msra.mxu0 0.0
    %2870 = vmatprep.subr.mxu0 0.0
    %2871 = vmatpush1.msra.mxu0 0.0
    %2872 = vmatprep.subr.mxu0 0.0
    %2873 = vmatpush1.msra.mxu0 0.0
    %2874 = vmatprep.subr.mxu0 0.0
    %2875 = vmatpush1.msra.mxu0 0.0
    %2876 = vmatprep.subr.mxu0 0.0
    %2877 = vmatpush1.msra.mxu0 0.0
    %2878 = vmatprep.subr.mxu0 0.0
    %2879 = vmatpush1.msra.mxu0 0.0
    %2880 = vmatprep.subr.mxu0 0.0
    %2881 = vmatpush1.msra.mxu0 0.0
    %2882 = vmatprep.subr.mxu0 0.0
    %2883 = vmatpush1.msra.mxu0 0.0
    %2884 = vmatprep.subr.mxu0 0.0
    %2885 = vmatpush1.msra.mxu0 0.0
    %2886 = vmatprep.subr.mxu0 0.0
    %2887 = vmatpush1.msra.mxu0 0.0
    %2888 = vmatprep.subr.mxu0 0.0
    %2889 = vmatpush1.msra.mxu0 0.0
    %2890 = vmatprep.subr.mxu0 0.0
    %2891 = vmatpush1.msra.mxu0 0.0
    %2892 = vmatprep.subr.mxu0 0.0
    %2893 = vmatpush1.msra.mxu0 0.0
    %2894 = vmatprep.subr.mxu0 0.0
    %2895 = vmatpush1.msra.mxu0 0.0
    %2896 = vmatprep.subr.mxu0 0.0
    %2897 = vmatpush1.msra.mxu0 0.0
    %2898 = vmatprep.subr.mxu0 0.0
    %2899 = vmatpush1.msra.mxu0 0.0
    %2900 = vmatprep.subr.mxu0 0.0
    %2901 = vmatpush1.msra.mxu0 0.0
    %2902 = vmatprep.subr.mxu0 0.0
    %2903 = vmatpush1.msra.mxu0 0.0
    %2904 = vmatprep.subr.mxu0 0.0
    %2905 = vmatpush1.msra.mxu0 0.0
    %2906 = vmatprep.subr.mxu0 0.0
    %2907 = vmatpush1.msra.mxu0 0.0
    %2908 = vmatprep.mubr.f32.mxu0 0.0
    %2909 = vmatmul.mubr.f32.gmra.mrb[0].mxu0 %v2840
    %v2910 = vpop.f32.mrb[0].mxu0
    %v2911 = vadd.f32 0.0, %v2910
    %v2912 = vpop.f32.mrb[0].mxu0
    %2913 = vmatprep.mubr.f32.mxu0 0.0
    %2914 = vmatmul.mubr.f32.gmra.mrb[0].mxu0 %v2842
    %v2915 = vpop.f32.mrb[0].mxu0
    %v2916 = vadd.f32 0.0, %v2915
    %v2917 = vpop.f32.mrb[0].mxu0
    %2918 = vdwg.mxu0
    %v2919 = vadd.f32 %v2505, %v2911
    %v2920 = vadd.f32 %v2510, %v2916
    %vm2921 = vcmp.eq.s32.totalorder %v123, 3
    %v2922 = vsel %vm2921, 1, 0
    %vm2923 = vcmp.eq.s32.totalorder %v2922, 1
    %v2924 = vsel %vm2923, %v1663, 0.0
    %v2925 = vsel %vm2923, %v1664, 0.0
    %v2926 = vsel %vm2923, %v1665, 0.0
    %v2927 = vsel %vm2923, %v1666, 0.0
    %v2928 = vsel %vm2923, %v1667, 0.0
    %v2929 = vsel %vm2923, %v1668, 0.0
    %v2930 = vsel %vm2923, %v1669, 0.0
    %v2931 = vsel %vm2923, %v1670, 0.0
    %v2932 = vsel %vm2923, %v1671, 0.0
    %v2933 = vsel %vm2923, %v1672, 0.0
    %v2934 = vsel %vm2923, %v1673, 0.0
    %v2935 = vsel %vm2923, %v1674, 0.0
    %v2936 = vsel %vm2923, %v1675, 0.0
    %v2937 = vsel %vm2923, %v1676, 0.0
    %v2938 = vsel %vm2923, %v1677, 0.0
    %v2939 = vsel %vm2923, %v1678, 0.0
    %v2940 = vsel %vm2923, %v1679, 0.0
    %v2941 = vsel %vm2923, %v1680, 0.0
    %v2942 = vsel %vm2923, %v1681, 0.0
    %v2943 = vsel %vm2923, %v1682, 0.0
    %v2944 = vsel %vm2923, %v1683, 0.0
    %v2945 = vsel %vm2923, %v1684, 0.0
    %v2946 = vsel %vm2923, %v1685, 0.0
    %v2947 = vsel %vm2923, %v1686, 0.0
    %v2948 = vsel %vm2923, %v1687, 0.0
    %v2949 = vsel %vm2923, %v1688, 0.0
    %v2950 = vsel %vm2923, %v1689, 0.0
    %v2951 = vsel %vm2923, %v1690, 0.0
    %v2952 = vsel %vm2923, %v1691, 0.0
    %v2953 = vsel %vm2923, %v1692, 0.0
    %v2954 = vsel %vm2923, %v1693, 0.0
    %v2955 = vsel %vm2923, %v1694, 0.0
    %v2956 = vsel %vm1246, %v2924, 0.0
    %2957 = vadd.xlane.f32.xlu0 %v2956
    %v2958 = vpop.xlane.xlu0 %2957
    %v2959 = vsel %vm1246, %v2925, 0.0
    %2960 = vadd.xlane.f32.xlu0 %v2959
    %v2961 = vpop.xlane.xlu0 %2960
    %v2962 = vsel %vm1246, %v2926, 0.0
    %2963 = vadd.xlane.f32.xlu0 %v2962
    %v2964 = vpop.xlane.xlu0 %2963
    %v2965 = vsel %vm1246, %v2927, 0.0
    %2966 = vadd.xlane.f32.xlu0 %v2965
    %v2967 = vpop.xlane.xlu0 %2966
    %v2968 = vsel %vm1246, %v2928, 0.0
    %2969 = vadd.xlane.f32.xlu0 %v2968
    %v2970 = vpop.xlane.xlu0 %2969
    %v2971 = vsel %vm1246, %v2929, 0.0
    %2972 = vadd.xlane.f32.xlu0 %v2971
    %v2973 = vpop.xlane.xlu0 %2972
    %v2974 = vsel %vm1246, %v2930, 0.0
    %2975 = vadd.xlane.f32.xlu0 %v2974
    %v2976 = vpop.xlane.xlu0 %2975
    %v2977 = vsel %vm1246, %v2931, 0.0
    %2978 = vadd.xlane.f32.xlu0 %v2977
    %v2979 = vpop.xlane.xlu0 %2978
    %v2980 = vsel %vm1246, %v2932, 0.0
    %2981 = vadd.xlane.f32.xlu0 %v2980
    %v2982 = vpop.xlane.xlu0 %2981
    %v2983 = vsel %vm1246, %v2933, 0.0
    %2984 = vadd.xlane.f32.xlu0 %v2983
    %v2985 = vpop.xlane.xlu0 %2984
    %v2986 = vsel %vm1246, %v2934, 0.0
    %2987 = vadd.xlane.f32.xlu0 %v2986
    %v2988 = vpop.xlane.xlu0 %2987
    %v2989 = vsel %vm1246, %v2935, 0.0
    %2990 = vadd.xlane.f32.xlu0 %v2989
    %v2991 = vpop.xlane.xlu0 %2990
    %v2992 = vsel %vm1246, %v2936, 0.0
    %2993 = vadd.xlane.f32.xlu0 %v2992
    %v2994 = vpop.xlane.xlu0 %2993
    %v2995 = vsel %vm1246, %v2937, 0.0
    %2996 = vadd.xlane.f32.xlu0 %v2995
    %v2997 = vpop.xlane.xlu0 %2996
    %v2998 = vsel %vm1246, %v2938, 0.0
    %2999 = vadd.xlane.f32.xlu0 %v2998
    %v3000 = vpop.xlane.xlu0 %2999
    %v3001 = vsel %vm1246, %v2939, 0.0
    %3002 = vadd.xlane.f32.xlu0 %v3001
    %v3003 = vpop.xlane.xlu0 %3002
    %v3004 = vsel %vm1246, %v2940, 0.0
    %3005 = vadd.xlane.f32.xlu0 %v3004
    %v3006 = vpop.xlane.xlu0 %3005
    %v3007 = vsel %vm1246, %v2941, 0.0
    %3008 = vadd.xlane.f32.xlu0 %v3007
    %v3009 = vpop.xlane.xlu0 %3008
    %v3010 = vsel %vm1246, %v2942, 0.0
    %3011 = vadd.xlane.f32.xlu0 %v3010
    %v3012 = vpop.xlane.xlu0 %3011
    %v3013 = vsel %vm1246, %v2943, 0.0
    %3014 = vadd.xlane.f32.xlu0 %v3013
    %v3015 = vpop.xlane.xlu0 %3014
    %v3016 = vsel %vm1246, %v2944, 0.0
    %3017 = vadd.xlane.f32.xlu0 %v3016
    %v3018 = vpop.xlane.xlu0 %3017
    %v3019 = vsel %vm1246, %v2945, 0.0
    %3020 = vadd.xlane.f32.xlu0 %v3019
    %v3021 = vpop.xlane.xlu0 %3020
    %v3022 = vsel %vm1246, %v2946, 0.0
    %3023 = vadd.xlane.f32.xlu0 %v3022
    %v3024 = vpop.xlane.xlu0 %3023
    %v3025 = vsel %vm1246, %v2947, 0.0
    %3026 = vadd.xlane.f32.xlu0 %v3025
    %v3027 = vpop.xlane.xlu0 %3026
    %v3028 = vsel %vm1246, %v2948, 0.0
    %3029 = vadd.xlane.f32.xlu0 %v3028
    %v3030 = vpop.xlane.xlu0 %3029
    %v3031 = vsel %vm1246, %v2949, 0.0
    %3032 = vadd.xlane.f32.xlu0 %v3031
    %v3033 = vpop.xlane.xlu0 %3032
    %v3034 = vsel %vm1246, %v2950, 0.0
    %3035 = vadd.xlane.f32.xlu0 %v3034
    %v3036 = vpop.xlane.xlu0 %3035
    %v3037 = vsel %vm1246, %v2951, 0.0
    %3038 = vadd.xlane.f32.xlu0 %v3037
    %v3039 = vpop.xlane.xlu0 %3038
    %v3040 = vsel %vm1246, %v2952, 0.0
    %3041 = vadd.xlane.f32.xlu0 %v3040
    %v3042 = vpop.xlane.xlu0 %3041
    %v3043 = vsel %vm1246, %v2953, 0.0
    %3044 = vadd.xlane.f32.xlu0 %v3043
    %v3045 = vpop.xlane.xlu0 %3044
    %v3046 = vsel %vm1246, %v2954, 0.0
    %3047 = vadd.xlane.f32.xlu0 %v3046
    %v3048 = vpop.xlane.xlu0 %3047
    %v3049 = vsel %vm1246, %v2955, 0.0
    %3050 = vadd.xlane.f32.xlu0 %v3049
    %v3051 = vpop.xlane.xlu0 %3050
    %v3084 = vlaneseq
    %v3085 = vshrl.u32 %v3084, 7
    %v3086 = vsub.s32 %v123, %v3085
    %v3087 = vrot.slane %v2958, %v3086
    %v3088 = vlaneseq
    %v3089 = vshrl.u32 %v3088, 7
    %v3090 = vsub.s32 %v1993, %v3089
    %v3091 = vrot.slane %v2961, %v3090
    %v3092 = vsel %vm1998, %v3091, %v3087
    %v3093 = vlaneseq
    %v3094 = vshrl.u32 %v3093, 7
    %v3095 = vsub.s32 %v123, %v3094
    %v3096 = vrot.slane %v2964, %v3095
    %v3097 = vlaneseq
    %v3098 = vshrl.u32 %v3097, 7
    %v3099 = vsub.s32 %v1993, %v3098
    %v3100 = vrot.slane %v2967, %v3099
    %v3101 = vsel %vm1998, %v3100, %v3096
    %v3102 = vlaneseq
    %v3103 = vshrl.u32 %v3102, 7
    %v3104 = vsub.s32 %v123, %v3103
    %v3105 = vrot.slane %v2970, %v3104
    %v3106 = vlaneseq
    %v3107 = vshrl.u32 %v3106, 7
    %v3108 = vsub.s32 %v1993, %v3107
    %v3109 = vrot.slane %v2973, %v3108
    %v3110 = vsel %vm1998, %v3109, %v3105
    %v3111 = vlaneseq
    %v3112 = vshrl.u32 %v3111, 7
    %v3113 = vsub.s32 %v123, %v3112
    %v3114 = vrot.slane %v2976, %v3113
    %v3115 = vlaneseq
    %v3116 = vshrl.u32 %v3115, 7
    %v3117 = vsub.s32 %v1993, %v3116
    %v3118 = vrot.slane %v2979, %v3117
    %v3119 = vsel %vm1998, %v3118, %v3114
    %v3120 = vlaneseq
    %v3121 = vshrl.u32 %v3120, 7
    %v3122 = vsub.s32 %v123, %v3121
    %v3123 = vrot.slane %v2982, %v3122
    %v3124 = vlaneseq
    %v3125 = vshrl.u32 %v3124, 7
    %v3126 = vsub.s32 %v1993, %v3125
    %v3127 = vrot.slane %v2985, %v3126
    %v3128 = vsel %vm1998, %v3127, %v3123
    %v3129 = vlaneseq
    %v3130 = vshrl.u32 %v3129, 7
    %v3131 = vsub.s32 %v123, %v3130
    %v3132 = vrot.slane %v2988, %v3131
    %v3133 = vlaneseq
    %v3134 = vshrl.u32 %v3133, 7
    %v3135 = vsub.s32 %v1993, %v3134
    %v3136 = vrot.slane %v2991, %v3135
    %v3137 = vsel %vm1998, %v3136, %v3132
    %v3138 = vlaneseq
    %v3139 = vshrl.u32 %v3138, 7
    %v3140 = vsub.s32 %v123, %v3139
    %v3141 = vrot.slane %v2994, %v3140
    %v3142 = vlaneseq
    %v3143 = vshrl.u32 %v3142, 7
    %v3144 = vsub.s32 %v1993, %v3143
    %v3145 = vrot.slane %v2997, %v3144
    %v3146 = vsel %vm1998, %v3145, %v3141
    %v3147 = vlaneseq
    %v3148 = vshrl.u32 %v3147, 7
    %v3149 = vsub.s32 %v123, %v3148
    %v3150 = vrot.slane %v3000, %v3149
    %v3151 = vlaneseq
    %v3152 = vshrl.u32 %v3151, 7
    %v3153 = vsub.s32 %v1993, %v3152
    %v3154 = vrot.slane %v3003, %v3153
    %v3155 = vsel %vm1998, %v3154, %v3150
    %v3156 = vlaneseq
    %v3157 = vshrl.u32 %v3156, 7
    %v3158 = vsub.s32 %v123, %v3157
    %v3159 = vrot.slane %v3006, %v3158
    %v3160 = vlaneseq
    %v3161 = vshrl.u32 %v3160, 7
    %v3162 = vsub.s32 %v1993, %v3161
    %v3163 = vrot.slane %v3009, %v3162
    %v3164 = vsel %vm1998, %v3163, %v3159
    %v3165 = vlaneseq
    %v3166 = vshrl.u32 %v3165, 7
    %v3167 = vsub.s32 %v123, %v3166
    %v3168 = vrot.slane %v3012, %v3167
    %v3169 = vlaneseq
    %v3170 = vshrl.u32 %v3169, 7
    %v3171 = vsub.s32 %v1993, %v3170
    %v3172 = vrot.slane %v3015, %v3171
    %v3173 = vsel %vm1998, %v3172, %v3168
    %v3174 = vlaneseq
    %v3175 = vshrl.u32 %v3174, 7
    %v3176 = vsub.s32 %v123, %v3175
    %v3177 = vrot.slane %v3018, %v3176
    %v3178 = vlaneseq
    %v3179 = vshrl.u32 %v3178, 7
    %v3180 = vsub.s32 %v1993, %v3179
    %v3181 = vrot.slane %v3021, %v3180
    %v3182 = vsel %vm1998, %v3181, %v3177
    %v3183 = vlaneseq
    %v3184 = vshrl.u32 %v3183, 7
    %v3185 = vsub.s32 %v123, %v3184
    %v3186 = vrot.slane %v3024, %v3185
    %v3187 = vlaneseq
    %v3188 = vshrl.u32 %v3187, 7
    %v3189 = vsub.s32 %v1993, %v3188
    %v3190 = vrot.slane %v3027, %v3189
    %v3191 = vsel %vm1998, %v3190, %v3186
    %v3192 = vlaneseq
    %v3193 = vshrl.u32 %v3192, 7
    %v3194 = vsub.s32 %v123, %v3193
    %v3195 = vrot.slane %v3030, %v3194
    %v3196 = vlaneseq
    %v3197 = vshrl.u32 %v3196, 7
    %v3198 = vsub.s32 %v1993, %v3197
    %v3199 = vrot.slane %v3033, %v3198
    %v3200 = vsel %vm1998, %v3199, %v3195
    %v3201 = vlaneseq
    %v3202 = vshrl.u32 %v3201, 7
    %v3203 = vsub.s32 %v123, %v3202
    %v3204 = vrot.slane %v3036, %v3203
    %v3205 = vlaneseq
    %v3206 = vshrl.u32 %v3205, 7
    %v3207 = vsub.s32 %v1993, %v3206
    %v3208 = vrot.slane %v3039, %v3207
    %v3209 = vsel %vm1998, %v3208, %v3204
    %v3210 = vlaneseq
    %v3211 = vshrl.u32 %v3210, 7
    %v3212 = vsub.s32 %v123, %v3211
    %v3213 = vrot.slane %v3042, %v3212
    %v3214 = vlaneseq
    %v3215 = vshrl.u32 %v3214, 7
    %v3216 = vsub.s32 %v1993, %v3215
    %v3217 = vrot.slane %v3045, %v3216
    %v3218 = vsel %vm1998, %v3217, %v3213
    %v3219 = vlaneseq
    %v3220 = vshrl.u32 %v3219, 7
    %v3221 = vsub.s32 %v123, %v3220
    %v3222 = vrot.slane %v3048, %v3221
    %v3223 = vlaneseq
    %v3224 = vshrl.u32 %v3223, 7
    %v3225 = vsub.s32 %v1993, %v3224
    %v3226 = vrot.slane %v3051, %v3225
    %v3227 = vsel %vm1998, %v3226, %v3222
    %v3228 = vsel %vm2135, %v3101, %v3092
    %v3229 = vsel %vm2137, %v3110, %v3228
    %v3230 = vsel %vm2139, %v3119, %v3229
    %v3231 = vsel %vm2141, %v3128, %v3230
    %v3232 = vsel %vm2143, %v3137, %v3231
    %v3233 = vsel %vm2145, %v3146, %v3232
    %v3234 = vsel %vm2147, %v3155, %v3233
    %v3235 = vsel %vm2135, %v3173, %v3164
    %v3236 = vsel %vm2137, %v3182, %v3235
    %v3237 = vsel %vm2139, %v3191, %v3236
    %v3238 = vsel %vm2141, %v3200, %v3237
    %v3239 = vsel %vm2143, %v3209, %v3238
    %v3240 = vsel %vm2145, %v3218, %v3239
    %v3241 = vsel %vm2147, %v3227, %v3240
    %3242 = vrot.lane.b32.xlu0 %v202, 32
    %v3243 = vpop.permute.xlu0 %3242
    %3244 = vrot.lane.b32.xlu0 %v206, 32
    %v3245 = vpop.permute.xlu0 %3244
    %v3248 = vsel %vm2164, %v3234, 0
    %v3250 = vsel %vm2164, %v3241, 0
    %3252 = vmatprep.subr.mxu0 0.0
    %3253 = vmatpush1.msra.mxu0 %v3243
    %3254 = vmatprep.subr.mxu0 0.0
    %3255 = vmatpush1.msra.mxu0 %v3245
    %3256 = vmatprep.subr.mxu0 0.0
    %3257 = vmatpush1.msra.mxu0 0.0
    %3258 = vmatprep.subr.mxu0 0.0
    %3259 = vmatpush1.msra.mxu0 0.0
    %3260 = vmatprep.subr.mxu0 0.0
    %3261 = vmatpush1.msra.mxu0 0.0
    %3262 = vmatprep.subr.mxu0 0.0
    %3263 = vmatpush1.msra.mxu0 0.0
    %3264 = vmatprep.subr.mxu0 0.0
    %3265 = vmatpush1.msra.mxu0 0.0
    %3266 = vmatprep.subr.mxu0 0.0
    %3267 = vmatpush1.msra.mxu0 0.0
    %3268 = vmatprep.subr.mxu0 0.0
    %3269 = vmatpush1.msra.mxu0 0.0
    %3270 = vmatprep.subr.mxu0 0.0
    %3271 = vmatpush1.msra.mxu0 0.0
    %3272 = vmatprep.subr.mxu0 0.0
    %3273 = vmatpush1.msra.mxu0 0.0
    %3274 = vmatprep.subr.mxu0 0.0
    %3275 = vmatpush1.msra.mxu0 0.0
    %3276 = vmatprep.subr.mxu0 0.0
    %3277 = vmatpush1.msra.mxu0 0.0
    %3278 = vmatprep.subr.mxu0 0.0
    %3279 = vmatpush1.msra.mxu0 0.0
    %3280 = vmatprep.subr.mxu0 0.0
    %3281 = vmatpush1.msra.mxu0 0.0
    %3282 = vmatprep.subr.mxu0 0.0
    %3283 = vmatpush1.msra.mxu0 0.0
    %3284 = vmatprep.subr.mxu0 0.0
    %3285 = vmatpush1.msra.mxu0 0.0
    %3286 = vmatprep.subr.mxu0 0.0
    %3287 = vmatpush1.msra.mxu0 0.0
    %3288 = vmatprep.subr.mxu0 0.0
    %3289 = vmatpush1.msra.mxu0 0.0
    %3290 = vmatprep.subr.mxu0 0.0
    %3291 = vmatpush1.msra.mxu0 0.0
    %3292 = vmatprep.subr.mxu0 0.0
    %3293 = vmatpush1.msra.mxu0 0.0
    %3294 = vmatprep.subr.mxu0 0.0
    %3295 = vmatpush1.msra.mxu0 0.0
    %3296 = vmatprep.subr.mxu0 0.0
    %3297 = vmatpush1.msra.mxu0 0.0
    %3298 = vmatprep.subr.mxu0 0.0
    %3299 = vmatpush1.msra.mxu0 0.0
    %3300 = vmatprep.subr.mxu0 0.0
    %3301 = vmatpush1.msra.mxu0 0.0
    %3302 = vmatprep.subr.mxu0 0.0
    %3303 = vmatpush1.msra.mxu0 0.0
    %3304 = vmatprep.subr.mxu0 0.0
    %3305 = vmatpush1.msra.mxu0 0.0
    %3306 = vmatprep.subr.mxu0 0.0
    %3307 = vmatpush1.msra.mxu0 0.0
    %3308 = vmatprep.subr.mxu0 0.0
    %3309 = vmatpush1.msra.mxu0 0.0
    %3310 = vmatprep.subr.mxu0 0.0
    %3311 = vmatpush1.msra.mxu0 0.0
    %3312 = vmatprep.subr.mxu0 0.0
    %3313 = vmatpush1.msra.mxu0 0.0
    %3314 = vmatprep.subr.mxu0 0.0
    %3315 = vmatpush1.msra.mxu0 0.0
    %3316 = vmatprep.mubr.f32.mxu0 0.0
    %3317 = vmatmul.mubr.f32.gmra.mrb[0].mxu0 %v3248
    %v3318 = vpop.f32.mrb[0].mxu0
    %v3319 = vadd.f32 0.0, %v3318
    %v3320 = vpop.f32.mrb[0].mxu0
    %3321 = vmatprep.mubr.f32.mxu0 0.0
    %3322 = vmatmul.mubr.f32.gmra.mrb[0].mxu0 %v3250
    %v3323 = vpop.f32.mrb[0].mxu0
    %v3324 = vadd.f32 0.0, %v3323
    %v3325 = vpop.f32.mrb[0].mxu0
    %3326 = vdwg.mxu0
    %v3327 = vadd.f32 %v2919, %v3319
    %v3328 = vadd.f32 %v2920, %v3324
    %v3329 = vmul.f32 %v3327, 0.25
    %v3330 = vmul.f32 %v3328, 0.25
    %v3331 = vld [vmem:[%s7] sm:$0x1]
    %v3333 = vlaneseq
    %v3334 = vshrl.u32 %v3333, 7
    %v3335 = vsub.s32 0, %v3334
    %v3336 = vrot.slane %v3331, %v3335
    %v3338 = vadd.f32 %v3329, %v3336
    %v3339 = vadd.f32 %v3330, %v3336
    %v3340 = vsel %vm163, %v3338, 0.0
    %3341 = vadd.xlane.f32.xlu0 %v3340
    %v3342 = vpop.xlane.xlu0 %3341
    %v3343 = vsel %vm163, %v3339, 0.0
    %3344 = vadd.xlane.f32.xlu0 %v3343
    %v3345 = vpop.xlane.xlu0 %3344
    %v3346 = vrcp.pop 32.0
    %v3347 = vmul.f32 %v3342, %v3346
    %v3348 = vmul.f32 %v3345, %v3346
    %v3349 = vsub.f32 %v3338, %v3347
    %v3350 = vsub.f32 %v3339, %v3348
    %v3351 = vmul.f32 %v3349, %v3349
    %v3352 = vmul.f32 %v3350, %v3350
    %v3353 = vsel %vm163, %v3351, 0.0
    %3354 = vadd.xlane.f32.xlu0 %v3353
    %v3355 = vpop.xlane.xlu0 %3354
    %v3356 = vsel %vm163, %v3352, 0.0
    %3357 = vadd.xlane.f32.xlu0 %v3356
    %v3358 = vpop.xlane.xlu0 %3357
    %v3359 = vmul.f32 %v3355, %v3346
    %v3360 = vmul.f32 %v3358, %v3346
    %v3361 = vadd.f32 %v3359, 1e-05
    %v3362 = vadd.f32 %v3360, 1e-05
    %v3363 = vrsqrt.pop %v3361
    %v3364 = vrsqrt.pop %v3362
    %v3365 = vmul.f32 %v3349, %v3363
    %v3366 = vmul.f32 %v3350, %v3364
    %v3367 = vld [vmem:[%s8] sm:$0x1]
    %v3369 = vlaneseq
    %v3370 = vshrl.u32 %v3369, 7
    %v3371 = vsub.s32 0, %v3370
    %v3372 = vrot.slane %v3367, %v3371
    %v3374 = vmul.f32 %v3365, %v3372
    %v3375 = vmul.f32 %v3366, %v3372
    %v3376 = vld [vmem:[%s9] sm:$0x1]
    %v3378 = vlaneseq
    %v3379 = vshrl.u32 %v3378, 7
    %v3380 = vsub.s32 0, %v3379
    %v3381 = vrot.slane %v3376, %v3380
    %v3383 = vadd.f32 %v3374, %v3381
    %v3384 = vadd.f32 %v3375, %v3381
    %v3385 = vmul.f32 %v3383, 0.5
    %v3386 = vmul.f32 %v3384, 0.5
    %v3387 = vmul.f32 %v3383, 0.70710677
    %v3388 = vmul.f32 %v3384, 0.70710677
    %v3389 = verf.f32.pop %v3387
    %v3390 = verf.f32.pop %v3388
    %v3391 = vadd.f32 %v3389, 1.0
    %v3392 = vadd.f32 %v3390, 1.0
    %v3393 = vmul.f32 %v3385, %v3391
    %v3394 = vmul.f32 %v3386, %v3392
    %v3395 = vpack.c.bf16 %v3394, %v3393
    %v3396 = vld [vmem:[%s10] sm:$0xff]
    %v3397 = vld [vmem:[%s10 + $0x8] sm:$0xff]
    %v3398 = vld [vmem:[%s10 + $0x10] sm:$0xff]
    %v3399 = vld [vmem:[%s10 + $0x18] sm:$0xff]
    %v3400 = vld [vmem:[%s11] sm:$0x3]
    %v3402 = vlaneseq
    %v3403 = vshrl.u32 %v3402, 7
    %v3404 = vsub.s32 0, %v3403
    %v3405 = vrot.slane %v3400, %v3404
    %v3406 = vlaneseq
    %v3407 = vshrl.u32 %v3406, 7
    %v3408 = vsub.s32 1, %v3407
    %v3409 = vrot.slane %v3400, %v3408
    %v3416 = vunpack.c.l.b16 %v3396
    %v3417 = vunpack.c.h.b16 %v3396
    %v3418 = vunpack.c.l.b16 %v3397
    %v3419 = vunpack.c.h.b16 %v3397
    %v3420 = vunpack.c.l.b16 %v3398
    %v3421 = vunpack.c.h.b16 %v3398
    %v3422 = vunpack.c.l.b16 %v3399
    %v3423 = vunpack.c.h.b16 %v3399
    %v3424 = vpack.c.b16 %v3418, %v3416
    %v3425 = vpack.c.b16 %v3419, %v3417
    %v3426 = vpack.c.b16 %v3422, %v3420
    %v3427 = vpack.c.b16 %v3423, %v3421
    %v3433 = vsel %vm163, %v3395, 0
    %3435 = vmatprep.subr.bf16.mxu0 %v3425
    %3436 = vmatpush1.bf16.msra.mxu0 %v3424
    %3437 = vmatprep.subr.bf16.mxu0 %v3427
    %3438 = vmatpush1.bf16.msra.mxu0 %v3426
    %3439 = vmatprep.subr.bf16.mxu0 0
    %3440 = vmatpush1.bf16.msra.mxu0 0
    %3441 = vmatprep.subr.bf16.mxu0 0
    %3442 = vmatpush1.bf16.msra.mxu0 0
    %3443 = vmatprep.subr.bf16.mxu0 0
    %3444 = vmatpush1.bf16.msra.mxu0 0
    %3445 = vmatprep.subr.bf16.mxu0 0
    %3446 = vmatpush1.bf16.msra.mxu0 0
    %3447 = vmatprep.subr.bf16.mxu0 0
    %3448 = vmatpush1.bf16.msra.mxu0 0
    %3449 = vmatprep.subr.bf16.mxu0 0
    %3450 = vmatpush1.bf16.msra.mxu0 0
    %3451 = vmatprep.subr.bf16.mxu0 0
    %3452 = vmatpush1.bf16.msra.mxu0 0
    %3453 = vmatprep.subr.bf16.mxu0 0
    %3454 = vmatpush1.bf16.msra.mxu0 0
    %3455 = vmatprep.subr.bf16.mxu0 0
    %3456 = vmatpush1.bf16.msra.mxu0 0
    %3457 = vmatprep.subr.bf16.mxu0 0
    %3458 = vmatpush1.bf16.msra.mxu0 0
    %3459 = vmatprep.subr.bf16.mxu0 0
    %3460 = vmatpush1.bf16.msra.mxu0 0
    %3461 = vmatprep.subr.bf16.mxu0 0
    %3462 = vmatpush1.bf16.msra.mxu0 0
    %3463 = vmatprep.subr.bf16.mxu0 0
    %3464 = vmatpush1.bf16.msra.mxu0 0
    %3465 = vmatprep.subr.bf16.mxu0 0
    %3466 = vmatpush1.bf16.msra.mxu0 0
    %3467 = vmatprep.mubr.bf16.mxu0 0
    %3468 = vmatmul.mubr.bf16.gmra.mrb[0].mxu0 %v3433
    %v3469 = vpop.f32.mrb[0].mxu0
    %v3470 = vadd.f32 %v3405, %v3469
    %v3471 = vpop.f32.mrb[0].mxu0
    %v3472 = vadd.f32 %v3409, %v3471
    %v3473 = vpop.f32.mrb[0].mxu0
    %v3474 = vadd.f32 %v3405, %v3473
    %v3475 = vpop.f32.mrb[0].mxu0
    %v3476 = vadd.f32 %v3409, %v3475
    %3477 = vdwg.mxu0
    %v3478 = vld [vmem:[%s12] sm:$0xf]
    %v3480 = vsel %vm340, %v3478, 0
    %3482 = vmatprep.subr.bf16.mxu0 0
    %3483 = vmatpush1.bf16.msra.mxu0 %v3480
    %3484 = vmatprep.subr.bf16.mxu0 0
    %3485 = vmatpush1.bf16.msra.mxu0 0
    %3486 = vmatprep.subr.bf16.mxu0 0
    %3487 = vmatpush1.bf16.msra.mxu0 0
    %3488 = vmatprep.subr.bf16.mxu0 0
    %3489 = vmatpush1.bf16.msra.mxu0 0
    %3490 = vmatprep.subr.bf16.mxu0 0
    %3491 = vmatpush1.bf16.msra.mxu0 0
    %3492 = vmatprep.subr.bf16.mxu0 0
    %3493 = vmatpush1.bf16.msra.mxu0 0
    %3494 = vmatprep.subr.bf16.mxu0 0
    %3495 = vmatpush1.bf16.msra.mxu0 0
    %3496 = vmatprep.subr.bf16.mxu0 0
    %3497 = vmatpush1.bf16.msra.mxu0 0
    %3498 = vmatprep.subr.bf16.mxu0 0
    %3499 = vmatpush1.bf16.msra.mxu0 0
    %3500 = vmatprep.subr.bf16.mxu0 0
    %3501 = vmatpush1.bf16.msra.mxu0 0
    %3502 = vmatprep.subr.bf16.mxu0 0
    %3503 = vmatpush1.bf16.msra.mxu0 0
    %3504 = vmatprep.subr.bf16.mxu0 0
    %3505 = vmatpush1.bf16.msra.mxu0 0
    %3506 = vmatprep.subr.bf16.mxu0 0
    %3507 = vmatpush1.bf16.msra.mxu0 0
    %3508 = vmatprep.subr.bf16.mxu0 0
    %3509 = vmatpush1.bf16.msra.mxu0 0
    %3510 = vmatprep.subr.bf16.mxu0 0
    %3511 = vmatpush1.bf16.msra.mxu0 0
    %3512 = vmatprep.subr.bf16.mxu0 0
    %3513 = vmatpush1.bf16.msra.mxu0 0
    %3514 = vmatprep.mubr.bf16.mxu0 0
    %3515 = vmatmul.mubr.bf16.gmra.mrb[0].mxu0 %v293
    %v3516 = vpop.f32.mrb[0].mxu0
    %v3517 = vadd.f32 0.0, %v3516
    %v3518 = vpop.f32.mrb[0].mxu0
    %v3519 = vpop.f32.mrb[0].mxu0
    %v3520 = vadd.f32 0.0, %v3519
    %v3521 = vpop.f32.mrb[0].mxu0
    %3522 = vmatprep.mubr.bf16.mxu0 0
    %3523 = vmatmul.mubr.bf16.gmra.mrb[0].mxu0 %v296
    %v3524 = vpop.f32.mrb[0].mxu0
    %v3525 = vadd.f32 0.0, %v3524
    %v3526 = vpop.f32.mrb[0].mxu0
    %v3527 = vpop.f32.mrb[0].mxu0
    %v3528 = vadd.f32 0.0, %v3527
    %v3529 = vpop.f32.mrb[0].mxu0
    %3530 = vmatprep.mubr.bf16.mxu0 0
    %3531 = vmatmul.mubr.bf16.gmra.mrb[0].mxu0 %v299
    %v3532 = vpop.f32.mrb[0].mxu0
    %v3533 = vadd.f32 0.0, %v3532
    %v3534 = vpop.f32.mrb[0].mxu0
    %v3535 = vpop.f32.mrb[0].mxu0
    %v3536 = vadd.f32 0.0, %v3535
    %v3537 = vpop.f32.mrb[0].mxu0
    %3538 = vmatprep.mubr.bf16.mxu0 0
    %3539 = vmatmul.mubr.bf16.gmra.mrb[0].mxu0 %v302
    %v3540 = vpop.f32.mrb[0].mxu0
    %v3541 = vadd.f32 0.0, %v3540
    %v3542 = vpop.f32.mrb[0].mxu0
    %v3543 = vpop.f32.mrb[0].mxu0
    %v3544 = vadd.f32 0.0, %v3543
    %v3545 = vpop.f32.mrb[0].mxu0
    %3546 = vmatprep.mubr.bf16.mxu0 0
    %3547 = vmatmul.mubr.bf16.gmra.mrb[0].mxu0 %v305
    %v3548 = vpop.f32.mrb[0].mxu0
    %v3549 = vadd.f32 0.0, %v3548
    %v3550 = vpop.f32.mrb[0].mxu0
    %v3551 = vpop.f32.mrb[0].mxu0
    %v3552 = vadd.f32 0.0, %v3551
    %v3553 = vpop.f32.mrb[0].mxu0
    %3554 = vmatprep.mubr.bf16.mxu0 0
    %3555 = vmatmul.mubr.bf16.gmra.mrb[0].mxu0 %v308
    %v3556 = vpop.f32.mrb[0].mxu0
    %v3557 = vadd.f32 0.0, %v3556
    %v3558 = vpop.f32.mrb[0].mxu0
    %v3559 = vpop.f32.mrb[0].mxu0
    %v3560 = vadd.f32 0.0, %v3559
    %v3561 = vpop.f32.mrb[0].mxu0
    %3562 = vmatprep.mubr.bf16.mxu0 0
    %3563 = vmatmul.mubr.bf16.gmra.mrb[0].mxu0 %v311
    %v3564 = vpop.f32.mrb[0].mxu0
    %v3565 = vadd.f32 0.0, %v3564
    %v3566 = vpop.f32.mrb[0].mxu0
    %v3567 = vpop.f32.mrb[0].mxu0
    %v3568 = vadd.f32 0.0, %v3567
    %v3569 = vpop.f32.mrb[0].mxu0
    %3570 = vmatprep.mubr.bf16.mxu0 0
    %3571 = vmatmul.mubr.bf16.gmra.mrb[0].mxu0 %v314
    %v3572 = vpop.f32.mrb[0].mxu0
    %v3573 = vadd.f32 0.0, %v3572
    %v3574 = vpop.f32.mrb[0].mxu0
    %v3575 = vpop.f32.mrb[0].mxu0
    %v3576 = vadd.f32 0.0, %v3575
    %v3577 = vpop.f32.mrb[0].mxu0
    %3578 = vmatprep.mubr.bf16.mxu0 0
    %3579 = vmatmul.mubr.bf16.gmra.mrb[0].mxu0 %v317
    %v3580 = vpop.f32.mrb[0].mxu0
    %v3581 = vadd.f32 0.0, %v3580
    %v3582 = vpop.f32.mrb[0].mxu0
    %v3583 = vpop.f32.mrb[0].mxu0
    %v3584 = vadd.f32 0.0, %v3583
    %v3585 = vpop.f32.mrb[0].mxu0
    %3586 = vmatprep.mubr.bf16.mxu0 0
    %3587 = vmatmul.mubr.bf16.gmra.mrb[0].mxu0 %v320
    %v3588 = vpop.f32.mrb[0].mxu0
    %v3589 = vadd.f32 0.0, %v3588
    %v3590 = vpop.f32.mrb[0].mxu0
    %v3591 = vpop.f32.mrb[0].mxu0
    %v3592 = vadd.f32 0.0, %v3591
    %v3593 = vpop.f32.mrb[0].mxu0
    %3594 = vmatprep.mubr.bf16.mxu0 0
    %3595 = vmatmul.mubr.bf16.gmra.mrb[0].mxu0 %v323
    %v3596 = vpop.f32.mrb[0].mxu0
    %v3597 = vadd.f32 0.0, %v3596
    %v3598 = vpop.f32.mrb[0].mxu0
    %v3599 = vpop.f32.mrb[0].mxu0
    %v3600 = vadd.f32 0.0, %v3599
    %v3601 = vpop.f32.mrb[0].mxu0
    %3602 = vmatprep.mubr.bf16.mxu0 0
    %3603 = vmatmul.mubr.bf16.gmra.mrb[0].mxu0 %v326
    %v3604 = vpop.f32.mrb[0].mxu0
    %v3605 = vadd.f32 0.0, %v3604
    %v3606 = vpop.f32.mrb[0].mxu0
    %v3607 = vpop.f32.mrb[0].mxu0
    %v3608 = vadd.f32 0.0, %v3607
    %v3609 = vpop.f32.mrb[0].mxu0
    %3610 = vmatprep.mubr.bf16.mxu0 0
    %3611 = vmatmul.mubr.bf16.gmra.mrb[0].mxu0 %v329
    %v3612 = vpop.f32.mrb[0].mxu0
    %v3613 = vadd.f32 0.0, %v3612
    %v3614 = vpop.f32.mrb[0].mxu0
    %v3615 = vpop.f32.mrb[0].mxu0
    %v3616 = vadd.f32 0.0, %v3615
    %v3617 = vpop.f32.mrb[0].mxu0
    %3618 = vmatprep.mubr.bf16.mxu0 0
    %3619 = vmatmul.mubr.bf16.gmra.mrb[0].mxu0 %v332
    %v3620 = vpop.f32.mrb[0].mxu0
    %v3621 = vadd.f32 0.0, %v3620
    %v3622 = vpop.f32.mrb[0].mxu0
    %v3623 = vpop.f32.mrb[0].mxu0
    %v3624 = vadd.f32 0.0, %v3623
    %v3625 = vpop.f32.mrb[0].mxu0
    %3626 = vmatprep.mubr.bf16.mxu0 0
    %3627 = vmatmul.mubr.bf16.gmra.mrb[0].mxu0 %v335
    %v3628 = vpop.f32.mrb[0].mxu0
    %v3629 = vadd.f32 0.0, %v3628
    %v3630 = vpop.f32.mrb[0].mxu0
    %v3631 = vpop.f32.mrb[0].mxu0
    %v3632 = vadd.f32 0.0, %v3631
    %v3633 = vpop.f32.mrb[0].mxu0
    %3634 = vmatprep.mubr.bf16.mxu0 0
    %3635 = vmatmul.mubr.bf16.gmra.mrb[0].mxu0 %v338
    %v3636 = vpop.f32.mrb[0].mxu0
    %v3637 = vadd.f32 0.0, %v3636
    %v3638 = vpop.f32.mrb[0].mxu0
    %v3639 = vpop.f32.mrb[0].mxu0
    %v3640 = vadd.f32 0.0, %v3639
    %v3641 = vpop.f32.mrb[0].mxu0
    %3642 = vdwg.mxu0
    %v3645 = vcombine.high %v3472, %v3472
    %v3647 = vunpack.c.l.s4 1966171168
    %v3648 = vunpack.c.0.s8 %v3647
    %v3649 = vlaneseq
    %v3650 = vshrl.u32 %v3649, 7
    %v3651 = vsub.s32 %v3648, %v3650
    %v3652 = vrot.slane %v3472, %v3651
    %v3654 = vunpack.c.l.s4 1966171168
    %v3655 = vunpack.c.0.s8 %v3654
    %v3656 = vlaneseq
    %v3657 = vshrl.u32 %v3656, 7
    %v3658 = vsub.s32 %v3655, %v3657
    %v3659 = vrot.slane %v3645, %v3658
    %v3660 = vcombine.high %v3652, %v3652
    %v3661 = vcombine.high %v3659, %v3659
    %v3663 = vunpack.c.l.s4 1966171168
    %v3664 = vunpack.c.0.s8 %v3663
    %v3665 = vlaneseq
    %v3666 = vshrl.u32 %v3665, 7
    %v3667 = vsub.s32 %v3664, %v3666
    %v3668 = vrot.slane %v3652, %v3667
    %v3670 = vunpack.c.l.s4 1966171168
    %v3671 = vunpack.c.0.s8 %v3670
    %v3672 = vlaneseq
    %v3673 = vshrl.u32 %v3672, 7
    %v3674 = vsub.s32 %v3671, %v3673
    %v3675 = vrot.slane %v3659, %v3674
    %v3677 = vunpack.c.l.s4 1966171168
    %v3678 = vunpack.c.0.s8 %v3677
    %v3679 = vlaneseq
    %v3680 = vshrl.u32 %v3679, 7
    %v3681 = vsub.s32 %v3678, %v3680
    %v3682 = vrot.slane %v3660, %v3681
    %v3684 = vunpack.c.l.s4 1966171168
    %v3685 = vunpack.c.0.s8 %v3684
    %v3686 = vlaneseq
    %v3687 = vshrl.u32 %v3686, 7
    %v3688 = vsub.s32 %v3685, %v3687
    %v3689 = vrot.slane %v3661, %v3688
    %v3690 = vcombine.high %v3668, %v3668
    %v3691 = vcombine.high %v3675, %v3675
    %v3692 = vcombine.high %v3682, %v3682
    %v3693 = vcombine.high %v3689, %v3689
    %v3694 = vcombine.high %v3476, %v3476
    %v3696 = vunpack.c.l.s4 1966171168
    %v3697 = vunpack.c.0.s8 %v3696
    %v3698 = vlaneseq
    %v3699 = vshrl.u32 %v3698, 7
    %v3700 = vsub.s32 %v3697, %v3699
    %v3701 = vrot.slane %v3476, %v3700
    %v3703 = vunpack.c.l.s4 1966171168
    %v3704 = vunpack.c.0.s8 %v3703
    %v3705 = vlaneseq
    %v3706 = vshrl.u32 %v3705, 7
    %v3707 = vsub.s32 %v3704, %v3706
    %v3708 = vrot.slane %v3694, %v3707
    %v3709 = vcombine.high %v3701, %v3701
    %v3710 = vcombine.high %v3708, %v3708
    %v3712 = vunpack.c.l.s4 1966171168
    %v3713 = vunpack.c.0.s8 %v3712
    %v3714 = vlaneseq
    %v3715 = vshrl.u32 %v3714, 7
    %v3716 = vsub.s32 %v3713, %v3715
    %v3717 = vrot.slane %v3701, %v3716
    %v3719 = vunpack.c.l.s4 1966171168
    %v3720 = vunpack.c.0.s8 %v3719
    %v3721 = vlaneseq
    %v3722 = vshrl.u32 %v3721, 7
    %v3723 = vsub.s32 %v3720, %v3722
    %v3724 = vrot.slane %v3708, %v3723
    %v3726 = vunpack.c.l.s4 1966171168
    %v3727 = vunpack.c.0.s8 %v3726
    %v3728 = vlaneseq
    %v3729 = vshrl.u32 %v3728, 7
    %v3730 = vsub.s32 %v3727, %v3729
    %v3731 = vrot.slane %v3709, %v3730
    %v3733 = vunpack.c.l.s4 1966171168
    %v3734 = vunpack.c.0.s8 %v3733
    %v3735 = vlaneseq
    %v3736 = vshrl.u32 %v3735, 7
    %v3737 = vsub.s32 %v3734, %v3736
    %v3738 = vrot.slane %v3710, %v3737
    %v3739 = vcombine.high %v3717, %v3717
    %v3740 = vcombine.high %v3724, %v3724
    %v3741 = vcombine.high %v3731, %v3731
    %v3742 = vcombine.high %v3738, %v3738
    %v3743 = vlaneseq
    %v3744 = vshrl.u32 %v3743, 7
    %v3745 = vsub.s32 0, %v3744
    %v3746 = vrot.slane %v3668, %v3745
    %v3747 = vlaneseq
    %v3748 = vshrl.u32 %v3747, 7
    %v3749 = vsub.s32 0, %v3748
    %v3750 = vrot.slane %v3682, %v3749
    %v3751 = vlaneseq
    %v3752 = vshrl.u32 %v3751, 7
    %v3753 = vsub.s32 0, %v3752
    %v3754 = vrot.slane %v3690, %v3753
    %v3755 = vlaneseq
    %v3756 = vshrl.u32 %v3755, 7
    %v3757 = vsub.s32 0, %v3756
    %v3758 = vrot.slane %v3692, %v3757
    %v3759 = vlaneseq
    %v3760 = vshrl.u32 %v3759, 7
    %v3761 = vsub.s32 0, %v3760
    %v3762 = vrot.slane %v3675, %v3761
    %v3763 = vlaneseq
    %v3764 = vshrl.u32 %v3763, 7
    %v3765 = vsub.s32 0, %v3764
    %v3766 = vrot.slane %v3689, %v3765
    %v3767 = vlaneseq
    %v3768 = vshrl.u32 %v3767, 7
    %v3769 = vsub.s32 0, %v3768
    %v3770 = vrot.slane %v3691, %v3769
    %v3771 = vlaneseq
    %v3772 = vshrl.u32 %v3771, 7
    %v3773 = vsub.s32 0, %v3772
    %v3774 = vrot.slane %v3693, %v3773
    %v3775 = vlaneseq
    %v3776 = vshrl.u32 %v3775, 7
    %v3777 = vsub.s32 0, %v3776
    %v3778 = vrot.slane %v3717, %v3777
    %v3779 = vlaneseq
    %v3780 = vshrl.u32 %v3779, 7
    %v3781 = vsub.s32 0, %v3780
    %v3782 = vrot.slane %v3731, %v3781
    %v3783 = vlaneseq
    %v3784 = vshrl.u32 %v3783, 7
    %v3785 = vsub.s32 0, %v3784
    %v3786 = vrot.slane %v3739, %v3785
    %v3787 = vlaneseq
    %v3788 = vshrl.u32 %v3787, 7
    %v3789 = vsub.s32 0, %v3788
    %v3790 = vrot.slane %v3741, %v3789
    %v3791 = vlaneseq
    %v3792 = vshrl.u32 %v3791, 7
    %v3793 = vsub.s32 0, %v3792
    %v3794 = vrot.slane %v3724, %v3793
    %v3795 = vlaneseq
    %v3796 = vshrl.u32 %v3795, 7
    %v3797 = vsub.s32 0, %v3796
    %v3798 = vrot.slane %v3738, %v3797
    %v3799 = vlaneseq
    %v3800 = vshrl.u32 %v3799, 7
    %v3801 = vsub.s32 0, %v3800
    %v3802 = vrot.slane %v3740, %v3801
    %v3803 = vlaneseq
    %v3804 = vshrl.u32 %v3803, 7
    %v3805 = vsub.s32 0, %v3804
    %v3806 = vrot.slane %v3742, %v3805
    %v3823 = vadd.f32 %v3746, %v3470
    %v3824 = vadd.f32 %v3746, %v3474
    %v3825 = vadd.f32 %v3750, %v3470
    %v3826 = vadd.f32 %v3750, %v3474
    %v3827 = vadd.f32 %v3754, %v3470
    %v3828 = vadd.f32 %v3754, %v3474
    %v3829 = vadd.f32 %v3758, %v3470
    %v3830 = vadd.f32 %v3758, %v3474
    %v3831 = vadd.f32 %v3762, %v3470
    %v3832 = vadd.f32 %v3762, %v3474
    %v3833 = vadd.f32 %v3766, %v3470
    %v3834 = vadd.f32 %v3766, %v3474
    %v3835 = vadd.f32 %v3770, %v3470
    %v3836 = vadd.f32 %v3770, %v3474
    %v3837 = vadd.f32 %v3774, %v3470
    %v3838 = vadd.f32 %v3774, %v3474
    %v3839 = vadd.f32 %v3778, %v3470
    %v3840 = vadd.f32 %v3778, %v3474
    %v3841 = vadd.f32 %v3782, %v3470
    %v3842 = vadd.f32 %v3782, %v3474
    %v3843 = vadd.f32 %v3786, %v3470
    %v3844 = vadd.f32 %v3786, %v3474
    %v3845 = vadd.f32 %v3790, %v3470
    %v3846 = vadd.f32 %v3790, %v3474
    %v3847 = vadd.f32 %v3794, %v3470
    %v3848 = vadd.f32 %v3794, %v3474
    %v3849 = vadd.f32 %v3798, %v3470
    %v3850 = vadd.f32 %v3798, %v3474
    %v3851 = vadd.f32 %v3802, %v3470
    %v3852 = vadd.f32 %v3802, %v3474
    %v3853 = vadd.f32 %v3806, %v3470
    %v3854 = vadd.f32 %v3806, %v3474
    %v3855 = vadd.f32 %v3823, %v3517
    %v3856 = vadd.f32 %v3824, %v3520
    %v3857 = vadd.f32 %v3825, %v3525
    %v3858 = vadd.f32 %v3826, %v3528
    %v3859 = vadd.f32 %v3827, %v3533
    %v3860 = vadd.f32 %v3828, %v3536
    %v3861 = vadd.f32 %v3829, %v3541
    %v3862 = vadd.f32 %v3830, %v3544
    %v3863 = vadd.f32 %v3831, %v3549
    %v3864 = vadd.f32 %v3832, %v3552
    %v3865 = vadd.f32 %v3833, %v3557
    %v3866 = vadd.f32 %v3834, %v3560
    %v3867 = vadd.f32 %v3835, %v3565
    %v3868 = vadd.f32 %v3836, %v3568
    %v3869 = vadd.f32 %v3837, %v3573
    %v3870 = vadd.f32 %v3838, %v3576
    %v3871 = vadd.f32 %v3839, %v3581
    %v3872 = vadd.f32 %v3840, %v3584
    %v3873 = vadd.f32 %v3841, %v3589
    %v3874 = vadd.f32 %v3842, %v3592
    %v3875 = vadd.f32 %v3843, %v3597
    %v3876 = vadd.f32 %v3844, %v3600
    %v3877 = vadd.f32 %v3845, %v3605
    %v3878 = vadd.f32 %v3846, %v3608
    %v3879 = vadd.f32 %v3847, %v3613
    %v3880 = vadd.f32 %v3848, %v3616
    %v3881 = vadd.f32 %v3849, %v3621
    %v3882 = vadd.f32 %v3850, %v3624
    %v3883 = vadd.f32 %v3851, %v3629
    %v3884 = vadd.f32 %v3852, %v3632
    %v3885 = vadd.f32 %v3853, %v3637
    %v3886 = vadd.f32 %v3854, %v3640
    %vm3887 = vcmp.gt.f32.partialorder %v3855, 0.0
    %vm3888 = vcmp.gt.f32.partialorder %v3856, 0.0
    %vm3889 = vcmp.gt.f32.partialorder %v3857, 0.0
    %vm3890 = vcmp.gt.f32.partialorder %v3858, 0.0
    %vm3891 = vcmp.gt.f32.partialorder %v3859, 0.0
    %vm3892 = vcmp.gt.f32.partialorder %v3860, 0.0
    %vm3893 = vcmp.gt.f32.partialorder %v3861, 0.0
    %vm3894 = vcmp.gt.f32.partialorder %v3862, 0.0
    %vm3895 = vcmp.gt.f32.partialorder %v3863, 0.0
    %vm3896 = vcmp.gt.f32.partialorder %v3864, 0.0
    %vm3897 = vcmp.gt.f32.partialorder %v3865, 0.0
    %vm3898 = vcmp.gt.f32.partialorder %v3866, 0.0
    %vm3899 = vcmp.gt.f32.partialorder %v3867, 0.0
    %vm3900 = vcmp.gt.f32.partialorder %v3868, 0.0
    %vm3901 = vcmp.gt.f32.partialorder %v3869, 0.0
    %vm3902 = vcmp.gt.f32.partialorder %v3870, 0.0
    %vm3903 = vcmp.gt.f32.partialorder %v3871, 0.0
    %vm3904 = vcmp.gt.f32.partialorder %v3872, 0.0
    %vm3905 = vcmp.gt.f32.partialorder %v3873, 0.0
    %vm3906 = vcmp.gt.f32.partialorder %v3874, 0.0
    %vm3907 = vcmp.gt.f32.partialorder %v3875, 0.0
    %vm3908 = vcmp.gt.f32.partialorder %v3876, 0.0
    %vm3909 = vcmp.gt.f32.partialorder %v3877, 0.0
    %vm3910 = vcmp.gt.f32.partialorder %v3878, 0.0
    %vm3911 = vcmp.gt.f32.partialorder %v3879, 0.0
    %vm3912 = vcmp.gt.f32.partialorder %v3880, 0.0
    %vm3913 = vcmp.gt.f32.partialorder %v3881, 0.0
    %vm3914 = vcmp.gt.f32.partialorder %v3882, 0.0
    %vm3915 = vcmp.gt.f32.partialorder %v3883, 0.0
    %vm3916 = vcmp.gt.f32.partialorder %v3884, 0.0
    %vm3917 = vcmp.gt.f32.partialorder %v3885, 0.0
    %vm3918 = vcmp.gt.f32.partialorder %v3886, 0.0
    %v3919 = vmul.f32 %v3855, 0.2
    %v3920 = vmul.f32 %v3856, 0.2
    %v3921 = vmul.f32 %v3857, 0.2
    %v3922 = vmul.f32 %v3858, 0.2
    %v3923 = vmul.f32 %v3859, 0.2
    %v3924 = vmul.f32 %v3860, 0.2
    %v3925 = vmul.f32 %v3861, 0.2
    %v3926 = vmul.f32 %v3862, 0.2
    %v3927 = vmul.f32 %v3863, 0.2
    %v3928 = vmul.f32 %v3864, 0.2
    %v3929 = vmul.f32 %v3865, 0.2
    %v3930 = vmul.f32 %v3866, 0.2
    %v3931 = vmul.f32 %v3867, 0.2
    %v3932 = vmul.f32 %v3868, 0.2
    %v3933 = vmul.f32 %v3869, 0.2
    %v3934 = vmul.f32 %v3870, 0.2
    %v3935 = vmul.f32 %v3871, 0.2
    %v3936 = vmul.f32 %v3872, 0.2
    %v3937 = vmul.f32 %v3873, 0.2
    %v3938 = vmul.f32 %v3874, 0.2
    %v3939 = vmul.f32 %v3875, 0.2
    %v3940 = vmul.f32 %v3876, 0.2
    %v3941 = vmul.f32 %v3877, 0.2
    %v3942 = vmul.f32 %v3878, 0.2
    %v3943 = vmul.f32 %v3879, 0.2
    %v3944 = vmul.f32 %v3880, 0.2
    %v3945 = vmul.f32 %v3881, 0.2
    %v3946 = vmul.f32 %v3882, 0.2
    %v3947 = vmul.f32 %v3883, 0.2
    %v3948 = vmul.f32 %v3884, 0.2
    %v3949 = vmul.f32 %v3885, 0.2
    %v3950 = vmul.f32 %v3886, 0.2
    %v3951 = vsel %vm3887, %v3855, %v3919
    %v3952 = vsel %vm3888, %v3856, %v3920
    %v3953 = vsel %vm3889, %v3857, %v3921
    %v3954 = vsel %vm3890, %v3858, %v3922
    %v3955 = vsel %vm3891, %v3859, %v3923
    %v3956 = vsel %vm3892, %v3860, %v3924
    %v3957 = vsel %vm3893, %v3861, %v3925
    %v3958 = vsel %vm3894, %v3862, %v3926
    %v3959 = vsel %vm3895, %v3863, %v3927
    %v3960 = vsel %vm3896, %v3864, %v3928
    %v3961 = vsel %vm3897, %v3865, %v3929
    %v3962 = vsel %vm3898, %v3866, %v3930
    %v3963 = vsel %vm3899, %v3867, %v3931
    %v3964 = vsel %vm3900, %v3868, %v3932
    %v3965 = vsel %vm3901, %v3869, %v3933
    %v3966 = vsel %vm3902, %v3870, %v3934
    %v3967 = vsel %vm3903, %v3871, %v3935
    %v3968 = vsel %vm3904, %v3872, %v3936
    %v3969 = vsel %vm3905, %v3873, %v3937
    %v3970 = vsel %vm3906, %v3874, %v3938
    %v3971 = vsel %vm3907, %v3875, %v3939
    %v3972 = vsel %vm3908, %v3876, %v3940
    %v3973 = vsel %vm3909, %v3877, %v3941
    %v3974 = vsel %vm3910, %v3878, %v3942
    %v3975 = vsel %vm3911, %v3879, %v3943
    %v3976 = vsel %vm3912, %v3880, %v3944
    %v3977 = vsel %vm3913, %v3881, %v3945
    %v3978 = vsel %vm3914, %v3882, %v3946
    %v3979 = vsel %vm3915, %v3883, %v3947
    %v3980 = vsel %vm3916, %v3884, %v3948
    %v3981 = vsel %vm3917, %v3885, %v3949
    %v3982 = vsel %vm3918, %v3886, %v3950
    %v3983 = vld [vmem:[%s13] sm:$0xff]
    %v3984 = vld [vmem:[%s13 + $0x8] sm:$0xff]
    %v3985 = vld [vmem:[%s13 + $0x10] sm:$0xff]
    %v3986 = vld [vmem:[%s13 + $0x18] sm:$0xff]
    %v3987 = vld [vmem:[%s13 + $0x20] sm:$0xff]
    %v3988 = vld [vmem:[%s13 + $0x28] sm:$0xff]
    %v3989 = vld [vmem:[%s13 + $0x30] sm:$0xff]
    %v3990 = vld [vmem:[%s13 + $0x38] sm:$0xff]
    %v3991 = vld [vmem:[%s13 + $0x40] sm:$0xff]
    %v3992 = vld [vmem:[%s13 + $0x48] sm:$0xff]
    %v3993 = vld [vmem:[%s13 + $0x50] sm:$0xff]
    %v3994 = vld [vmem:[%s13 + $0x58] sm:$0xff]
    %v3995 = vld [vmem:[%s13 + $0x60] sm:$0xff]
    %v3996 = vld [vmem:[%s13 + $0x68] sm:$0xff]
    %v3997 = vld [vmem:[%s13 + $0x70] sm:$0xff]
    %v3998 = vld [vmem:[%s13 + $0x78] sm:$0xff]
    %3999 = vmatprep.subr.mxu0 0.0
    %4000 = vmatpush1.msra.mxu0 %v3983
    %4001 = vmatprep.subr.mxu0 0.0
    %4002 = vmatpush1.msra.mxu0 %v3984
    %4003 = vmatprep.subr.mxu0 0.0
    %4004 = vmatpush1.msra.mxu0 %v3985
    %4005 = vmatprep.subr.mxu0 0.0
    %4006 = vmatpush1.msra.mxu0 %v3986
    %4007 = vmatprep.subr.mxu0 0.0
    %4008 = vmatpush1.msra.mxu0 %v3987
    %4009 = vmatprep.subr.mxu0 0.0
    %4010 = vmatpush1.msra.mxu0 %v3988
    %4011 = vmatprep.subr.mxu0 0.0
    %4012 = vmatpush1.msra.mxu0 %v3989
    %4013 = vmatprep.subr.mxu0 0.0
    %4014 = vmatpush1.msra.mxu0 %v3990
    %4015 = vmatprep.subr.mxu0 0.0
    %4016 = vmatpush1.msra.mxu0 %v3991
    %4017 = vmatprep.subr.mxu0 0.0
    %4018 = vmatpush1.msra.mxu0 %v3992
    %4019 = vmatprep.subr.mxu0 0.0
    %4020 = vmatpush1.msra.mxu0 %v3993
    %4021 = vmatprep.subr.mxu0 0.0
    %4022 = vmatpush1.msra.mxu0 %v3994
    %4023 = vmatprep.subr.mxu0 0.0
    %4024 = vmatpush1.msra.mxu0 %v3995
    %4025 = vmatprep.subr.mxu0 0.0
    %4026 = vmatpush1.msra.mxu0 %v3996
    %4027 = vmatprep.subr.mxu0 0.0
    %4028 = vmatpush1.msra.mxu0 %v3997
    %4029 = vmatprep.subr.mxu0 0.0
    %4030 = vmatpush1.msra.mxu0 %v3998
    %4031 = vmatprep.subr.mxu0 0.0
    %4032 = vmatpush1.msra.mxu0 0.0
    %4033 = vmatprep.subr.mxu0 0.0
    %4034 = vmatpush1.msra.mxu0 0.0
    %4035 = vmatprep.subr.mxu0 0.0
    %4036 = vmatpush1.msra.mxu0 0.0
    %4037 = vmatprep.subr.mxu0 0.0
    %4038 = vmatpush1.msra.mxu0 0.0
    %4039 = vmatprep.subr.mxu0 0.0
    %4040 = vmatpush1.msra.mxu0 0.0
    %4041 = vmatprep.subr.mxu0 0.0
    %4042 = vmatpush1.msra.mxu0 0.0
    %4043 = vmatprep.subr.mxu0 0.0
    %4044 = vmatpush1.msra.mxu0 0.0
    %4045 = vmatprep.subr.mxu0 0.0
    %4046 = vmatpush1.msra.mxu0 0.0
    %4047 = vmatprep.subr.mxu0 0.0
    %4048 = vmatpush1.msra.mxu0 0.0
    %4049 = vmatprep.subr.mxu0 0.0
    %4050 = vmatpush1.msra.mxu0 0.0
    %4051 = vmatprep.subr.mxu0 0.0
    %4052 = vmatpush1.msra.mxu0 0.0
    %4053 = vmatprep.subr.mxu0 0.0
    %4054 = vmatpush1.msra.mxu0 0.0
    %4055 = vmatprep.subr.mxu0 0.0
    %4056 = vmatpush1.msra.mxu0 0.0
    %4057 = vmatprep.subr.mxu0 0.0
    %4058 = vmatpush1.msra.mxu0 0.0
    %4059 = vmatprep.subr.mxu0 0.0
    %4060 = vmatpush1.msra.mxu0 0.0
    %4061 = vmatprep.subr.mxu0 0.0
    %4062 = vmatpush1.msra.mxu0 0.0
    %4063 = vmatprep.mubr.f32.mxu0 0.0
    %4064 = vmatmul.mubr.f32.gmra.mrb[0].mxu0 %v3951
    %v4065 = vpop.f32.mrb[0].mxu0
    %v4066 = vadd.f32 %v864, %v4065
    %v4067 = vpop.f32.mrb[0].mxu0
    %4068 = vmatprep.mubr.f32.mxu0 0.0
    %4069 = vmatmul.mubr.f32.gmra.mrb[0].mxu0 %v3952
    %v4070 = vpop.f32.mrb[0].mxu0
    %v4071 = vadd.f32 %v869, %v4070
    %v4072 = vpop.f32.mrb[0].mxu0
    %4073 = vmatprep.mubr.f32.mxu0 0.0
    %4074 = vmatmul.mubr.f32.gmra.mrb[0].mxu0 %v3953
    %v4075 = vpop.f32.mrb[0].mxu0
    %v4076 = vadd.f32 %v874, %v4075
    %v4077 = vpop.f32.mrb[0].mxu0
    %4078 = vmatprep.mubr.f32.mxu0 0.0
    %4079 = vmatmul.mubr.f32.gmra.mrb[0].mxu0 %v3954
    %v4080 = vpop.f32.mrb[0].mxu0
    %v4081 = vadd.f32 %v879, %v4080
    %v4082 = vpop.f32.mrb[0].mxu0
    %4083 = vmatprep.mubr.f32.mxu0 0.0
    %4084 = vmatmul.mubr.f32.gmra.mrb[0].mxu0 %v3955
    %v4085 = vpop.f32.mrb[0].mxu0
    %v4086 = vadd.f32 %v884, %v4085
    %v4087 = vpop.f32.mrb[0].mxu0
    %4088 = vmatprep.mubr.f32.mxu0 0.0
    %4089 = vmatmul.mubr.f32.gmra.mrb[0].mxu0 %v3956
    %v4090 = vpop.f32.mrb[0].mxu0
    %v4091 = vadd.f32 %v889, %v4090
    %v4092 = vpop.f32.mrb[0].mxu0
    %4093 = vmatprep.mubr.f32.mxu0 0.0
    %4094 = vmatmul.mubr.f32.gmra.mrb[0].mxu0 %v3957
    %v4095 = vpop.f32.mrb[0].mxu0
    %v4096 = vadd.f32 %v894, %v4095
    %v4097 = vpop.f32.mrb[0].mxu0
    %4098 = vmatprep.mubr.f32.mxu0 0.0
    %4099 = vmatmul.mubr.f32.gmra.mrb[0].mxu0 %v3958
    %v4100 = vpop.f32.mrb[0].mxu0
    %v4101 = vadd.f32 %v899, %v4100
    %v4102 = vpop.f32.mrb[0].mxu0
    %4103 = vmatprep.mubr.f32.mxu0 0.0
    %4104 = vmatmul.mubr.f32.gmra.mrb[0].mxu0 %v3959
    %v4105 = vpop.f32.mrb[0].mxu0
    %v4106 = vadd.f32 %v904, %v4105
    %v4107 = vpop.f32.mrb[0].mxu0
    %4108 = vmatprep.mubr.f32.mxu0 0.0
    %4109 = vmatmul.mubr.f32.gmra.mrb[0].mxu0 %v3960
    %v4110 = vpop.f32.mrb[0].mxu0
    %v4111 = vadd.f32 %v909, %v4110
    %v4112 = vpop.f32.mrb[0].mxu0
    %4113 = vmatprep.mubr.f32.mxu0 0.0
    %4114 = vmatmul.mubr.f32.gmra.mrb[0].mxu0 %v3961
    %v4115 = vpop.f32.mrb[0].mxu0
    %v4116 = vadd.f32 %v914, %v4115
    %v4117 = vpop.f32.mrb[0].mxu0
    %4118 = vmatprep.mubr.f32.mxu0 0.0
    %4119 = vmatmul.mubr.f32.gmra.mrb[0].mxu0 %v3962
    %v4120 = vpop.f32.mrb[0].mxu0
    %v4121 = vadd.f32 %v919, %v4120
    %v4122 = vpop.f32.mrb[0].mxu0
    %4123 = vmatprep.mubr.f32.mxu0 0.0
    %4124 = vmatmul.mubr.f32.gmra.mrb[0].mxu0 %v3963
    %v4125 = vpop.f32.mrb[0].mxu0
    %v4126 = vadd.f32 %v924, %v4125
    %v4127 = vpop.f32.mrb[0].mxu0
    %4128 = vmatprep.mubr.f32.mxu0 0.0
    %4129 = vmatmul.mubr.f32.gmra.mrb[0].mxu0 %v3964
    %v4130 = vpop.f32.mrb[0].mxu0
    %v4131 = vadd.f32 %v929, %v4130
    %v4132 = vpop.f32.mrb[0].mxu0
    %4133 = vmatprep.mubr.f32.mxu0 0.0
    %4134 = vmatmul.mubr.f32.gmra.mrb[0].mxu0 %v3965
    %v4135 = vpop.f32.mrb[0].mxu0
    %v4136 = vadd.f32 %v934, %v4135
    %v4137 = vpop.f32.mrb[0].mxu0
    %4138 = vmatprep.mubr.f32.mxu0 0.0
    %4139 = vmatmul.mubr.f32.gmra.mrb[0].mxu0 %v3966
    %v4140 = vpop.f32.mrb[0].mxu0
    %v4141 = vadd.f32 %v939, %v4140
    %v4142 = vpop.f32.mrb[0].mxu0
    %4143 = vmatprep.mubr.f32.mxu0 0.0
    %4144 = vmatmul.mubr.f32.gmra.mrb[0].mxu0 %v3967
    %v4145 = vpop.f32.mrb[0].mxu0
    %v4146 = vadd.f32 %v944, %v4145
    %v4147 = vpop.f32.mrb[0].mxu0
    %4148 = vmatprep.mubr.f32.mxu0 0.0
    %4149 = vmatmul.mubr.f32.gmra.mrb[0].mxu0 %v3968
    %v4150 = vpop.f32.mrb[0].mxu0
    %v4151 = vadd.f32 %v949, %v4150
    %v4152 = vpop.f32.mrb[0].mxu0
    %4153 = vmatprep.mubr.f32.mxu0 0.0
    %4154 = vmatmul.mubr.f32.gmra.mrb[0].mxu0 %v3969
    %v4155 = vpop.f32.mrb[0].mxu0
    %v4156 = vadd.f32 %v954, %v4155
    %v4157 = vpop.f32.mrb[0].mxu0
    %4158 = vmatprep.mubr.f32.mxu0 0.0
    %4159 = vmatmul.mubr.f32.gmra.mrb[0].mxu0 %v3970
    %v4160 = vpop.f32.mrb[0].mxu0
    %v4161 = vadd.f32 %v959, %v4160
    %v4162 = vpop.f32.mrb[0].mxu0
    %4163 = vmatprep.mubr.f32.mxu0 0.0
    %4164 = vmatmul.mubr.f32.gmra.mrb[0].mxu0 %v3971
    %v4165 = vpop.f32.mrb[0].mxu0
    %v4166 = vadd.f32 %v964, %v4165
    %v4167 = vpop.f32.mrb[0].mxu0
    %4168 = vmatprep.mubr.f32.mxu0 0.0
    %4169 = vmatmul.mubr.f32.gmra.mrb[0].mxu0 %v3972
    %v4170 = vpop.f32.mrb[0].mxu0
    %v4171 = vadd.f32 %v969, %v4170
    %v4172 = vpop.f32.mrb[0].mxu0
    %4173 = vmatprep.mubr.f32.mxu0 0.0
    %4174 = vmatmul.mubr.f32.gmra.mrb[0].mxu0 %v3973
    %v4175 = vpop.f32.mrb[0].mxu0
    %v4176 = vadd.f32 %v974, %v4175
    %v4177 = vpop.f32.mrb[0].mxu0
    %4178 = vmatprep.mubr.f32.mxu0 0.0
    %4179 = vmatmul.mubr.f32.gmra.mrb[0].mxu0 %v3974
    %v4180 = vpop.f32.mrb[0].mxu0
    %v4181 = vadd.f32 %v979, %v4180
    %v4182 = vpop.f32.mrb[0].mxu0
    %4183 = vmatprep.mubr.f32.mxu0 0.0
    %4184 = vmatmul.mubr.f32.gmra.mrb[0].mxu0 %v3975
    %v4185 = vpop.f32.mrb[0].mxu0
    %v4186 = vadd.f32 %v984, %v4185
    %v4187 = vpop.f32.mrb[0].mxu0
    %4188 = vmatprep.mubr.f32.mxu0 0.0
    %4189 = vmatmul.mubr.f32.gmra.mrb[0].mxu0 %v3976
    %v4190 = vpop.f32.mrb[0].mxu0
    %v4191 = vadd.f32 %v989, %v4190
    %v4192 = vpop.f32.mrb[0].mxu0
    %4193 = vmatprep.mubr.f32.mxu0 0.0
    %4194 = vmatmul.mubr.f32.gmra.mrb[0].mxu0 %v3977
    %v4195 = vpop.f32.mrb[0].mxu0
    %v4196 = vadd.f32 %v994, %v4195
    %v4197 = vpop.f32.mrb[0].mxu0
    %4198 = vmatprep.mubr.f32.mxu0 0.0
    %4199 = vmatmul.mubr.f32.gmra.mrb[0].mxu0 %v3978
    %v4200 = vpop.f32.mrb[0].mxu0
    %v4201 = vadd.f32 %v999, %v4200
    %v4202 = vpop.f32.mrb[0].mxu0
    %4203 = vmatprep.mubr.f32.mxu0 0.0
    %4204 = vmatmul.mubr.f32.gmra.mrb[0].mxu0 %v3979
    %v4205 = vpop.f32.mrb[0].mxu0
    %v4206 = vadd.f32 %v1004, %v4205
    %v4207 = vpop.f32.mrb[0].mxu0
    %4208 = vmatprep.mubr.f32.mxu0 0.0
    %4209 = vmatmul.mubr.f32.gmra.mrb[0].mxu0 %v3980
    %v4210 = vpop.f32.mrb[0].mxu0
    %v4211 = vadd.f32 %v1009, %v4210
    %v4212 = vpop.f32.mrb[0].mxu0
    %4213 = vmatprep.mubr.f32.mxu0 0.0
    %4214 = vmatmul.mubr.f32.gmra.mrb[0].mxu0 %v3981
    %v4215 = vpop.f32.mrb[0].mxu0
    %v4216 = vadd.f32 %v1014, %v4215
    %v4217 = vpop.f32.mrb[0].mxu0
    %4218 = vmatprep.mubr.f32.mxu0 0.0
    %4219 = vmatmul.mubr.f32.gmra.mrb[0].mxu0 %v3982
    %v4220 = vpop.f32.mrb[0].mxu0
    %v4221 = vadd.f32 %v1019, %v4220
    %v4222 = vpop.f32.mrb[0].mxu0
    %4223 = vdwg.mxu0
    %v4224 = vsel %vm1246, %v4066, -inf
    %v4225 = vsel %vm1246, %v4071, -inf
    %v4226 = vmax.f32 %v4224, %v4225
    %v4227 = vrot.slane %v4226, 4
    %v4228 = vmax.f32 %v4226, %v4227
    %v4229 = vrot.slane %v4228, 2
    %v4230 = vmax.f32 %v4228, %v4229
    %v4231 = vrot.slane %v4230, 1
    %v4232 = vmax.f32 %v4230, %v4231
    %v4233 = vsel %vm1246, %v4076, -inf
    %v4234 = vsel %vm1246, %v4081, -inf
    %v4235 = vmax.f32 %v4233, %v4234
    %v4236 = vrot.slane %v4235, 4
    %v4237 = vmax.f32 %v4235, %v4236
    %v4238 = vrot.slane %v4237, 2
    %v4239 = vmax.f32 %v4237, %v4238
    %v4240 = vrot.slane %v4239, 1
    %v4241 = vmax.f32 %v4239, %v4240
    %v4242 = vsel %vm1246, %v4086, -inf
    %v4243 = vsel %vm1246, %v4091, -inf
    %v4244 = vmax.f32 %v4242, %v4243
    %v4245 = vrot.slane %v4244, 4
    %v4246 = vmax.f32 %v4244, %v4245
    %v4247 = vrot.slane %v4246, 2
    %v4248 = vmax.f32 %v4246, %v4247
    %v4249 = vrot.slane %v4248, 1
    %v4250 = vmax.f32 %v4248, %v4249
    %v4251 = vsel %vm1246, %v4096, -inf
    %v4252 = vsel %vm1246, %v4101, -inf
    %v4253 = vmax.f32 %v4251, %v4252
    %v4254 = vrot.slane %v4253, 4
    %v4255 = vmax.f32 %v4253, %v4254
    %v4256 = vrot.slane %v4255, 2
    %v4257 = vmax.f32 %v4255, %v4256
    %v4258 = vrot.slane %v4257, 1
    %v4259 = vmax.f32 %v4257, %v4258
    %v4260 = vsel %vm1246, %v4106, -inf
    %v4261 = vsel %vm1246, %v4111, -inf
    %v4262 = vmax.f32 %v4260, %v4261
    %v4263 = vrot.slane %v4262, 4
    %v4264 = vmax.f32 %v4262, %v4263
    %v4265 = vrot.slane %v4264, 2
    %v4266 = vmax.f32 %v4264, %v4265
    %v4267 = vrot.slane %v4266, 1
    %v4268 = vmax.f32 %v4266, %v4267
    %v4269 = vsel %vm1246, %v4116, -inf
    %v4270 = vsel %vm1246, %v4121, -inf
    %v4271 = vmax.f32 %v4269, %v4270
    %v4272 = vrot.slane %v4271, 4
    %v4273 = vmax.f32 %v4271, %v4272
    %v4274 = vrot.slane %v4273, 2
    %v4275 = vmax.f32 %v4273, %v4274
    %v4276 = vrot.slane %v4275, 1
    %v4277 = vmax.f32 %v4275, %v4276
    %v4278 = vsel %vm1246, %v4126, -inf
    %v4279 = vsel %vm1246, %v4131, -inf
    %v4280 = vmax.f32 %v4278, %v4279
    %v4281 = vrot.slane %v4280, 4
    %v4282 = vmax.f32 %v4280, %v4281
    %v4283 = vrot.slane %v4282, 2
    %v4284 = vmax.f32 %v4282, %v4283
    %v4285 = vrot.slane %v4284, 1
    %v4286 = vmax.f32 %v4284, %v4285
    %v4287 = vsel %vm1246, %v4136, -inf
    %v4288 = vsel %vm1246, %v4141, -inf
    %v4289 = vmax.f32 %v4287, %v4288
    %v4290 = vrot.slane %v4289, 4
    %v4291 = vmax.f32 %v4289, %v4290
    %v4292 = vrot.slane %v4291, 2
    %v4293 = vmax.f32 %v4291, %v4292
    %v4294 = vrot.slane %v4293, 1
    %v4295 = vmax.f32 %v4293, %v4294
    %v4296 = vsel %vm1246, %v4146, -inf
    %v4297 = vsel %vm1246, %v4151, -inf
    %v4298 = vmax.f32 %v4296, %v4297
    %v4299 = vrot.slane %v4298, 4
    %v4300 = vmax.f32 %v4298, %v4299
    %v4301 = vrot.slane %v4300, 2
    %v4302 = vmax.f32 %v4300, %v4301
    %v4303 = vrot.slane %v4302, 1
    %v4304 = vmax.f32 %v4302, %v4303
    %v4305 = vsel %vm1246, %v4156, -inf
    %v4306 = vsel %vm1246, %v4161, -inf
    %v4307 = vmax.f32 %v4305, %v4306
    %v4308 = vrot.slane %v4307, 4
    %v4309 = vmax.f32 %v4307, %v4308
    %v4310 = vrot.slane %v4309, 2
    %v4311 = vmax.f32 %v4309, %v4310
    %v4312 = vrot.slane %v4311, 1
    %v4313 = vmax.f32 %v4311, %v4312
    %v4314 = vsel %vm1246, %v4166, -inf
    %v4315 = vsel %vm1246, %v4171, -inf
    %v4316 = vmax.f32 %v4314, %v4315
    %v4317 = vrot.slane %v4316, 4
    %v4318 = vmax.f32 %v4316, %v4317
    %v4319 = vrot.slane %v4318, 2
    %v4320 = vmax.f32 %v4318, %v4319
    %v4321 = vrot.slane %v4320, 1
    %v4322 = vmax.f32 %v4320, %v4321
    %v4323 = vsel %vm1246, %v4176, -inf
    %v4324 = vsel %vm1246, %v4181, -inf
    %v4325 = vmax.f32 %v4323, %v4324
    %v4326 = vrot.slane %v4325, 4
    %v4327 = vmax.f32 %v4325, %v4326
    %v4328 = vrot.slane %v4327, 2
    %v4329 = vmax.f32 %v4327, %v4328
    %v4330 = vrot.slane %v4329, 1
    %v4331 = vmax.f32 %v4329, %v4330
    %v4332 = vsel %vm1246, %v4186, -inf
    %v4333 = vsel %vm1246, %v4191, -inf
    %v4334 = vmax.f32 %v4332, %v4333
    %v4335 = vrot.slane %v4334, 4
    %v4336 = vmax.f32 %v4334, %v4335
    %v4337 = vrot.slane %v4336, 2
    %v4338 = vmax.f32 %v4336, %v4337
    %v4339 = vrot.slane %v4338, 1
    %v4340 = vmax.f32 %v4338, %v4339
    %v4341 = vsel %vm1246, %v4196, -inf
    %v4342 = vsel %vm1246, %v4201, -inf
    %v4343 = vmax.f32 %v4341, %v4342
    %v4344 = vrot.slane %v4343, 4
    %v4345 = vmax.f32 %v4343, %v4344
    %v4346 = vrot.slane %v4345, 2
    %v4347 = vmax.f32 %v4345, %v4346
    %v4348 = vrot.slane %v4347, 1
    %v4349 = vmax.f32 %v4347, %v4348
    %v4350 = vsel %vm1246, %v4206, -inf
    %v4351 = vsel %vm1246, %v4211, -inf
    %v4352 = vmax.f32 %v4350, %v4351
    %v4353 = vrot.slane %v4352, 4
    %v4354 = vmax.f32 %v4352, %v4353
    %v4355 = vrot.slane %v4354, 2
    %v4356 = vmax.f32 %v4354, %v4355
    %v4357 = vrot.slane %v4356, 1
    %v4358 = vmax.f32 %v4356, %v4357
    %v4359 = vsel %vm1246, %v4216, -inf
    %v4360 = vsel %vm1246, %v4221, -inf
    %v4361 = vmax.f32 %v4359, %v4360
    %v4362 = vrot.slane %v4361, 4
    %v4363 = vmax.f32 %v4361, %v4362
    %v4364 = vrot.slane %v4363, 2
    %v4365 = vmax.f32 %v4363, %v4364
    %v4366 = vrot.slane %v4365, 1
    %v4367 = vmax.f32 %v4365, %v4366
    %v4368 = vsub.f32 %v4066, %v4232
    %v4369 = vsub.f32 %v4071, %v4232
    %v4370 = vsub.f32 %v4076, %v4241
    %v4371 = vsub.f32 %v4081, %v4241
    %v4372 = vsub.f32 %v4086, %v4250
    %v4373 = vsub.f32 %v4091, %v4250
    %v4374 = vsub.f32 %v4096, %v4259
    %v4375 = vsub.f32 %v4101, %v4259
    %v4376 = vsub.f32 %v4106, %v4268
    %v4377 = vsub.f32 %v4111, %v4268
    %v4378 = vsub.f32 %v4116, %v4277
    %v4379 = vsub.f32 %v4121, %v4277
    %v4380 = vsub.f32 %v4126, %v4286
    %v4381 = vsub.f32 %v4131, %v4286
    %v4382 = vsub.f32 %v4136, %v4295
    %v4383 = vsub.f32 %v4141, %v4295
    %v4384 = vsub.f32 %v4146, %v4304
    %v4385 = vsub.f32 %v4151, %v4304
    %v4386 = vsub.f32 %v4156, %v4313
    %v4387 = vsub.f32 %v4161, %v4313
    %v4388 = vsub.f32 %v4166, %v4322
    %v4389 = vsub.f32 %v4171, %v4322
    %v4390 = vsub.f32 %v4176, %v4331
    %v4391 = vsub.f32 %v4181, %v4331
    %v4392 = vsub.f32 %v4186, %v4340
    %v4393 = vsub.f32 %v4191, %v4340
    %v4394 = vsub.f32 %v4196, %v4349
    %v4395 = vsub.f32 %v4201, %v4349
    %v4396 = vsub.f32 %v4206, %v4358
    %v4397 = vsub.f32 %v4211, %v4358
    %v4398 = vsub.f32 %v4216, %v4367
    %v4399 = vsub.f32 %v4221, %v4367
    %v4400 = vmul.f32 %v4368, 1.442695
    %v4401 = vpow.pop %v4400
    %v4402 = vmul.f32 %v4369, 1.442695
    %v4403 = vpow.pop %v4402
    %v4404 = vmul.f32 %v4370, 1.442695
    %v4405 = vpow.pop %v4404
    %v4406 = vmul.f32 %v4371, 1.442695
    %v4407 = vpow.pop %v4406
    %v4408 = vmul.f32 %v4372, 1.442695
    %v4409 = vpow.pop %v4408
    %v4410 = vmul.f32 %v4373, 1.442695
    %v4411 = vpow.pop %v4410
    %v4412 = vmul.f32 %v4374, 1.442695
    %v4413 = vpow.pop %v4412
    %v4414 = vmul.f32 %v4375, 1.442695
    %v4415 = vpow.pop %v4414
    %v4416 = vmul.f32 %v4376, 1.442695
    %v4417 = vpow.pop %v4416
    %v4418 = vmul.f32 %v4377, 1.442695
    %v4419 = vpow.pop %v4418
    %v4420 = vmul.f32 %v4378, 1.442695
    %v4421 = vpow.pop %v4420
    %v4422 = vmul.f32 %v4379, 1.442695
    %v4423 = vpow.pop %v4422
    %v4424 = vmul.f32 %v4380, 1.442695
    %v4425 = vpow.pop %v4424
    %v4426 = vmul.f32 %v4381, 1.442695
    %v4427 = vpow.pop %v4426
    %v4428 = vmul.f32 %v4382, 1.442695
    %v4429 = vpow.pop %v4428
    %v4430 = vmul.f32 %v4383, 1.442695
    %v4431 = vpow.pop %v4430
    %v4432 = vmul.f32 %v4384, 1.442695
    %v4433 = vpow.pop %v4432
    %v4434 = vmul.f32 %v4385, 1.442695
    %v4435 = vpow.pop %v4434
    %v4436 = vmul.f32 %v4386, 1.442695
    %v4437 = vpow.pop %v4436
    %v4438 = vmul.f32 %v4387, 1.442695
    %v4439 = vpow.pop %v4438
    %v4440 = vmul.f32 %v4388, 1.442695
    %v4441 = vpow.pop %v4440
    %v4442 = vmul.f32 %v4389, 1.442695
    %v4443 = vpow.pop %v4442
    %v4444 = vmul.f32 %v4390, 1.442695
    %v4445 = vpow.pop %v4444
    %v4446 = vmul.f32 %v4391, 1.442695
    %v4447 = vpow.pop %v4446
    %v4448 = vmul.f32 %v4392, 1.442695
    %v4449 = vpow.pop %v4448
    %v4450 = vmul.f32 %v4393, 1.442695
    %v4451 = vpow.pop %v4450
    %v4452 = vmul.f32 %v4394, 1.442695
    %v4453 = vpow.pop %v4452
    %v4454 = vmul.f32 %v4395, 1.442695
    %v4455 = vpow.pop %v4454
    %v4456 = vmul.f32 %v4396, 1.442695
    %v4457 = vpow.pop %v4456
    %v4458 = vmul.f32 %v4397, 1.442695
    %v4459 = vpow.pop %v4458
    %v4460 = vmul.f32 %v4398, 1.442695
    %v4461 = vpow.pop %v4460
    %v4462 = vmul.f32 %v4399, 1.442695
    %v4463 = vpow.pop %v4462
    %v4464 = vsel %vm1246, %v4401, 0.0
    %v4465 = vsel %vm1246, %v4403, 0.0
    %v4466 = vadd.f32 %v4464, %v4465
    %v4467 = vrot.slane %v4466, 4
    %v4468 = vadd.f32 %v4466, %v4467
    %v4469 = vrot.slane %v4468, 2
    %v4470 = vadd.f32 %v4468, %v4469
    %v4471 = vrot.slane %v4470, 1
    %v4472 = vadd.f32 %v4470, %v4471
    %v4473 = vsel %vm1246, %v4405, 0.0
    %v4474 = vsel %vm1246, %v4407, 0.0
    %v4475 = vadd.f32 %v4473, %v4474
    %v4476 = vrot.slane %v4475, 4
    %v4477 = vadd.f32 %v4475, %v4476
    %v4478 = vrot.slane %v4477, 2
    %v4479 = vadd.f32 %v4477, %v4478
    %v4480 = vrot.slane %v4479, 1
    %v4481 = vadd.f32 %v4479, %v4480
    %v4482 = vsel %vm1246, %v4409, 0.0
    %v4483 = vsel %vm1246, %v4411, 0.0
    %v4484 = vadd.f32 %v4482, %v4483
    %v4485 = vrot.slane %v4484, 4
    %v4486 = vadd.f32 %v4484, %v4485
    %v4487 = vrot.slane %v4486, 2
    %v4488 = vadd.f32 %v4486, %v4487
    %v4489 = vrot.slane %v4488, 1
    %v4490 = vadd.f32 %v4488, %v4489
    %v4491 = vsel %vm1246, %v4413, 0.0
    %v4492 = vsel %vm1246, %v4415, 0.0
    %v4493 = vadd.f32 %v4491, %v4492
    %v4494 = vrot.slane %v4493, 4
    %v4495 = vadd.f32 %v4493, %v4494
    %v4496 = vrot.slane %v4495, 2
    %v4497 = vadd.f32 %v4495, %v4496
    %v4498 = vrot.slane %v4497, 1
    %v4499 = vadd.f32 %v4497, %v4498
    %v4500 = vsel %vm1246, %v4417, 0.0
    %v4501 = vsel %vm1246, %v4419, 0.0
    %v4502 = vadd.f32 %v4500, %v4501
    %v4503 = vrot.slane %v4502, 4
    %v4504 = vadd.f32 %v4502, %v4503
    %v4505 = vrot.slane %v4504, 2
    %v4506 = vadd.f32 %v4504, %v4505
    %v4507 = vrot.slane %v4506, 1
    %v4508 = vadd.f32 %v4506, %v4507
    %v4509 = vsel %vm1246, %v4421, 0.0
    %v4510 = vsel %vm1246, %v4423, 0.0
    %v4511 = vadd.f32 %v4509, %v4510
    %v4512 = vrot.slane %v4511, 4
    %v4513 = vadd.f32 %v4511, %v4512
    %v4514 = vrot.slane %v4513, 2
    %v4515 = vadd.f32 %v4513, %v4514
    %v4516 = vrot.slane %v4515, 1
    %v4517 = vadd.f32 %v4515, %v4516
    %v4518 = vsel %vm1246, %v4425, 0.0
    %v4519 = vsel %vm1246, %v4427, 0.0
    %v4520 = vadd.f32 %v4518, %v4519
    %v4521 = vrot.slane %v4520, 4
    %v4522 = vadd.f32 %v4520, %v4521
    %v4523 = vrot.slane %v4522, 2
    %v4524 = vadd.f32 %v4522, %v4523
    %v4525 = vrot.slane %v4524, 1
    %v4526 = vadd.f32 %v4524, %v4525
    %v4527 = vsel %vm1246, %v4429, 0.0
    %v4528 = vsel %vm1246, %v4431, 0.0
    %v4529 = vadd.f32 %v4527, %v4528
    %v4530 = vrot.slane %v4529, 4
    %v4531 = vadd.f32 %v4529, %v4530
    %v4532 = vrot.slane %v4531, 2
    %v4533 = vadd.f32 %v4531, %v4532
    %v4534 = vrot.slane %v4533, 1
    %v4535 = vadd.f32 %v4533, %v4534
    %v4536 = vsel %vm1246, %v4433, 0.0
    %v4537 = vsel %vm1246, %v4435, 0.0
    %v4538 = vadd.f32 %v4536, %v4537
    %v4539 = vrot.slane %v4538, 4
    %v4540 = vadd.f32 %v4538, %v4539
    %v4541 = vrot.slane %v4540, 2
    %v4542 = vadd.f32 %v4540, %v4541
    %v4543 = vrot.slane %v4542, 1
    %v4544 = vadd.f32 %v4542, %v4543
    %v4545 = vsel %vm1246, %v4437, 0.0
    %v4546 = vsel %vm1246, %v4439, 0.0
    %v4547 = vadd.f32 %v4545, %v4546
    %v4548 = vrot.slane %v4547, 4
    %v4549 = vadd.f32 %v4547, %v4548
    %v4550 = vrot.slane %v4549, 2
    %v4551 = vadd.f32 %v4549, %v4550
    %v4552 = vrot.slane %v4551, 1
    %v4553 = vadd.f32 %v4551, %v4552
    %v4554 = vsel %vm1246, %v4441, 0.0
    %v4555 = vsel %vm1246, %v4443, 0.0
    %v4556 = vadd.f32 %v4554, %v4555
    %v4557 = vrot.slane %v4556, 4
    %v4558 = vadd.f32 %v4556, %v4557
    %v4559 = vrot.slane %v4558, 2
    %v4560 = vadd.f32 %v4558, %v4559
    %v4561 = vrot.slane %v4560, 1
    %v4562 = vadd.f32 %v4560, %v4561
    %v4563 = vsel %vm1246, %v4445, 0.0
    %v4564 = vsel %vm1246, %v4447, 0.0
    %v4565 = vadd.f32 %v4563, %v4564
    %v4566 = vrot.slane %v4565, 4
    %v4567 = vadd.f32 %v4565, %v4566
    %v4568 = vrot.slane %v4567, 2
    %v4569 = vadd.f32 %v4567, %v4568
    %v4570 = vrot.slane %v4569, 1
    %v4571 = vadd.f32 %v4569, %v4570
    %v4572 = vsel %vm1246, %v4449, 0.0
    %v4573 = vsel %vm1246, %v4451, 0.0
    %v4574 = vadd.f32 %v4572, %v4573
    %v4575 = vrot.slane %v4574, 4
    %v4576 = vadd.f32 %v4574, %v4575
    %v4577 = vrot.slane %v4576, 2
    %v4578 = vadd.f32 %v4576, %v4577
    %v4579 = vrot.slane %v4578, 1
    %v4580 = vadd.f32 %v4578, %v4579
    %v4581 = vsel %vm1246, %v4453, 0.0
    %v4582 = vsel %vm1246, %v4455, 0.0
    %v4583 = vadd.f32 %v4581, %v4582
    %v4584 = vrot.slane %v4583, 4
    %v4585 = vadd.f32 %v4583, %v4584
    %v4586 = vrot.slane %v4585, 2
    %v4587 = vadd.f32 %v4585, %v4586
    %v4588 = vrot.slane %v4587, 1
    %v4589 = vadd.f32 %v4587, %v4588
    %v4590 = vsel %vm1246, %v4457, 0.0
    %v4591 = vsel %vm1246, %v4459, 0.0
    %v4592 = vadd.f32 %v4590, %v4591
    %v4593 = vrot.slane %v4592, 4
    %v4594 = vadd.f32 %v4592, %v4593
    %v4595 = vrot.slane %v4594, 2
    %v4596 = vadd.f32 %v4594, %v4595
    %v4597 = vrot.slane %v4596, 1
    %v4598 = vadd.f32 %v4596, %v4597
    %v4599 = vsel %vm1246, %v4461, 0.0
    %v4600 = vsel %vm1246, %v4463, 0.0
    %v4601 = vadd.f32 %v4599, %v4600
    %v4602 = vrot.slane %v4601, 4
    %v4603 = vadd.f32 %v4601, %v4602
    %v4604 = vrot.slane %v4603, 2
    %v4605 = vadd.f32 %v4603, %v4604
    %v4606 = vrot.slane %v4605, 1
    %v4607 = vadd.f32 %v4605, %v4606
    %v4608 = vmax.f32 %v4472, 1e-20
    %v4609 = vmax.f32 %v4481, 1e-20
    %v4610 = vmax.f32 %v4490, 1e-20
    %v4611 = vmax.f32 %v4499, 1e-20
    %v4612 = vmax.f32 %v4508, 1e-20
    %v4613 = vmax.f32 %v4517, 1e-20
    %v4614 = vmax.f32 %v4526, 1e-20
    %v4615 = vmax.f32 %v4535, 1e-20
    %v4616 = vmax.f32 %v4544, 1e-20
    %v4617 = vmax.f32 %v4553, 1e-20
    %v4618 = vmax.f32 %v4562, 1e-20
    %v4619 = vmax.f32 %v4571, 1e-20
    %v4620 = vmax.f32 %v4580, 1e-20
    %v4621 = vmax.f32 %v4589, 1e-20
    %v4622 = vmax.f32 %v4598, 1e-20
    %v4623 = vmax.f32 %v4607, 1e-20
    %v4624 = vrcp.pop %v4608
    %v4625 = vrcp.pop %v4609
    %v4626 = vrcp.pop %v4610
    %v4627 = vrcp.pop %v4611
    %v4628 = vrcp.pop %v4612
    %v4629 = vrcp.pop %v4613
    %v4630 = vrcp.pop %v4614
    %v4631 = vrcp.pop %v4615
    %v4632 = vrcp.pop %v4616
    %v4633 = vrcp.pop %v4617
    %v4634 = vrcp.pop %v4618
    %v4635 = vrcp.pop %v4619
    %v4636 = vrcp.pop %v4620
    %v4637 = vrcp.pop %v4621
    %v4638 = vrcp.pop %v4622
    %v4639 = vrcp.pop %v4623
    %v4640 = vmul.f32 %v4401, %v4624
    %v4641 = vmul.f32 %v4403, %v4624
    %v4642 = vmul.f32 %v4405, %v4625
    %v4643 = vmul.f32 %v4407, %v4625
    %v4644 = vmul.f32 %v4409, %v4626
    %v4645 = vmul.f32 %v4411, %v4626
    %v4646 = vmul.f32 %v4413, %v4627
    %v4647 = vmul.f32 %v4415, %v4627
    %v4648 = vmul.f32 %v4417, %v4628
    %v4649 = vmul.f32 %v4419, %v4628
    %v4650 = vmul.f32 %v4421, %v4629
    %v4651 = vmul.f32 %v4423, %v4629
    %v4652 = vmul.f32 %v4425, %v4630
    %v4653 = vmul.f32 %v4427, %v4630
    %v4654 = vmul.f32 %v4429, %v4631
    %v4655 = vmul.f32 %v4431, %v4631
    %v4656 = vmul.f32 %v4433, %v4632
    %v4657 = vmul.f32 %v4435, %v4632
    %v4658 = vmul.f32 %v4437, %v4633
    %v4659 = vmul.f32 %v4439, %v4633
    %v4660 = vmul.f32 %v4441, %v4634
    %v4661 = vmul.f32 %v4443, %v4634
    %v4662 = vmul.f32 %v4445, %v4635
    %v4663 = vmul.f32 %v4447, %v4635
    %v4664 = vmul.f32 %v4449, %v4636
    %v4665 = vmul.f32 %v4451, %v4636
    %v4666 = vmul.f32 %v4453, %v4637
    %v4667 = vmul.f32 %v4455, %v4637
    %v4668 = vmul.f32 %v4457, %v4638
    %v4669 = vmul.f32 %v4459, %v4638
    %v4670 = vmul.f32 %v4461, %v4639
    %v4671 = vmul.f32 %v4463, %v4639
    %v4672 = vsel %vm1697, %v4640, 0.0
    %v4673 = vsel %vm1697, %v4641, 0.0
    %v4674 = vsel %vm1697, %v4642, 0.0
    %v4675 = vsel %vm1697, %v4643, 0.0
    %v4676 = vsel %vm1697, %v4644, 0.0
    %v4677 = vsel %vm1697, %v4645, 0.0
    %v4678 = vsel %vm1697, %v4646, 0.0
    %v4679 = vsel %vm1697, %v4647, 0.0
    %v4680 = vsel %vm1697, %v4648, 0.0
    %v4681 = vsel %vm1697, %v4649, 0.0
    %v4682 = vsel %vm1697, %v4650, 0.0
    %v4683 = vsel %vm1697, %v4651, 0.0
    %v4684 = vsel %vm1697, %v4652, 0.0
    %v4685 = vsel %vm1697, %v4653, 0.0
    %v4686 = vsel %vm1697, %v4654, 0.0
    %v4687 = vsel %vm1697, %v4655, 0.0
    %v4688 = vsel %vm1697, %v4656, 0.0
    %v4689 = vsel %vm1697, %v4657, 0.0
    %v4690 = vsel %vm1697, %v4658, 0.0
    %v4691 = vsel %vm1697, %v4659, 0.0
    %v4692 = vsel %vm1697, %v4660, 0.0
    %v4693 = vsel %vm1697, %v4661, 0.0
    %v4694 = vsel %vm1697, %v4662, 0.0
    %v4695 = vsel %vm1697, %v4663, 0.0
    %v4696 = vsel %vm1697, %v4664, 0.0
    %v4697 = vsel %vm1697, %v4665, 0.0
    %v4698 = vsel %vm1697, %v4666, 0.0
    %v4699 = vsel %vm1697, %v4667, 0.0
    %v4700 = vsel %vm1697, %v4668, 0.0
    %v4701 = vsel %vm1697, %v4669, 0.0
    %v4702 = vsel %vm1697, %v4670, 0.0
    %v4703 = vsel %vm1697, %v4671, 0.0
    %v4704 = vsel %vm1246, %v4672, 0.0
    %4705 = vadd.xlane.f32.xlu0 %v4704
    %v4706 = vpop.xlane.xlu0 %4705
    %v4707 = vsel %vm1246, %v4673, 0.0
    %4708 = vadd.xlane.f32.xlu0 %v4707
    %v4709 = vpop.xlane.xlu0 %4708
    %v4710 = vsel %vm1246, %v4674, 0.0
    %4711 = vadd.xlane.f32.xlu0 %v4710
    %v4712 = vpop.xlane.xlu0 %4711
    %v4713 = vsel %vm1246, %v4675, 0.0
    %4714 = vadd.xlane.f32.xlu0 %v4713
    %v4715 = vpop.xlane.xlu0 %4714
    %v4716 = vsel %vm1246, %v4676, 0.0
    %4717 = vadd.xlane.f32.xlu0 %v4716
    %v4718 = vpop.xlane.xlu0 %4717
    %v4719 = vsel %vm1246, %v4677, 0.0
    %4720 = vadd.xlane.f32.xlu0 %v4719
    %v4721 = vpop.xlane.xlu0 %4720
    %v4722 = vsel %vm1246, %v4678, 0.0
    %4723 = vadd.xlane.f32.xlu0 %v4722
    %v4724 = vpop.xlane.xlu0 %4723
    %v4725 = vsel %vm1246, %v4679, 0.0
    %4726 = vadd.xlane.f32.xlu0 %v4725
    %v4727 = vpop.xlane.xlu0 %4726
    %v4728 = vsel %vm1246, %v4680, 0.0
    %4729 = vadd.xlane.f32.xlu0 %v4728
    %v4730 = vpop.xlane.xlu0 %4729
    %v4731 = vsel %vm1246, %v4681, 0.0
    %4732 = vadd.xlane.f32.xlu0 %v4731
    %v4733 = vpop.xlane.xlu0 %4732
    %v4734 = vsel %vm1246, %v4682, 0.0
    %4735 = vadd.xlane.f32.xlu0 %v4734
    %v4736 = vpop.xlane.xlu0 %4735
    %v4737 = vsel %vm1246, %v4683, 0.0
    %4738 = vadd.xlane.f32.xlu0 %v4737
    %v4739 = vpop.xlane.xlu0 %4738
    %v4740 = vsel %vm1246, %v4684, 0.0
    %4741 = vadd.xlane.f32.xlu0 %v4740
    %v4742 = vpop.xlane.xlu0 %4741
    %v4743 = vsel %vm1246, %v4685, 0.0
    %4744 = vadd.xlane.f32.xlu0 %v4743
    %v4745 = vpop.xlane.xlu0 %4744
    %v4746 = vsel %vm1246, %v4686, 0.0
    %4747 = vadd.xlane.f32.xlu0 %v4746
    %v4748 = vpop.xlane.xlu0 %4747
    %v4749 = vsel %vm1246, %v4687, 0.0
    %4750 = vadd.xlane.f32.xlu0 %v4749
    %v4751 = vpop.xlane.xlu0 %4750
    %v4752 = vsel %vm1246, %v4688, 0.0
    %4753 = vadd.xlane.f32.xlu0 %v4752
    %v4754 = vpop.xlane.xlu0 %4753
    %v4755 = vsel %vm1246, %v4689, 0.0
    %4756 = vadd.xlane.f32.xlu0 %v4755
    %v4757 = vpop.xlane.xlu0 %4756
    %v4758 = vsel %vm1246, %v4690, 0.0
    %4759 = vadd.xlane.f32.xlu0 %v4758
    %v4760 = vpop.xlane.xlu0 %4759
    %v4761 = vsel %vm1246, %v4691, 0.0
    %4762 = vadd.xlane.f32.xlu0 %v4761
    %v4763 = vpop.xlane.xlu0 %4762
    %v4764 = vsel %vm1246, %v4692, 0.0
    %4765 = vadd.xlane.f32.xlu0 %v4764
    %v4766 = vpop.xlane.xlu0 %4765
    %v4767 = vsel %vm1246, %v4693, 0.0
    %4768 = vadd.xlane.f32.xlu0 %v4767
    %v4769 = vpop.xlane.xlu0 %4768
    %v4770 = vsel %vm1246, %v4694, 0.0
    %4771 = vadd.xlane.f32.xlu0 %v4770
    %v4772 = vpop.xlane.xlu0 %4771
    %v4773 = vsel %vm1246, %v4695, 0.0
    %4774 = vadd.xlane.f32.xlu0 %v4773
    %v4775 = vpop.xlane.xlu0 %4774
    %v4776 = vsel %vm1246, %v4696, 0.0
    %4777 = vadd.xlane.f32.xlu0 %v4776
    %v4778 = vpop.xlane.xlu0 %4777
    %v4779 = vsel %vm1246, %v4697, 0.0
    %4780 = vadd.xlane.f32.xlu0 %v4779
    %v4781 = vpop.xlane.xlu0 %4780
    %v4782 = vsel %vm1246, %v4698, 0.0
    %4783 = vadd.xlane.f32.xlu0 %v4782
    %v4784 = vpop.xlane.xlu0 %4783
    %v4785 = vsel %vm1246, %v4699, 0.0
    %4786 = vadd.xlane.f32.xlu0 %v4785
    %v4787 = vpop.xlane.xlu0 %4786
    %v4788 = vsel %vm1246, %v4700, 0.0
    %4789 = vadd.xlane.f32.xlu0 %v4788
    %v4790 = vpop.xlane.xlu0 %4789
    %v4791 = vsel %vm1246, %v4701, 0.0
    %4792 = vadd.xlane.f32.xlu0 %v4791
    %v4793 = vpop.xlane.xlu0 %4792
    %v4794 = vsel %vm1246, %v4702, 0.0
    %4795 = vadd.xlane.f32.xlu0 %v4794
    %v4796 = vpop.xlane.xlu0 %4795
    %v4797 = vsel %vm1246, %v4703, 0.0
    %4798 = vadd.xlane.f32.xlu0 %v4797
    %v4799 = vpop.xlane.xlu0 %4798
    %v4800 = vsel %vm1828, %v4640, 0.0
    %v4801 = vsel %vm1828, %v4641, 0.0
    %v4802 = vsel %vm1828, %v4642, 0.0
    %v4803 = vsel %vm1828, %v4643, 0.0
    %v4804 = vsel %vm1828, %v4644, 0.0
    %v4805 = vsel %vm1828, %v4645, 0.0
    %v4806 = vsel %vm1828, %v4646, 0.0
    %v4807 = vsel %vm1828, %v4647, 0.0
    %v4808 = vsel %vm1828, %v4648, 0.0
    %v4809 = vsel %vm1828, %v4649, 0.0
    %v4810 = vsel %vm1828, %v4650, 0.0
    %v4811 = vsel %vm1828, %v4651, 0.0
    %v4812 = vsel %vm1828, %v4652, 0.0
    %v4813 = vsel %vm1828, %v4653, 0.0
    %v4814 = vsel %vm1828, %v4654, 0.0
    %v4815 = vsel %vm1828, %v4655, 0.0
    %v4816 = vsel %vm1828, %v4656, 0.0
    %v4817 = vsel %vm1828, %v4657, 0.0
    %v4818 = vsel %vm1828, %v4658, 0.0
    %v4819 = vsel %vm1828, %v4659, 0.0
    %v4820 = vsel %vm1828, %v4660, 0.0
    %v4821 = vsel %vm1828, %v4661, 0.0
    %v4822 = vsel %vm1828, %v4662, 0.0
    %v4823 = vsel %vm1828, %v4663, 0.0
    %v4824 = vsel %vm1828, %v4664, 0.0
    %v4825 = vsel %vm1828, %v4665, 0.0
    %v4826 = vsel %vm1828, %v4666, 0.0
    %v4827 = vsel %vm1828, %v4667, 0.0
    %v4828 = vsel %vm1828, %v4668, 0.0
    %v4829 = vsel %vm1828, %v4669, 0.0
    %v4830 = vsel %vm1828, %v4670, 0.0
    %v4831 = vsel %vm1828, %v4671, 0.0
    %v4832 = vsel %vm1246, %v4800, 0.0
    %4833 = vadd.xlane.f32.xlu0 %v4832
    %v4834 = vpop.xlane.xlu0 %4833
    %v4835 = vsel %vm1246, %v4801, 0.0
    %4836 = vadd.xlane.f32.xlu0 %v4835
    %v4837 = vpop.xlane.xlu0 %4836
    %v4838 = vsel %vm1246, %v4802, 0.0
    %4839 = vadd.xlane.f32.xlu0 %v4838
    %v4840 = vpop.xlane.xlu0 %4839
    %v4841 = vsel %vm1246, %v4803, 0.0
    %4842 = vadd.xlane.f32.xlu0 %v4841
    %v4843 = vpop.xlane.xlu0 %4842
    %v4844 = vsel %vm1246, %v4804, 0.0
    %4845 = vadd.xlane.f32.xlu0 %v4844
    %v4846 = vpop.xlane.xlu0 %4845
    %v4847 = vsel %vm1246, %v4805, 0.0
    %4848 = vadd.xlane.f32.xlu0 %v4847
    %v4849 = vpop.xlane.xlu0 %4848
    %v4850 = vsel %vm1246, %v4806, 0.0
    %4851 = vadd.xlane.f32.xlu0 %v4850
    %v4852 = vpop.xlane.xlu0 %4851
    %v4853 = vsel %vm1246, %v4807, 0.0
    %4854 = vadd.xlane.f32.xlu0 %v4853
    %v4855 = vpop.xlane.xlu0 %4854
    %v4856 = vsel %vm1246, %v4808, 0.0
    %4857 = vadd.xlane.f32.xlu0 %v4856
    %v4858 = vpop.xlane.xlu0 %4857
    %v4859 = vsel %vm1246, %v4809, 0.0
    %4860 = vadd.xlane.f32.xlu0 %v4859
    %v4861 = vpop.xlane.xlu0 %4860
    %v4862 = vsel %vm1246, %v4810, 0.0
    %4863 = vadd.xlane.f32.xlu0 %v4862
    %v4864 = vpop.xlane.xlu0 %4863
    %v4865 = vsel %vm1246, %v4811, 0.0
    %4866 = vadd.xlane.f32.xlu0 %v4865
    %v4867 = vpop.xlane.xlu0 %4866
    %v4868 = vsel %vm1246, %v4812, 0.0
    %4869 = vadd.xlane.f32.xlu0 %v4868
    %v4870 = vpop.xlane.xlu0 %4869
    %v4871 = vsel %vm1246, %v4813, 0.0
    %4872 = vadd.xlane.f32.xlu0 %v4871
    %v4873 = vpop.xlane.xlu0 %4872
    %v4874 = vsel %vm1246, %v4814, 0.0
    %4875 = vadd.xlane.f32.xlu0 %v4874
    %v4876 = vpop.xlane.xlu0 %4875
    %v4877 = vsel %vm1246, %v4815, 0.0
    %4878 = vadd.xlane.f32.xlu0 %v4877
    %v4879 = vpop.xlane.xlu0 %4878
    %v4880 = vsel %vm1246, %v4816, 0.0
    %4881 = vadd.xlane.f32.xlu0 %v4880
    %v4882 = vpop.xlane.xlu0 %4881
    %v4883 = vsel %vm1246, %v4817, 0.0
    %4884 = vadd.xlane.f32.xlu0 %v4883
    %v4885 = vpop.xlane.xlu0 %4884
    %v4886 = vsel %vm1246, %v4818, 0.0
    %4887 = vadd.xlane.f32.xlu0 %v4886
    %v4888 = vpop.xlane.xlu0 %4887
    %v4889 = vsel %vm1246, %v4819, 0.0
    %4890 = vadd.xlane.f32.xlu0 %v4889
    %v4891 = vpop.xlane.xlu0 %4890
    %v4892 = vsel %vm1246, %v4820, 0.0
    %4893 = vadd.xlane.f32.xlu0 %v4892
    %v4894 = vpop.xlane.xlu0 %4893
    %v4895 = vsel %vm1246, %v4821, 0.0
    %4896 = vadd.xlane.f32.xlu0 %v4895
    %v4897 = vpop.xlane.xlu0 %4896
    %v4898 = vsel %vm1246, %v4822, 0.0
    %4899 = vadd.xlane.f32.xlu0 %v4898
    %v4900 = vpop.xlane.xlu0 %4899
    %v4901 = vsel %vm1246, %v4823, 0.0
    %4902 = vadd.xlane.f32.xlu0 %v4901
    %v4903 = vpop.xlane.xlu0 %4902
    %v4904 = vsel %vm1246, %v4824, 0.0
    %4905 = vadd.xlane.f32.xlu0 %v4904
    %v4906 = vpop.xlane.xlu0 %4905
    %v4907 = vsel %vm1246, %v4825, 0.0
    %4908 = vadd.xlane.f32.xlu0 %v4907
    %v4909 = vpop.xlane.xlu0 %4908
    %v4910 = vsel %vm1246, %v4826, 0.0
    %4911 = vadd.xlane.f32.xlu0 %v4910
    %v4912 = vpop.xlane.xlu0 %4911
    %v4913 = vsel %vm1246, %v4827, 0.0
    %4914 = vadd.xlane.f32.xlu0 %v4913
    %v4915 = vpop.xlane.xlu0 %4914
    %v4916 = vsel %vm1246, %v4828, 0.0
    %4917 = vadd.xlane.f32.xlu0 %v4916
    %v4918 = vpop.xlane.xlu0 %4917
    %v4919 = vsel %vm1246, %v4829, 0.0
    %4920 = vadd.xlane.f32.xlu0 %v4919
    %v4921 = vpop.xlane.xlu0 %4920
    %v4922 = vsel %vm1246, %v4830, 0.0
    %4923 = vadd.xlane.f32.xlu0 %v4922
    %v4924 = vpop.xlane.xlu0 %4923
    %v4925 = vsel %vm1246, %v4831, 0.0
    %4926 = vadd.xlane.f32.xlu0 %v4925
    %v4927 = vpop.xlane.xlu0 %4926
    %v4960 = vlaneseq
    %v4961 = vshrl.u32 %v4960, 7
    %v4962 = vsub.s32 %v123, %v4961
    %v4963 = vrot.slane %v4834, %v4962
    %v4964 = vlaneseq
    %v4965 = vshrl.u32 %v4964, 7
    %v4966 = vsub.s32 %v1993, %v4965
    %v4967 = vrot.slane %v4837, %v4966
    %v4968 = vsel %vm1998, %v4967, %v4963
    %v4969 = vlaneseq
    %v4970 = vshrl.u32 %v4969, 7
    %v4971 = vsub.s32 %v123, %v4970
    %v4972 = vrot.slane %v4840, %v4971
    %v4973 = vlaneseq
    %v4974 = vshrl.u32 %v4973, 7
    %v4975 = vsub.s32 %v1993, %v4974
    %v4976 = vrot.slane %v4843, %v4975
    %v4977 = vsel %vm1998, %v4976, %v4972
    %v4978 = vlaneseq
    %v4979 = vshrl.u32 %v4978, 7
    %v4980 = vsub.s32 %v123, %v4979
    %v4981 = vrot.slane %v4846, %v4980
    %v4982 = vlaneseq
    %v4983 = vshrl.u32 %v4982, 7
    %v4984 = vsub.s32 %v1993, %v4983
    %v4985 = vrot.slane %v4849, %v4984
    %v4986 = vsel %vm1998, %v4985, %v4981
    %v4987 = vlaneseq
    %v4988 = vshrl.u32 %v4987, 7
    %v4989 = vsub.s32 %v123, %v4988
    %v4990 = vrot.slane %v4852, %v4989
    %v4991 = vlaneseq
    %v4992 = vshrl.u32 %v4991, 7
    %v4993 = vsub.s32 %v1993, %v4992
    %v4994 = vrot.slane %v4855, %v4993
    %v4995 = vsel %vm1998, %v4994, %v4990
    %v4996 = vlaneseq
    %v4997 = vshrl.u32 %v4996, 7
    %v4998 = vsub.s32 %v123, %v4997
    %v4999 = vrot.slane %v4858, %v4998
    %v5000 = vlaneseq
    %v5001 = vshrl.u32 %v5000, 7
    %v5002 = vsub.s32 %v1993, %v5001
    %v5003 = vrot.slane %v4861, %v5002
    %v5004 = vsel %vm1998, %v5003, %v4999
    %v5005 = vlaneseq
    %v5006 = vshrl.u32 %v5005, 7
    %v5007 = vsub.s32 %v123, %v5006
    %v5008 = vrot.slane %v4864, %v5007
    %v5009 = vlaneseq
    %v5010 = vshrl.u32 %v5009, 7
    %v5011 = vsub.s32 %v1993, %v5010
    %v5012 = vrot.slane %v4867, %v5011
    %v5013 = vsel %vm1998, %v5012, %v5008
    %v5014 = vlaneseq
    %v5015 = vshrl.u32 %v5014, 7
    %v5016 = vsub.s32 %v123, %v5015
    %v5017 = vrot.slane %v4870, %v5016
    %v5018 = vlaneseq
    %v5019 = vshrl.u32 %v5018, 7
    %v5020 = vsub.s32 %v1993, %v5019
    %v5021 = vrot.slane %v4873, %v5020
    %v5022 = vsel %vm1998, %v5021, %v5017
    %v5023 = vlaneseq
    %v5024 = vshrl.u32 %v5023, 7
    %v5025 = vsub.s32 %v123, %v5024
    %v5026 = vrot.slane %v4876, %v5025
    %v5027 = vlaneseq
    %v5028 = vshrl.u32 %v5027, 7
    %v5029 = vsub.s32 %v1993, %v5028
    %v5030 = vrot.slane %v4879, %v5029
    %v5031 = vsel %vm1998, %v5030, %v5026
    %v5032 = vlaneseq
    %v5033 = vshrl.u32 %v5032, 7
    %v5034 = vsub.s32 %v123, %v5033
    %v5035 = vrot.slane %v4882, %v5034
    %v5036 = vlaneseq
    %v5037 = vshrl.u32 %v5036, 7
    %v5038 = vsub.s32 %v1993, %v5037
    %v5039 = vrot.slane %v4885, %v5038
    %v5040 = vsel %vm1998, %v5039, %v5035
    %v5041 = vlaneseq
    %v5042 = vshrl.u32 %v5041, 7
    %v5043 = vsub.s32 %v123, %v5042
    %v5044 = vrot.slane %v4888, %v5043
    %v5045 = vlaneseq
    %v5046 = vshrl.u32 %v5045, 7
    %v5047 = vsub.s32 %v1993, %v5046
    %v5048 = vrot.slane %v4891, %v5047
    %v5049 = vsel %vm1998, %v5048, %v5044
    %v5050 = vlaneseq
    %v5051 = vshrl.u32 %v5050, 7
    %v5052 = vsub.s32 %v123, %v5051
    %v5053 = vrot.slane %v4894, %v5052
    %v5054 = vlaneseq
    %v5055 = vshrl.u32 %v5054, 7
    %v5056 = vsub.s32 %v1993, %v5055
    %v5057 = vrot.slane %v4897, %v5056
    %v5058 = vsel %vm1998, %v5057, %v5053
    %v5059 = vlaneseq
    %v5060 = vshrl.u32 %v5059, 7
    %v5061 = vsub.s32 %v123, %v5060
    %v5062 = vrot.slane %v4900, %v5061
    %v5063 = vlaneseq
    %v5064 = vshrl.u32 %v5063, 7
    %v5065 = vsub.s32 %v1993, %v5064
    %v5066 = vrot.slane %v4903, %v5065
    %v5067 = vsel %vm1998, %v5066, %v5062
    %v5068 = vlaneseq
    %v5069 = vshrl.u32 %v5068, 7
    %v5070 = vsub.s32 %v123, %v5069
    %v5071 = vrot.slane %v4906, %v5070
    %v5072 = vlaneseq
    %v5073 = vshrl.u32 %v5072, 7
    %v5074 = vsub.s32 %v1993, %v5073
    %v5075 = vrot.slane %v4909, %v5074
    %v5076 = vsel %vm1998, %v5075, %v5071
    %v5077 = vlaneseq
    %v5078 = vshrl.u32 %v5077, 7
    %v5079 = vsub.s32 %v123, %v5078
    %v5080 = vrot.slane %v4912, %v5079
    %v5081 = vlaneseq
    %v5082 = vshrl.u32 %v5081, 7
    %v5083 = vsub.s32 %v1993, %v5082
    %v5084 = vrot.slane %v4915, %v5083
    %v5085 = vsel %vm1998, %v5084, %v5080
    %v5086 = vlaneseq
    %v5087 = vshrl.u32 %v5086, 7
    %v5088 = vsub.s32 %v123, %v5087
    %v5089 = vrot.slane %v4918, %v5088
    %v5090 = vlaneseq
    %v5091 = vshrl.u32 %v5090, 7
    %v5092 = vsub.s32 %v1993, %v5091
    %v5093 = vrot.slane %v4921, %v5092
    %v5094 = vsel %vm1998, %v5093, %v5089
    %v5095 = vlaneseq
    %v5096 = vshrl.u32 %v5095, 7
    %v5097 = vsub.s32 %v123, %v5096
    %v5098 = vrot.slane %v4924, %v5097
    %v5099 = vlaneseq
    %v5100 = vshrl.u32 %v5099, 7
    %v5101 = vsub.s32 %v1993, %v5100
    %v5102 = vrot.slane %v4927, %v5101
    %v5103 = vsel %vm1998, %v5102, %v5098
    %v5104 = vsel %vm2135, %v4977, %v4968
    %v5105 = vsel %vm2137, %v4986, %v5104
    %v5106 = vsel %vm2139, %v4995, %v5105
    %v5107 = vsel %vm2141, %v5004, %v5106
    %v5108 = vsel %vm2143, %v5013, %v5107
    %v5109 = vsel %vm2145, %v5022, %v5108
    %v5110 = vsel %vm2147, %v5031, %v5109
    %v5111 = vsel %vm2135, %v5049, %v5040
    %v5112 = vsel %vm2137, %v5058, %v5111
    %v5113 = vsel %vm2139, %v5067, %v5112
    %v5114 = vsel %vm2141, %v5076, %v5113
    %v5115 = vsel %vm2143, %v5085, %v5114
    %v5116 = vsel %vm2145, %v5094, %v5115
    %v5117 = vsel %vm2147, %v5103, %v5116
    %5120 = vrot.lane.b32.xlu0 %v3470, 96
    %v5121 = vpop.permute.xlu0 %5120
    %5122 = vrot.lane.b32.xlu0 %v3474, 96
    %v5123 = vpop.permute.xlu0 %5122
    %v5126 = vsel %vm2164, %v5110, 0
    %v5128 = vsel %vm2164, %v5117, 0
    %5130 = vmatprep.subr.mxu0 0.0
    %5131 = vmatpush1.msra.mxu0 %v5121
    %5132 = vmatprep.subr.mxu0 0.0
    %5133 = vmatpush1.msra.mxu0 %v5123
    %5134 = vmatprep.subr.mxu0 0.0
    %5135 = vmatpush1.msra.mxu0 0.0
    %5136 = vmatprep.subr.mxu0 0.0
    %5137 = vmatpush1.msra.mxu0 0.0
    %5138 = vmatprep.subr.mxu0 0.0
    %5139 = vmatpush1.msra.mxu0 0.0
    %5140 = vmatprep.subr.mxu0 0.0
    %5141 = vmatpush1.msra.mxu0 0.0
    %5142 = vmatprep.subr.mxu0 0.0
    %5143 = vmatpush1.msra.mxu0 0.0
    %5144 = vmatprep.subr.mxu0 0.0
    %5145 = vmatpush1.msra.mxu0 0.0
    %5146 = vmatprep.subr.mxu0 0.0
    %5147 = vmatpush1.msra.mxu0 0.0
    %5148 = vmatprep.subr.mxu0 0.0
    %5149 = vmatpush1.msra.mxu0 0.0
    %5150 = vmatprep.subr.mxu0 0.0
    %5151 = vmatpush1.msra.mxu0 0.0
    %5152 = vmatprep.subr.mxu0 0.0
    %5153 = vmatpush1.msra.mxu0 0.0
    %5154 = vmatprep.subr.mxu0 0.0
    %5155 = vmatpush1.msra.mxu0 0.0
    %5156 = vmatprep.subr.mxu0 0.0
    %5157 = vmatpush1.msra.mxu0 0.0
    %5158 = vmatprep.subr.mxu0 0.0
    %5159 = vmatpush1.msra.mxu0 0.0
    %5160 = vmatprep.subr.mxu0 0.0
    %5161 = vmatpush1.msra.mxu0 0.0
    %5162 = vmatprep.subr.mxu0 0.0
    %5163 = vmatpush1.msra.mxu0 0.0
    %5164 = vmatprep.subr.mxu0 0.0
    %5165 = vmatpush1.msra.mxu0 0.0
    %5166 = vmatprep.subr.mxu0 0.0
    %5167 = vmatpush1.msra.mxu0 0.0
    %5168 = vmatprep.subr.mxu0 0.0
    %5169 = vmatpush1.msra.mxu0 0.0
    %5170 = vmatprep.subr.mxu0 0.0
    %5171 = vmatpush1.msra.mxu0 0.0
    %5172 = vmatprep.subr.mxu0 0.0
    %5173 = vmatpush1.msra.mxu0 0.0
    %5174 = vmatprep.subr.mxu0 0.0
    %5175 = vmatpush1.msra.mxu0 0.0
    %5176 = vmatprep.subr.mxu0 0.0
    %5177 = vmatpush1.msra.mxu0 0.0
    %5178 = vmatprep.subr.mxu0 0.0
    %5179 = vmatpush1.msra.mxu0 0.0
    %5180 = vmatprep.subr.mxu0 0.0
    %5181 = vmatpush1.msra.mxu0 0.0
    %5182 = vmatprep.subr.mxu0 0.0
    %5183 = vmatpush1.msra.mxu0 0.0
    %5184 = vmatprep.subr.mxu0 0.0
    %5185 = vmatpush1.msra.mxu0 0.0
    %5186 = vmatprep.subr.mxu0 0.0
    %5187 = vmatpush1.msra.mxu0 0.0
    %5188 = vmatprep.subr.mxu0 0.0
    %5189 = vmatpush1.msra.mxu0 0.0
    %5190 = vmatprep.subr.mxu0 0.0
    %5191 = vmatpush1.msra.mxu0 0.0
    %5192 = vmatprep.subr.mxu0 0.0
    %5193 = vmatpush1.msra.mxu0 0.0
    %5194 = vmatprep.mubr.f32.mxu0 0.0
    %5195 = vmatmul.mubr.f32.gmra.mrb[0].mxu0 %v5126
    %v5196 = vpop.f32.mrb[0].mxu0
    %v5197 = vadd.f32 0.0, %v5196
    %v5198 = vpop.f32.mrb[0].mxu0
    %5199 = vmatprep.mubr.f32.mxu0 0.0
    %5200 = vmatmul.mubr.f32.gmra.mrb[0].mxu0 %v5128
    %v5201 = vpop.f32.mrb[0].mxu0
    %v5202 = vadd.f32 0.0, %v5201
    %v5203 = vpop.f32.mrb[0].mxu0
    %5204 = vdwg.mxu0
    %v5237 = vlaneseq
    %v5238 = vshrl.u32 %v5237, 7
    %v5239 = vsub.s32 %v123, %v5238
    %v5240 = vrot.slane %v4706, %v5239
    %v5241 = vlaneseq
    %v5242 = vshrl.u32 %v5241, 7
    %v5243 = vsub.s32 %v1993, %v5242
    %v5244 = vrot.slane %v4709, %v5243
    %v5245 = vsel %vm1998, %v5244, %v5240
    %v5246 = vlaneseq
    %v5247 = vshrl.u32 %v5246, 7
    %v5248 = vsub.s32 %v123, %v5247
    %v5249 = vrot.slane %v4712, %v5248
    %v5250 = vlaneseq
    %v5251 = vshrl.u32 %v5250, 7
    %v5252 = vsub.s32 %v1993, %v5251
    %v5253 = vrot.slane %v4715, %v5252
    %v5254 = vsel %vm1998, %v5253, %v5249
    %v5255 = vlaneseq
    %v5256 = vshrl.u32 %v5255, 7
    %v5257 = vsub.s32 %v123, %v5256
    %v5258 = vrot.slane %v4718, %v5257
    %v5259 = vlaneseq
    %v5260 = vshrl.u32 %v5259, 7
    %v5261 = vsub.s32 %v1993, %v5260
    %v5262 = vrot.slane %v4721, %v5261
    %v5263 = vsel %vm1998, %v5262, %v5258
    %v5264 = vlaneseq
    %v5265 = vshrl.u32 %v5264, 7
    %v5266 = vsub.s32 %v123, %v5265
    %v5267 = vrot.slane %v4724, %v5266
    %v5268 = vlaneseq
    %v5269 = vshrl.u32 %v5268, 7
    %v5270 = vsub.s32 %v1993, %v5269
    %v5271 = vrot.slane %v4727, %v5270
    %v5272 = vsel %vm1998, %v5271, %v5267
    %v5273 = vlaneseq
    %v5274 = vshrl.u32 %v5273, 7
    %v5275 = vsub.s32 %v123, %v5274
    %v5276 = vrot.slane %v4730, %v5275
    %v5277 = vlaneseq
    %v5278 = vshrl.u32 %v5277, 7
    %v5279 = vsub.s32 %v1993, %v5278
    %v5280 = vrot.slane %v4733, %v5279
    %v5281 = vsel %vm1998, %v5280, %v5276
    %v5282 = vlaneseq
    %v5283 = vshrl.u32 %v5282, 7
    %v5284 = vsub.s32 %v123, %v5283
    %v5285 = vrot.slane %v4736, %v5284
    %v5286 = vlaneseq
    %v5287 = vshrl.u32 %v5286, 7
    %v5288 = vsub.s32 %v1993, %v5287
    %v5289 = vrot.slane %v4739, %v5288
    %v5290 = vsel %vm1998, %v5289, %v5285
    %v5291 = vlaneseq
    %v5292 = vshrl.u32 %v5291, 7
    %v5293 = vsub.s32 %v123, %v5292
    %v5294 = vrot.slane %v4742, %v5293
    %v5295 = vlaneseq
    %v5296 = vshrl.u32 %v5295, 7
    %v5297 = vsub.s32 %v1993, %v5296
    %v5298 = vrot.slane %v4745, %v5297
    %v5299 = vsel %vm1998, %v5298, %v5294
    %v5300 = vlaneseq
    %v5301 = vshrl.u32 %v5300, 7
    %v5302 = vsub.s32 %v123, %v5301
    %v5303 = vrot.slane %v4748, %v5302
    %v5304 = vlaneseq
    %v5305 = vshrl.u32 %v5304, 7
    %v5306 = vsub.s32 %v1993, %v5305
    %v5307 = vrot.slane %v4751, %v5306
    %v5308 = vsel %vm1998, %v5307, %v5303
    %v5309 = vlaneseq
    %v5310 = vshrl.u32 %v5309, 7
    %v5311 = vsub.s32 %v123, %v5310
    %v5312 = vrot.slane %v4754, %v5311
    %v5313 = vlaneseq
    %v5314 = vshrl.u32 %v5313, 7
    %v5315 = vsub.s32 %v1993, %v5314
    %v5316 = vrot.slane %v4757, %v5315
    %v5317 = vsel %vm1998, %v5316, %v5312
    %v5318 = vlaneseq
    %v5319 = vshrl.u32 %v5318, 7
    %v5320 = vsub.s32 %v123, %v5319
    %v5321 = vrot.slane %v4760, %v5320
    %v5322 = vlaneseq
    %v5323 = vshrl.u32 %v5322, 7
    %v5324 = vsub.s32 %v1993, %v5323
    %v5325 = vrot.slane %v4763, %v5324
    %v5326 = vsel %vm1998, %v5325, %v5321
    %v5327 = vlaneseq
    %v5328 = vshrl.u32 %v5327, 7
    %v5329 = vsub.s32 %v123, %v5328
    %v5330 = vrot.slane %v4766, %v5329
    %v5331 = vlaneseq
    %v5332 = vshrl.u32 %v5331, 7
    %v5333 = vsub.s32 %v1993, %v5332
    %v5334 = vrot.slane %v4769, %v5333
    %v5335 = vsel %vm1998, %v5334, %v5330
    %v5336 = vlaneseq
    %v5337 = vshrl.u32 %v5336, 7
    %v5338 = vsub.s32 %v123, %v5337
    %v5339 = vrot.slane %v4772, %v5338
    %v5340 = vlaneseq
    %v5341 = vshrl.u32 %v5340, 7
    %v5342 = vsub.s32 %v1993, %v5341
    %v5343 = vrot.slane %v4775, %v5342
    %v5344 = vsel %vm1998, %v5343, %v5339
    %v5345 = vlaneseq
    %v5346 = vshrl.u32 %v5345, 7
    %v5347 = vsub.s32 %v123, %v5346
    %v5348 = vrot.slane %v4778, %v5347
    %v5349 = vlaneseq
    %v5350 = vshrl.u32 %v5349, 7
    %v5351 = vsub.s32 %v1993, %v5350
    %v5352 = vrot.slane %v4781, %v5351
    %v5353 = vsel %vm1998, %v5352, %v5348
    %v5354 = vlaneseq
    %v5355 = vshrl.u32 %v5354, 7
    %v5356 = vsub.s32 %v123, %v5355
    %v5357 = vrot.slane %v4784, %v5356
    %v5358 = vlaneseq
    %v5359 = vshrl.u32 %v5358, 7
    %v5360 = vsub.s32 %v1993, %v5359
    %v5361 = vrot.slane %v4787, %v5360
    %v5362 = vsel %vm1998, %v5361, %v5357
    %v5363 = vlaneseq
    %v5364 = vshrl.u32 %v5363, 7
    %v5365 = vsub.s32 %v123, %v5364
    %v5366 = vrot.slane %v4790, %v5365
    %v5367 = vlaneseq
    %v5368 = vshrl.u32 %v5367, 7
    %v5369 = vsub.s32 %v1993, %v5368
    %v5370 = vrot.slane %v4793, %v5369
    %v5371 = vsel %vm1998, %v5370, %v5366
    %v5372 = vlaneseq
    %v5373 = vshrl.u32 %v5372, 7
    %v5374 = vsub.s32 %v123, %v5373
    %v5375 = vrot.slane %v4796, %v5374
    %v5376 = vlaneseq
    %v5377 = vshrl.u32 %v5376, 7
    %v5378 = vsub.s32 %v1993, %v5377
    %v5379 = vrot.slane %v4799, %v5378
    %v5380 = vsel %vm1998, %v5379, %v5375
    %v5381 = vsel %vm2135, %v5254, %v5245
    %v5382 = vsel %vm2137, %v5263, %v5381
    %v5383 = vsel %vm2139, %v5272, %v5382
    %v5384 = vsel %vm2141, %v5281, %v5383
    %v5385 = vsel %vm2143, %v5290, %v5384
    %v5386 = vsel %vm2145, %v5299, %v5385
    %v5387 = vsel %vm2147, %v5308, %v5386
    %v5388 = vsel %vm2135, %v5326, %v5317
    %v5389 = vsel %vm2137, %v5335, %v5388
    %v5390 = vsel %vm2139, %v5344, %v5389
    %v5391 = vsel %vm2141, %v5353, %v5390
    %v5392 = vsel %vm2143, %v5362, %v5391
    %v5393 = vsel %vm2145, %v5371, %v5392
    %v5394 = vsel %vm2147, %v5380, %v5393
    %v5395 = vsel %vm2164, %v5387, 0
    %v5397 = vsel %vm2164, %v5394, 0
    %5399 = vmatprep.subr.mxu0 0.0
    %5400 = vmatpush1.msra.mxu0 %v3470
    %5401 = vmatprep.subr.mxu0 0.0
    %5402 = vmatpush1.msra.mxu0 %v3474
    %5403 = vmatprep.subr.mxu0 0.0
    %5404 = vmatpush1.msra.mxu0 0.0
    %5405 = vmatprep.subr.mxu0 0.0
    %5406 = vmatpush1.msra.mxu0 0.0
    %5407 = vmatprep.subr.mxu0 0.0
    %5408 = vmatpush1.msra.mxu0 0.0
    %5409 = vmatprep.subr.mxu0 0.0
    %5410 = vmatpush1.msra.mxu0 0.0
    %5411 = vmatprep.subr.mxu0 0.0
    %5412 = vmatpush1.msra.mxu0 0.0
    %5413 = vmatprep.subr.mxu0 0.0
    %5414 = vmatpush1.msra.mxu0 0.0
    %5415 = vmatprep.subr.mxu0 0.0
    %5416 = vmatpush1.msra.mxu0 0.0
    %5417 = vmatprep.subr.mxu0 0.0
    %5418 = vmatpush1.msra.mxu0 0.0
    %5419 = vmatprep.subr.mxu0 0.0
    %5420 = vmatpush1.msra.mxu0 0.0
    %5421 = vmatprep.subr.mxu0 0.0
    %5422 = vmatpush1.msra.mxu0 0.0
    %5423 = vmatprep.subr.mxu0 0.0
    %5424 = vmatpush1.msra.mxu0 0.0
    %5425 = vmatprep.subr.mxu0 0.0
    %5426 = vmatpush1.msra.mxu0 0.0
    %5427 = vmatprep.subr.mxu0 0.0
    %5428 = vmatpush1.msra.mxu0 0.0
    %5429 = vmatprep.subr.mxu0 0.0
    %5430 = vmatpush1.msra.mxu0 0.0
    %5431 = vmatprep.subr.mxu0 0.0
    %5432 = vmatpush1.msra.mxu0 0.0
    %5433 = vmatprep.subr.mxu0 0.0
    %5434 = vmatpush1.msra.mxu0 0.0
    %5435 = vmatprep.subr.mxu0 0.0
    %5436 = vmatpush1.msra.mxu0 0.0
    %5437 = vmatprep.subr.mxu0 0.0
    %5438 = vmatpush1.msra.mxu0 0.0
    %5439 = vmatprep.subr.mxu0 0.0
    %5440 = vmatpush1.msra.mxu0 0.0
    %5441 = vmatprep.subr.mxu0 0.0
    %5442 = vmatpush1.msra.mxu0 0.0
    %5443 = vmatprep.subr.mxu0 0.0
    %5444 = vmatpush1.msra.mxu0 0.0
    %5445 = vmatprep.subr.mxu0 0.0
    %5446 = vmatpush1.msra.mxu0 0.0
    %5447 = vmatprep.subr.mxu0 0.0
    %5448 = vmatpush1.msra.mxu0 0.0
    %5449 = vmatprep.subr.mxu0 0.0
    %5450 = vmatpush1.msra.mxu0 0.0
    %5451 = vmatprep.subr.mxu0 0.0
    %5452 = vmatpush1.msra.mxu0 0.0
    %5453 = vmatprep.subr.mxu0 0.0
    %5454 = vmatpush1.msra.mxu0 0.0
    %5455 = vmatprep.subr.mxu0 0.0
    %5456 = vmatpush1.msra.mxu0 0.0
    %5457 = vmatprep.subr.mxu0 0.0
    %5458 = vmatpush1.msra.mxu0 0.0
    %5459 = vmatprep.subr.mxu0 0.0
    %5460 = vmatpush1.msra.mxu0 0.0
    %5461 = vmatprep.subr.mxu0 0.0
    %5462 = vmatpush1.msra.mxu0 0.0
    %5463 = vmatprep.mubr.f32.mxu0 0.0
    %5464 = vmatmul.mubr.f32.gmra.mrb[0].mxu0 %v5395
    %v5465 = vpop.f32.mrb[0].mxu0
    %v5466 = vadd.f32 %v5197, %v5465
    %v5467 = vpop.f32.mrb[0].mxu0
    %5468 = vmatprep.mubr.f32.mxu0 0.0
    %5469 = vmatmul.mubr.f32.gmra.mrb[0].mxu0 %v5397
    %v5470 = vpop.f32.mrb[0].mxu0
    %v5471 = vadd.f32 %v5202, %v5470
    %v5472 = vpop.f32.mrb[0].mxu0
    %5473 = vdwg.mxu0
    %v5474 = vsel %vm2515, %v4640, 0.0
    %v5475 = vsel %vm2515, %v4641, 0.0
    %v5476 = vsel %vm2515, %v4642, 0.0
    %v5477 = vsel %vm2515, %v4643, 0.0
    %v5478 = vsel %vm2515, %v4644, 0.0
    %v5479 = vsel %vm2515, %v4645, 0.0
    %v5480 = vsel %vm2515, %v4646, 0.0
    %v5481 = vsel %vm2515, %v4647, 0.0
    %v5482 = vsel %vm2515, %v4648, 0.0
    %v5483 = vsel %vm2515, %v4649, 0.0
    %v5484 = vsel %vm2515, %v4650, 0.0
    %v5485 = vsel %vm2515, %v4651, 0.0
    %v5486 = vsel %vm2515, %v4652, 0.0
    %v5487 = vsel %vm2515, %v4653, 0.0
    %v5488 = vsel %vm2515, %v4654, 0.0
    %v5489 = vsel %vm2515, %v4655, 0.0
    %v5490 = vsel %vm2515, %v4656, 0.0
    %v5491 = vsel %vm2515, %v4657, 0.0
    %v5492 = vsel %vm2515, %v4658, 0.0
    %v5493 = vsel %vm2515, %v4659, 0.0
    %v5494 = vsel %vm2515, %v4660, 0.0
    %v5495 = vsel %vm2515, %v4661, 0.0
    %v5496 = vsel %vm2515, %v4662, 0.0
    %v5497 = vsel %vm2515, %v4663, 0.0
    %v5498 = vsel %vm2515, %v4664, 0.0
    %v5499 = vsel %vm2515, %v4665, 0.0
    %v5500 = vsel %vm2515, %v4666, 0.0
    %v5501 = vsel %vm2515, %v4667, 0.0
    %v5502 = vsel %vm2515, %v4668, 0.0
    %v5503 = vsel %vm2515, %v4669, 0.0
    %v5504 = vsel %vm2515, %v4670, 0.0
    %v5505 = vsel %vm2515, %v4671, 0.0
    %v5506 = vsel %vm1246, %v5474, 0.0
    %5507 = vadd.xlane.f32.xlu0 %v5506
    %v5508 = vpop.xlane.xlu0 %5507
    %v5509 = vsel %vm1246, %v5475, 0.0
    %5510 = vadd.xlane.f32.xlu0 %v5509
    %v5511 = vpop.xlane.xlu0 %5510
    %v5512 = vsel %vm1246, %v5476, 0.0
    %5513 = vadd.xlane.f32.xlu0 %v5512
    %v5514 = vpop.xlane.xlu0 %5513
    %v5515 = vsel %vm1246, %v5477, 0.0
    %5516 = vadd.xlane.f32.xlu0 %v5515
    %v5517 = vpop.xlane.xlu0 %5516
    %v5518 = vsel %vm1246, %v5478, 0.0
    %5519 = vadd.xlane.f32.xlu0 %v5518
    %v5520 = vpop.xlane.xlu0 %5519
    %v5521 = vsel %vm1246, %v5479, 0.0
    %5522 = vadd.xlane.f32.xlu0 %v5521
    %v5523 = vpop.xlane.xlu0 %5522
    %v5524 = vsel %vm1246, %v5480, 0.0
    %5525 = vadd.xlane.f32.xlu0 %v5524
    %v5526 = vpop.xlane.xlu0 %5525
    %v5527 = vsel %vm1246, %v5481, 0.0
    %5528 = vadd.xlane.f32.xlu0 %v5527
    %v5529 = vpop.xlane.xlu0 %5528
    %v5530 = vsel %vm1246, %v5482, 0.0
    %5531 = vadd.xlane.f32.xlu0 %v5530
    %v5532 = vpop.xlane.xlu0 %5531
    %v5533 = vsel %vm1246, %v5483, 0.0
    %5534 = vadd.xlane.f32.xlu0 %v5533
    %v5535 = vpop.xlane.xlu0 %5534
    %v5536 = vsel %vm1246, %v5484, 0.0
    %5537 = vadd.xlane.f32.xlu0 %v5536
    %v5538 = vpop.xlane.xlu0 %5537
    %v5539 = vsel %vm1246, %v5485, 0.0
    %5540 = vadd.xlane.f32.xlu0 %v5539
    %v5541 = vpop.xlane.xlu0 %5540
    %v5542 = vsel %vm1246, %v5486, 0.0
    %5543 = vadd.xlane.f32.xlu0 %v5542
    %v5544 = vpop.xlane.xlu0 %5543
    %v5545 = vsel %vm1246, %v5487, 0.0
    %5546 = vadd.xlane.f32.xlu0 %v5545
    %v5547 = vpop.xlane.xlu0 %5546
    %v5548 = vsel %vm1246, %v5488, 0.0
    %5549 = vadd.xlane.f32.xlu0 %v5548
    %v5550 = vpop.xlane.xlu0 %5549
    %v5551 = vsel %vm1246, %v5489, 0.0
    %5552 = vadd.xlane.f32.xlu0 %v5551
    %v5553 = vpop.xlane.xlu0 %5552
    %v5554 = vsel %vm1246, %v5490, 0.0
    %5555 = vadd.xlane.f32.xlu0 %v5554
    %v5556 = vpop.xlane.xlu0 %5555
    %v5557 = vsel %vm1246, %v5491, 0.0
    %5558 = vadd.xlane.f32.xlu0 %v5557
    %v5559 = vpop.xlane.xlu0 %5558
    %v5560 = vsel %vm1246, %v5492, 0.0
    %5561 = vadd.xlane.f32.xlu0 %v5560
    %v5562 = vpop.xlane.xlu0 %5561
    %v5563 = vsel %vm1246, %v5493, 0.0
    %5564 = vadd.xlane.f32.xlu0 %v5563
    %v5565 = vpop.xlane.xlu0 %5564
    %v5566 = vsel %vm1246, %v5494, 0.0
    %5567 = vadd.xlane.f32.xlu0 %v5566
    %v5568 = vpop.xlane.xlu0 %5567
    %v5569 = vsel %vm1246, %v5495, 0.0
    %5570 = vadd.xlane.f32.xlu0 %v5569
    %v5571 = vpop.xlane.xlu0 %5570
    %v5572 = vsel %vm1246, %v5496, 0.0
    %5573 = vadd.xlane.f32.xlu0 %v5572
    %v5574 = vpop.xlane.xlu0 %5573
    %v5575 = vsel %vm1246, %v5497, 0.0
    %5576 = vadd.xlane.f32.xlu0 %v5575
    %v5577 = vpop.xlane.xlu0 %5576
    %v5578 = vsel %vm1246, %v5498, 0.0
    %5579 = vadd.xlane.f32.xlu0 %v5578
    %v5580 = vpop.xlane.xlu0 %5579
    %v5581 = vsel %vm1246, %v5499, 0.0
    %5582 = vadd.xlane.f32.xlu0 %v5581
    %v5583 = vpop.xlane.xlu0 %5582
    %v5584 = vsel %vm1246, %v5500, 0.0
    %5585 = vadd.xlane.f32.xlu0 %v5584
    %v5586 = vpop.xlane.xlu0 %5585
    %v5587 = vsel %vm1246, %v5501, 0.0
    %5588 = vadd.xlane.f32.xlu0 %v5587
    %v5589 = vpop.xlane.xlu0 %5588
    %v5590 = vsel %vm1246, %v5502, 0.0
    %5591 = vadd.xlane.f32.xlu0 %v5590
    %v5592 = vpop.xlane.xlu0 %5591
    %v5593 = vsel %vm1246, %v5503, 0.0
    %5594 = vadd.xlane.f32.xlu0 %v5593
    %v5595 = vpop.xlane.xlu0 %5594
    %v5596 = vsel %vm1246, %v5504, 0.0
    %5597 = vadd.xlane.f32.xlu0 %v5596
    %v5598 = vpop.xlane.xlu0 %5597
    %v5599 = vsel %vm1246, %v5505, 0.0
    %5600 = vadd.xlane.f32.xlu0 %v5599
    %v5601 = vpop.xlane.xlu0 %5600
    %v5634 = vlaneseq
    %v5635 = vshrl.u32 %v5634, 7
    %v5636 = vsub.s32 %v123, %v5635
    %v5637 = vrot.slane %v5508, %v5636
    %v5638 = vlaneseq
    %v5639 = vshrl.u32 %v5638, 7
    %v5640 = vsub.s32 %v1993, %v5639
    %v5641 = vrot.slane %v5511, %v5640
    %v5642 = vsel %vm1998, %v5641, %v5637
    %v5643 = vlaneseq
    %v5644 = vshrl.u32 %v5643, 7
    %v5645 = vsub.s32 %v123, %v5644
    %v5646 = vrot.slane %v5514, %v5645
    %v5647 = vlaneseq
    %v5648 = vshrl.u32 %v5647, 7
    %v5649 = vsub.s32 %v1993, %v5648
    %v5650 = vrot.slane %v5517, %v5649
    %v5651 = vsel %vm1998, %v5650, %v5646
    %v5652 = vlaneseq
    %v5653 = vshrl.u32 %v5652, 7
    %v5654 = vsub.s32 %v123, %v5653
    %v5655 = vrot.slane %v5520, %v5654
    %v5656 = vlaneseq
    %v5657 = vshrl.u32 %v5656, 7
    %v5658 = vsub.s32 %v1993, %v5657
    %v5659 = vrot.slane %v5523, %v5658
    %v5660 = vsel %vm1998, %v5659, %v5655
    %v5661 = vlaneseq
    %v5662 = vshrl.u32 %v5661, 7
    %v5663 = vsub.s32 %v123, %v5662
    %v5664 = vrot.slane %v5526, %v5663
    %v5665 = vlaneseq
    %v5666 = vshrl.u32 %v5665, 7
    %v5667 = vsub.s32 %v1993, %v5666
    %v5668 = vrot.slane %v5529, %v5667
    %v5669 = vsel %vm1998, %v5668, %v5664
    %v5670 = vlaneseq
    %v5671 = vshrl.u32 %v5670, 7
    %v5672 = vsub.s32 %v123, %v5671
    %v5673 = vrot.slane %v5532, %v5672
    %v5674 = vlaneseq
    %v5675 = vshrl.u32 %v5674, 7
    %v5676 = vsub.s32 %v1993, %v5675
    %v5677 = vrot.slane %v5535, %v5676
    %v5678 = vsel %vm1998, %v5677, %v5673
    %v5679 = vlaneseq
    %v5680 = vshrl.u32 %v5679, 7
    %v5681 = vsub.s32 %v123, %v5680
    %v5682 = vrot.slane %v5538, %v5681
    %v5683 = vlaneseq
    %v5684 = vshrl.u32 %v5683, 7
    %v5685 = vsub.s32 %v1993, %v5684
    %v5686 = vrot.slane %v5541, %v5685
    %v5687 = vsel %vm1998, %v5686, %v5682
    %v5688 = vlaneseq
    %v5689 = vshrl.u32 %v5688, 7
    %v5690 = vsub.s32 %v123, %v5689
    %v5691 = vrot.slane %v5544, %v5690
    %v5692 = vlaneseq
    %v5693 = vshrl.u32 %v5692, 7
    %v5694 = vsub.s32 %v1993, %v5693
    %v5695 = vrot.slane %v5547, %v5694
    %v5696 = vsel %vm1998, %v5695, %v5691
    %v5697 = vlaneseq
    %v5698 = vshrl.u32 %v5697, 7
    %v5699 = vsub.s32 %v123, %v5698
    %v5700 = vrot.slane %v5550, %v5699
    %v5701 = vlaneseq
    %v5702 = vshrl.u32 %v5701, 7
    %v5703 = vsub.s32 %v1993, %v5702
    %v5704 = vrot.slane %v5553, %v5703
    %v5705 = vsel %vm1998, %v5704, %v5700
    %v5706 = vlaneseq
    %v5707 = vshrl.u32 %v5706, 7
    %v5708 = vsub.s32 %v123, %v5707
    %v5709 = vrot.slane %v5556, %v5708
    %v5710 = vlaneseq
    %v5711 = vshrl.u32 %v5710, 7
    %v5712 = vsub.s32 %v1993, %v5711
    %v5713 = vrot.slane %v5559, %v5712
    %v5714 = vsel %vm1998, %v5713, %v5709
    %v5715 = vlaneseq
    %v5716 = vshrl.u32 %v5715, 7
    %v5717 = vsub.s32 %v123, %v5716
    %v5718 = vrot.slane %v5562, %v5717
    %v5719 = vlaneseq
    %v5720 = vshrl.u32 %v5719, 7
    %v5721 = vsub.s32 %v1993, %v5720
    %v5722 = vrot.slane %v5565, %v5721
    %v5723 = vsel %vm1998, %v5722, %v5718
    %v5724 = vlaneseq
    %v5725 = vshrl.u32 %v5724, 7
    %v5726 = vsub.s32 %v123, %v5725
    %v5727 = vrot.slane %v5568, %v5726
    %v5728 = vlaneseq
    %v5729 = vshrl.u32 %v5728, 7
    %v5730 = vsub.s32 %v1993, %v5729
    %v5731 = vrot.slane %v5571, %v5730
    %v5732 = vsel %vm1998, %v5731, %v5727
    %v5733 = vlaneseq
    %v5734 = vshrl.u32 %v5733, 7
    %v5735 = vsub.s32 %v123, %v5734
    %v5736 = vrot.slane %v5574, %v5735
    %v5737 = vlaneseq
    %v5738 = vshrl.u32 %v5737, 7
    %v5739 = vsub.s32 %v1993, %v5738
    %v5740 = vrot.slane %v5577, %v5739
    %v5741 = vsel %vm1998, %v5740, %v5736
    %v5742 = vlaneseq
    %v5743 = vshrl.u32 %v5742, 7
    %v5744 = vsub.s32 %v123, %v5743
    %v5745 = vrot.slane %v5580, %v5744
    %v5746 = vlaneseq
    %v5747 = vshrl.u32 %v5746, 7
    %v5748 = vsub.s32 %v1993, %v5747
    %v5749 = vrot.slane %v5583, %v5748
    %v5750 = vsel %vm1998, %v5749, %v5745
    %v5751 = vlaneseq
    %v5752 = vshrl.u32 %v5751, 7
    %v5753 = vsub.s32 %v123, %v5752
    %v5754 = vrot.slane %v5586, %v5753
    %v5755 = vlaneseq
    %v5756 = vshrl.u32 %v5755, 7
    %v5757 = vsub.s32 %v1993, %v5756
    %v5758 = vrot.slane %v5589, %v5757
    %v5759 = vsel %vm1998, %v5758, %v5754
    %v5760 = vlaneseq
    %v5761 = vshrl.u32 %v5760, 7
    %v5762 = vsub.s32 %v123, %v5761
    %v5763 = vrot.slane %v5592, %v5762
    %v5764 = vlaneseq
    %v5765 = vshrl.u32 %v5764, 7
    %v5766 = vsub.s32 %v1993, %v5765
    %v5767 = vrot.slane %v5595, %v5766
    %v5768 = vsel %vm1998, %v5767, %v5763
    %v5769 = vlaneseq
    %v5770 = vshrl.u32 %v5769, 7
    %v5771 = vsub.s32 %v123, %v5770
    %v5772 = vrot.slane %v5598, %v5771
    %v5773 = vlaneseq
    %v5774 = vshrl.u32 %v5773, 7
    %v5775 = vsub.s32 %v1993, %v5774
    %v5776 = vrot.slane %v5601, %v5775
    %v5777 = vsel %vm1998, %v5776, %v5772
    %v5778 = vsel %vm2135, %v5651, %v5642
    %v5779 = vsel %vm2137, %v5660, %v5778
    %v5780 = vsel %vm2139, %v5669, %v5779
    %v5781 = vsel %vm2141, %v5678, %v5780
    %v5782 = vsel %vm2143, %v5687, %v5781
    %v5783 = vsel %vm2145, %v5696, %v5782
    %v5784 = vsel %vm2147, %v5705, %v5783
    %v5785 = vsel %vm2135, %v5723, %v5714
    %v5786 = vsel %vm2137, %v5732, %v5785
    %v5787 = vsel %vm2139, %v5741, %v5786
    %v5788 = vsel %vm2141, %v5750, %v5787
    %v5789 = vsel %vm2143, %v5759, %v5788
    %v5790 = vsel %vm2145, %v5768, %v5789
    %v5791 = vsel %vm2147, %v5777, %v5790
    %5792 = vrot.lane.b32.xlu0 %v3470, 64
    %v5793 = vpop.permute.xlu0 %5792
    %5794 = vrot.lane.b32.xlu0 %v3474, 64
    %v5795 = vpop.permute.xlu0 %5794
    %v5798 = vsel %vm2164, %v5784, 0
    %v5800 = vsel %vm2164, %v5791, 0
    %5802 = vmatprep.subr.mxu0 0.0
    %5803 = vmatpush1.msra.mxu0 %v5793
    %5804 = vmatprep.subr.mxu0 0.0
    %5805 = vmatpush1.msra.mxu0 %v5795
    %5806 = vmatprep.subr.mxu0 0.0
    %5807 = vmatpush1.msra.mxu0 0.0
    %5808 = vmatprep.subr.mxu0 0.0
    %5809 = vmatpush1.msra.mxu0 0.0
    %5810 = vmatprep.subr.mxu0 0.0
    %5811 = vmatpush1.msra.mxu0 0.0
    %5812 = vmatprep.subr.mxu0 0.0
    %5813 = vmatpush1.msra.mxu0 0.0
    %5814 = vmatprep.subr.mxu0 0.0
    %5815 = vmatpush1.msra.mxu0 0.0
    %5816 = vmatprep.subr.mxu0 0.0
    %5817 = vmatpush1.msra.mxu0 0.0
    %5818 = vmatprep.subr.mxu0 0.0
    %5819 = vmatpush1.msra.mxu0 0.0
    %5820 = vmatprep.subr.mxu0 0.0
    %5821 = vmatpush1.msra.mxu0 0.0
    %5822 = vmatprep.subr.mxu0 0.0
    %5823 = vmatpush1.msra.mxu0 0.0
    %5824 = vmatprep.subr.mxu0 0.0
    %5825 = vmatpush1.msra.mxu0 0.0
    %5826 = vmatprep.subr.mxu0 0.0
    %5827 = vmatpush1.msra.mxu0 0.0
    %5828 = vmatprep.subr.mxu0 0.0
    %5829 = vmatpush1.msra.mxu0 0.0
    %5830 = vmatprep.subr.mxu0 0.0
    %5831 = vmatpush1.msra.mxu0 0.0
    %5832 = vmatprep.subr.mxu0 0.0
    %5833 = vmatpush1.msra.mxu0 0.0
    %5834 = vmatprep.subr.mxu0 0.0
    %5835 = vmatpush1.msra.mxu0 0.0
    %5836 = vmatprep.subr.mxu0 0.0
    %5837 = vmatpush1.msra.mxu0 0.0
    %5838 = vmatprep.subr.mxu0 0.0
    %5839 = vmatpush1.msra.mxu0 0.0
    %5840 = vmatprep.subr.mxu0 0.0
    %5841 = vmatpush1.msra.mxu0 0.0
    %5842 = vmatprep.subr.mxu0 0.0
    %5843 = vmatpush1.msra.mxu0 0.0
    %5844 = vmatprep.subr.mxu0 0.0
    %5845 = vmatpush1.msra.mxu0 0.0
    %5846 = vmatprep.subr.mxu0 0.0
    %5847 = vmatpush1.msra.mxu0 0.0
    %5848 = vmatprep.subr.mxu0 0.0
    %5849 = vmatpush1.msra.mxu0 0.0
    %5850 = vmatprep.subr.mxu0 0.0
    %5851 = vmatpush1.msra.mxu0 0.0
    %5852 = vmatprep.subr.mxu0 0.0
    %5853 = vmatpush1.msra.mxu0 0.0
    %5854 = vmatprep.subr.mxu0 0.0
    %5855 = vmatpush1.msra.mxu0 0.0
    %5856 = vmatprep.subr.mxu0 0.0
    %5857 = vmatpush1.msra.mxu0 0.0
    %5858 = vmatprep.subr.mxu0 0.0
    %5859 = vmatpush1.msra.mxu0 0.0
    %5860 = vmatprep.subr.mxu0 0.0
    %5861 = vmatpush1.msra.mxu0 0.0
    %5862 = vmatprep.subr.mxu0 0.0
    %5863 = vmatpush1.msra.mxu0 0.0
    %5864 = vmatprep.subr.mxu0 0.0
    %5865 = vmatpush1.msra.mxu0 0.0
    %5866 = vmatprep.mubr.f32.mxu0 0.0
    %5867 = vmatmul.mubr.f32.gmra.mrb[0].mxu0 %v5798
    %v5868 = vpop.f32.mrb[0].mxu0
    %v5869 = vadd.f32 0.0, %v5868
    %v5870 = vpop.f32.mrb[0].mxu0
    %5871 = vmatprep.mubr.f32.mxu0 0.0
    %5872 = vmatmul.mubr.f32.gmra.mrb[0].mxu0 %v5800
    %v5873 = vpop.f32.mrb[0].mxu0
    %v5874 = vadd.f32 0.0, %v5873
    %v5875 = vpop.f32.mrb[0].mxu0
    %5876 = vdwg.mxu0
    %v5877 = vadd.f32 %v5466, %v5869
    %v5878 = vadd.f32 %v5471, %v5874
    %v5879 = vsel %vm2923, %v4640, 0.0
    %v5880 = vsel %vm2923, %v4641, 0.0
    %v5881 = vsel %vm2923, %v4642, 0.0
    %v5882 = vsel %vm2923, %v4643, 0.0
    %v5883 = vsel %vm2923, %v4644, 0.0
    %v5884 = vsel %vm2923, %v4645, 0.0
    %v5885 = vsel %vm2923, %v4646, 0.0
    %v5886 = vsel %vm2923, %v4647, 0.0
    %v5887 = vsel %vm2923, %v4648, 0.0
    %v5888 = vsel %vm2923, %v4649, 0.0
    %v5889 = vsel %vm2923, %v4650, 0.0
    %v5890 = vsel %vm2923, %v4651, 0.0
    %v5891 = vsel %vm2923, %v4652, 0.0
    %v5892 = vsel %vm2923, %v4653, 0.0
    %v5893 = vsel %vm2923, %v4654, 0.0
    %v5894 = vsel %vm2923, %v4655, 0.0
    %v5895 = vsel %vm2923, %v4656, 0.0
    %v5896 = vsel %vm2923, %v4657, 0.0
    %v5897 = vsel %vm2923, %v4658, 0.0
    %v5898 = vsel %vm2923, %v4659, 0.0
    %v5899 = vsel %vm2923, %v4660, 0.0
    %v5900 = vsel %vm2923, %v4661, 0.0
    %v5901 = vsel %vm2923, %v4662, 0.0
    %v5902 = vsel %vm2923, %v4663, 0.0
    %v5903 = vsel %vm2923, %v4664, 0.0
    %v5904 = vsel %vm2923, %v4665, 0.0
    %v5905 = vsel %vm2923, %v4666, 0.0
    %v5906 = vsel %vm2923, %v4667, 0.0
    %v5907 = vsel %vm2923, %v4668, 0.0
    %v5908 = vsel %vm2923, %v4669, 0.0
    %v5909 = vsel %vm2923, %v4670, 0.0
    %v5910 = vsel %vm2923, %v4671, 0.0
    %v5911 = vsel %vm1246, %v5879, 0.0
    %5912 = vadd.xlane.f32.xlu0 %v5911
    %v5913 = vpop.xlane.xlu0 %5912
    %v5914 = vsel %vm1246, %v5880, 0.0
    %5915 = vadd.xlane.f32.xlu0 %v5914
    %v5916 = vpop.xlane.xlu0 %5915
    %v5917 = vsel %vm1246, %v5881, 0.0
    %5918 = vadd.xlane.f32.xlu0 %v5917
    %v5919 = vpop.xlane.xlu0 %5918
    %v5920 = vsel %vm1246, %v5882, 0.0
    %5921 = vadd.xlane.f32.xlu0 %v5920
    %v5922 = vpop.xlane.xlu0 %5921
    %v5923 = vsel %vm1246, %v5883, 0.0
    %5924 = vadd.xlane.f32.xlu0 %v5923
    %v5925 = vpop.xlane.xlu0 %5924
    %v5926 = vsel %vm1246, %v5884, 0.0
    %5927 = vadd.xlane.f32.xlu0 %v5926
    %v5928 = vpop.xlane.xlu0 %5927
    %v5929 = vsel %vm1246, %v5885, 0.0
    %5930 = vadd.xlane.f32.xlu0 %v5929
    %v5931 = vpop.xlane.xlu0 %5930
    %v5932 = vsel %vm1246, %v5886, 0.0
    %5933 = vadd.xlane.f32.xlu0 %v5932
    %v5934 = vpop.xlane.xlu0 %5933
    %v5935 = vsel %vm1246, %v5887, 0.0
    %5936 = vadd.xlane.f32.xlu0 %v5935
    %v5937 = vpop.xlane.xlu0 %5936
    %v5938 = vsel %vm1246, %v5888, 0.0
    %5939 = vadd.xlane.f32.xlu0 %v5938
    %v5940 = vpop.xlane.xlu0 %5939
    %v5941 = vsel %vm1246, %v5889, 0.0
    %5942 = vadd.xlane.f32.xlu0 %v5941
    %v5943 = vpop.xlane.xlu0 %5942
    %v5944 = vsel %vm1246, %v5890, 0.0
    %5945 = vadd.xlane.f32.xlu0 %v5944
    %v5946 = vpop.xlane.xlu0 %5945
    %v5947 = vsel %vm1246, %v5891, 0.0
    %5948 = vadd.xlane.f32.xlu0 %v5947
    %v5949 = vpop.xlane.xlu0 %5948
    %v5950 = vsel %vm1246, %v5892, 0.0
    %5951 = vadd.xlane.f32.xlu0 %v5950
    %v5952 = vpop.xlane.xlu0 %5951
    %v5953 = vsel %vm1246, %v5893, 0.0
    %5954 = vadd.xlane.f32.xlu0 %v5953
    %v5955 = vpop.xlane.xlu0 %5954
    %v5956 = vsel %vm1246, %v5894, 0.0
    %5957 = vadd.xlane.f32.xlu0 %v5956
    %v5958 = vpop.xlane.xlu0 %5957
    %v5959 = vsel %vm1246, %v5895, 0.0
    %5960 = vadd.xlane.f32.xlu0 %v5959
    %v5961 = vpop.xlane.xlu0 %5960
    %v5962 = vsel %vm1246, %v5896, 0.0
    %5963 = vadd.xlane.f32.xlu0 %v5962
    %v5964 = vpop.xlane.xlu0 %5963
    %v5965 = vsel %vm1246, %v5897, 0.0
    %5966 = vadd.xlane.f32.xlu0 %v5965
    %v5967 = vpop.xlane.xlu0 %5966
    %v5968 = vsel %vm1246, %v5898, 0.0
    %5969 = vadd.xlane.f32.xlu0 %v5968
    %v5970 = vpop.xlane.xlu0 %5969
    %v5971 = vsel %vm1246, %v5899, 0.0
    %5972 = vadd.xlane.f32.xlu0 %v5971
    %v5973 = vpop.xlane.xlu0 %5972
    %v5974 = vsel %vm1246, %v5900, 0.0
    %5975 = vadd.xlane.f32.xlu0 %v5974
    %v5976 = vpop.xlane.xlu0 %5975
    %v5977 = vsel %vm1246, %v5901, 0.0
    %5978 = vadd.xlane.f32.xlu0 %v5977
    %v5979 = vpop.xlane.xlu0 %5978
    %v5980 = vsel %vm1246, %v5902, 0.0
    %5981 = vadd.xlane.f32.xlu0 %v5980
    %v5982 = vpop.xlane.xlu0 %5981
    %v5983 = vsel %vm1246, %v5903, 0.0
    %5984 = vadd.xlane.f32.xlu0 %v5983
    %v5985 = vpop.xlane.xlu0 %5984
    %v5986 = vsel %vm1246, %v5904, 0.0
    %5987 = vadd.xlane.f32.xlu0 %v5986
    %v5988 = vpop.xlane.xlu0 %5987
    %v5989 = vsel %vm1246, %v5905, 0.0
    %5990 = vadd.xlane.f32.xlu0 %v5989
    %v5991 = vpop.xlane.xlu0 %5990
    %v5992 = vsel %vm1246, %v5906, 0.0
    %5993 = vadd.xlane.f32.xlu0 %v5992
    %v5994 = vpop.xlane.xlu0 %5993
    %v5995 = vsel %vm1246, %v5907, 0.0
    %5996 = vadd.xlane.f32.xlu0 %v5995
    %v5997 = vpop.xlane.xlu0 %5996
    %v5998 = vsel %vm1246, %v5908, 0.0
    %5999 = vadd.xlane.f32.xlu0 %v5998
    %v6000 = vpop.xlane.xlu0 %5999
    %v6001 = vsel %vm1246, %v5909, 0.0
    %6002 = vadd.xlane.f32.xlu0 %v6001
    %v6003 = vpop.xlane.xlu0 %6002
    %v6004 = vsel %vm1246, %v5910, 0.0
    %6005 = vadd.xlane.f32.xlu0 %v6004
    %v6006 = vpop.xlane.xlu0 %6005
    %v6039 = vlaneseq
    %v6040 = vshrl.u32 %v6039, 7
    %v6041 = vsub.s32 %v123, %v6040
    %v6042 = vrot.slane %v5913, %v6041
    %v6043 = vlaneseq
    %v6044 = vshrl.u32 %v6043, 7
    %v6045 = vsub.s32 %v1993, %v6044
    %v6046 = vrot.slane %v5916, %v6045
    %v6047 = vsel %vm1998, %v6046, %v6042
    %v6048 = vlaneseq
    %v6049 = vshrl.u32 %v6048, 7
    %v6050 = vsub.s32 %v123, %v6049
    %v6051 = vrot.slane %v5919, %v6050
    %v6052 = vlaneseq
    %v6053 = vshrl.u32 %v6052, 7
    %v6054 = vsub.s32 %v1993, %v6053
    %v6055 = vrot.slane %v5922, %v6054
    %v6056 = vsel %vm1998, %v6055, %v6051
    %v6057 = vlaneseq
    %v6058 = vshrl.u32 %v6057, 7
    %v6059 = vsub.s32 %v123, %v6058
    %v6060 = vrot.slane %v5925, %v6059
    %v6061 = vlaneseq
    %v6062 = vshrl.u32 %v6061, 7
    %v6063 = vsub.s32 %v1993, %v6062
    %v6064 = vrot.slane %v5928, %v6063
    %v6065 = vsel %vm1998, %v6064, %v6060
    %v6066 = vlaneseq
    %v6067 = vshrl.u32 %v6066, 7
    %v6068 = vsub.s32 %v123, %v6067
    %v6069 = vrot.slane %v5931, %v6068
    %v6070 = vlaneseq
    %v6071 = vshrl.u32 %v6070, 7
    %v6072 = vsub.s32 %v1993, %v6071
    %v6073 = vrot.slane %v5934, %v6072
    %v6074 = vsel %vm1998, %v6073, %v6069
    %v6075 = vlaneseq
    %v6076 = vshrl.u32 %v6075, 7
    %v6077 = vsub.s32 %v123, %v6076
    %v6078 = vrot.slane %v5937, %v6077
    %v6079 = vlaneseq
    %v6080 = vshrl.u32 %v6079, 7
    %v6081 = vsub.s32 %v1993, %v6080
    %v6082 = vrot.slane %v5940, %v6081
    %v6083 = vsel %vm1998, %v6082, %v6078
    %v6084 = vlaneseq
    %v6085 = vshrl.u32 %v6084, 7
    %v6086 = vsub.s32 %v123, %v6085
    %v6087 = vrot.slane %v5943, %v6086
    %v6088 = vlaneseq
    %v6089 = vshrl.u32 %v6088, 7
    %v6090 = vsub.s32 %v1993, %v6089
    %v6091 = vrot.slane %v5946, %v6090
    %v6092 = vsel %vm1998, %v6091, %v6087
    %v6093 = vlaneseq
    %v6094 = vshrl.u32 %v6093, 7
    %v6095 = vsub.s32 %v123, %v6094
    %v6096 = vrot.slane %v5949, %v6095
    %v6097 = vlaneseq
    %v6098 = vshrl.u32 %v6097, 7
    %v6099 = vsub.s32 %v1993, %v6098
    %v6100 = vrot.slane %v5952, %v6099
    %v6101 = vsel %vm1998, %v6100, %v6096
    %v6102 = vlaneseq
    %v6103 = vshrl.u32 %v6102, 7
    %v6104 = vsub.s32 %v123, %v6103
    %v6105 = vrot.slane %v5955, %v6104
    %v6106 = vlaneseq
    %v6107 = vshrl.u32 %v6106, 7
    %v6108 = vsub.s32 %v1993, %v6107
    %v6109 = vrot.slane %v5958, %v6108
    %v6110 = vsel %vm1998, %v6109, %v6105
    %v6111 = vlaneseq
    %v6112 = vshrl.u32 %v6111, 7
    %v6113 = vsub.s32 %v123, %v6112
    %v6114 = vrot.slane %v5961, %v6113
    %v6115 = vlaneseq
    %v6116 = vshrl.u32 %v6115, 7
    %v6117 = vsub.s32 %v1993, %v6116
    %v6118 = vrot.slane %v5964, %v6117
    %v6119 = vsel %vm1998, %v6118, %v6114
    %v6120 = vlaneseq
    %v6121 = vshrl.u32 %v6120, 7
    %v6122 = vsub.s32 %v123, %v6121
    %v6123 = vrot.slane %v5967, %v6122
    %v6124 = vlaneseq
    %v6125 = vshrl.u32 %v6124, 7
    %v6126 = vsub.s32 %v1993, %v6125
    %v6127 = vrot.slane %v5970, %v6126
    %v6128 = vsel %vm1998, %v6127, %v6123
    %v6129 = vlaneseq
    %v6130 = vshrl.u32 %v6129, 7
    %v6131 = vsub.s32 %v123, %v6130
    %v6132 = vrot.slane %v5973, %v6131
    %v6133 = vlaneseq
    %v6134 = vshrl.u32 %v6133, 7
    %v6135 = vsub.s32 %v1993, %v6134
    %v6136 = vrot.slane %v5976, %v6135
    %v6137 = vsel %vm1998, %v6136, %v6132
    %v6138 = vlaneseq
    %v6139 = vshrl.u32 %v6138, 7
    %v6140 = vsub.s32 %v123, %v6139
    %v6141 = vrot.slane %v5979, %v6140
    %v6142 = vlaneseq
    %v6143 = vshrl.u32 %v6142, 7
    %v6144 = vsub.s32 %v1993, %v6143
    %v6145 = vrot.slane %v5982, %v6144
    %v6146 = vsel %vm1998, %v6145, %v6141
    %v6147 = vlaneseq
    %v6148 = vshrl.u32 %v6147, 7
    %v6149 = vsub.s32 %v123, %v6148
    %v6150 = vrot.slane %v5985, %v6149
    %v6151 = vlaneseq
    %v6152 = vshrl.u32 %v6151, 7
    %v6153 = vsub.s32 %v1993, %v6152
    %v6154 = vrot.slane %v5988, %v6153
    %v6155 = vsel %vm1998, %v6154, %v6150
    %v6156 = vlaneseq
    %v6157 = vshrl.u32 %v6156, 7
    %v6158 = vsub.s32 %v123, %v6157
    %v6159 = vrot.slane %v5991, %v6158
    %v6160 = vlaneseq
    %v6161 = vshrl.u32 %v6160, 7
    %v6162 = vsub.s32 %v1993, %v6161
    %v6163 = vrot.slane %v5994, %v6162
    %v6164 = vsel %vm1998, %v6163, %v6159
    %v6165 = vlaneseq
    %v6166 = vshrl.u32 %v6165, 7
    %v6167 = vsub.s32 %v123, %v6166
    %v6168 = vrot.slane %v5997, %v6167
    %v6169 = vlaneseq
    %v6170 = vshrl.u32 %v6169, 7
    %v6171 = vsub.s32 %v1993, %v6170
    %v6172 = vrot.slane %v6000, %v6171
    %v6173 = vsel %vm1998, %v6172, %v6168
    %v6174 = vlaneseq
    %v6175 = vshrl.u32 %v6174, 7
    %v6176 = vsub.s32 %v123, %v6175
    %v6177 = vrot.slane %v6003, %v6176
    %v6178 = vlaneseq
    %v6179 = vshrl.u32 %v6178, 7
    %v6180 = vsub.s32 %v1993, %v6179
    %v6181 = vrot.slane %v6006, %v6180
    %v6182 = vsel %vm1998, %v6181, %v6177
    %v6183 = vsel %vm2135, %v6056, %v6047
    %v6184 = vsel %vm2137, %v6065, %v6183
    %v6185 = vsel %vm2139, %v6074, %v6184
    %v6186 = vsel %vm2141, %v6083, %v6185
    %v6187 = vsel %vm2143, %v6092, %v6186
    %v6188 = vsel %vm2145, %v6101, %v6187
    %v6189 = vsel %vm2147, %v6110, %v6188
    %v6190 = vsel %vm2135, %v6128, %v6119
    %v6191 = vsel %vm2137, %v6137, %v6190
    %v6192 = vsel %vm2139, %v6146, %v6191
    %v6193 = vsel %vm2141, %v6155, %v6192
    %v6194 = vsel %vm2143, %v6164, %v6193
    %v6195 = vsel %vm2145, %v6173, %v6194
    %v6196 = vsel %vm2147, %v6182, %v6195
    %6197 = vrot.lane.b32.xlu0 %v3470, 32
    %v6198 = vpop.permute.xlu0 %6197
    %6199 = vrot.lane.b32.xlu0 %v3474, 32
    %v6200 = vpop.permute.xlu0 %6199
    %v6203 = vsel %vm2164, %v6189, 0
    %v6205 = vsel %vm2164, %v6196, 0
    %6207 = vmatprep.subr.mxu0 0.0
    %6208 = vmatpush1.msra.mxu0 %v6198
    %6209 = vmatprep.subr.mxu0 0.0
    %6210 = vmatpush1.msra.mxu0 %v6200
    %6211 = vmatprep.subr.mxu0 0.0
    %6212 = vmatpush1.msra.mxu0 0.0
    %6213 = vmatprep.subr.mxu0 0.0
    %6214 = vmatpush1.msra.mxu0 0.0
    %6215 = vmatprep.subr.mxu0 0.0
    %6216 = vmatpush1.msra.mxu0 0.0
    %6217 = vmatprep.subr.mxu0 0.0
    %6218 = vmatpush1.msra.mxu0 0.0
    %6219 = vmatprep.subr.mxu0 0.0
    %6220 = vmatpush1.msra.mxu0 0.0
    %6221 = vmatprep.subr.mxu0 0.0
    %6222 = vmatpush1.msra.mxu0 0.0
    %6223 = vmatprep.subr.mxu0 0.0
    %6224 = vmatpush1.msra.mxu0 0.0
    %6225 = vmatprep.subr.mxu0 0.0
    %6226 = vmatpush1.msra.mxu0 0.0
    %6227 = vmatprep.subr.mxu0 0.0
    %6228 = vmatpush1.msra.mxu0 0.0
    %6229 = vmatprep.subr.mxu0 0.0
    %6230 = vmatpush1.msra.mxu0 0.0
    %6231 = vmatprep.subr.mxu0 0.0
    %6232 = vmatpush1.msra.mxu0 0.0
    %6233 = vmatprep.subr.mxu0 0.0
    %6234 = vmatpush1.msra.mxu0 0.0
    %6235 = vmatprep.subr.mxu0 0.0
    %6236 = vmatpush1.msra.mxu0 0.0
    %6237 = vmatprep.subr.mxu0 0.0
    %6238 = vmatpush1.msra.mxu0 0.0
    %6239 = vmatprep.subr.mxu0 0.0
    %6240 = vmatpush1.msra.mxu0 0.0
    %6241 = vmatprep.subr.mxu0 0.0
    %6242 = vmatpush1.msra.mxu0 0.0
    %6243 = vmatprep.subr.mxu0 0.0
    %6244 = vmatpush1.msra.mxu0 0.0
    %6245 = vmatprep.subr.mxu0 0.0
    %6246 = vmatpush1.msra.mxu0 0.0
    %6247 = vmatprep.subr.mxu0 0.0
    %6248 = vmatpush1.msra.mxu0 0.0
    %6249 = vmatprep.subr.mxu0 0.0
    %6250 = vmatpush1.msra.mxu0 0.0
    %6251 = vmatprep.subr.mxu0 0.0
    %6252 = vmatpush1.msra.mxu0 0.0
    %6253 = vmatprep.subr.mxu0 0.0
    %6254 = vmatpush1.msra.mxu0 0.0
    %6255 = vmatprep.subr.mxu0 0.0
    %6256 = vmatpush1.msra.mxu0 0.0
    %6257 = vmatprep.subr.mxu0 0.0
    %6258 = vmatpush1.msra.mxu0 0.0
    %6259 = vmatprep.subr.mxu0 0.0
    %6260 = vmatpush1.msra.mxu0 0.0
    %6261 = vmatprep.subr.mxu0 0.0
    %6262 = vmatpush1.msra.mxu0 0.0
    %6263 = vmatprep.subr.mxu0 0.0
    %6264 = vmatpush1.msra.mxu0 0.0
    %6265 = vmatprep.subr.mxu0 0.0
    %6266 = vmatpush1.msra.mxu0 0.0
    %6267 = vmatprep.subr.mxu0 0.0
    %6268 = vmatpush1.msra.mxu0 0.0
    %6269 = vmatprep.subr.mxu0 0.0
    %6270 = vmatpush1.msra.mxu0 0.0
    %6271 = vmatprep.mubr.f32.mxu0 0.0
    %6272 = vmatmul.mubr.f32.gmra.mrb[0].mxu0 %v6203
    %v6273 = vpop.f32.mrb[0].mxu0
    %v6274 = vadd.f32 0.0, %v6273
    %v6275 = vpop.f32.mrb[0].mxu0
    %6276 = vmatprep.mubr.f32.mxu0 0.0
    %6277 = vmatmul.mubr.f32.gmra.mrb[0].mxu0 %v6205
    %v6278 = vpop.f32.mrb[0].mxu0
    %v6279 = vadd.f32 0.0, %v6278
    %v6280 = vpop.f32.mrb[0].mxu0
    %6281 = vdwg.mxu0
    %v6282 = vadd.f32 %v5877, %v6274
    %v6283 = vadd.f32 %v5878, %v6279
    %v6284 = vmul.f32 %v6282, 0.25
    %v6285 = vmul.f32 %v6283, 0.25
    %v6286 = vld [vmem:[%s14] sm:$0x1]
    %v6288 = vlaneseq
    %v6289 = vshrl.u32 %v6288, 7
    %v6290 = vsub.s32 0, %v6289
    %v6291 = vrot.slane %v6286, %v6290
    %v6293 = vadd.f32 %v6284, %v6291
    %v6294 = vadd.f32 %v6285, %v6291
    %v6295 = vsel %vm163, %v6293, 0.0
    %6296 = vadd.xlane.f32.xlu0 %v6295
    %v6297 = vpop.xlane.xlu0 %6296
    %v6298 = vsel %vm163, %v6294, 0.0
    %6299 = vadd.xlane.f32.xlu0 %v6298
    %v6300 = vpop.xlane.xlu0 %6299
    %v6301 = vmul.f32 %v6297, %v3346
    %v6302 = vmul.f32 %v6300, %v3346
    %v6303 = vsub.f32 %v6293, %v6301
    %v6304 = vsub.f32 %v6294, %v6302
    %v6305 = vmul.f32 %v6303, %v6303
    %v6306 = vmul.f32 %v6304, %v6304
    %v6307 = vsel %vm163, %v6305, 0.0
    %6308 = vadd.xlane.f32.xlu0 %v6307
    %v6309 = vpop.xlane.xlu0 %6308
    %v6310 = vsel %vm163, %v6306, 0.0
    %6311 = vadd.xlane.f32.xlu0 %v6310
    %v6312 = vpop.xlane.xlu0 %6311
    %v6313 = vmul.f32 %v6309, %v3346
    %v6314 = vmul.f32 %v6312, %v3346
    %v6315 = vadd.f32 %v6313, 1e-05
    %v6316 = vadd.f32 %v6314, 1e-05
    %v6317 = vrsqrt.pop %v6315
    %v6318 = vrsqrt.pop %v6316
    %v6319 = vmul.f32 %v6303, %v6317
    %v6320 = vmul.f32 %v6304, %v6318
    %v6321 = vld [vmem:[%s15] sm:$0x1]
    %v6323 = vlaneseq
    %v6324 = vshrl.u32 %v6323, 7
    %v6325 = vsub.s32 0, %v6324
    %v6326 = vrot.slane %v6321, %v6325
    %v6328 = vmul.f32 %v6319, %v6326
    %v6329 = vmul.f32 %v6320, %v6326
    %v6330 = vld [vmem:[%s16] sm:$0x1]
    %v6332 = vlaneseq
    %v6333 = vshrl.u32 %v6332, 7
    %v6334 = vsub.s32 0, %v6333
    %v6335 = vrot.slane %v6330, %v6334
    %v6337 = vadd.f32 %v6328, %v6335
    %v6338 = vadd.f32 %v6329, %v6335
    %v6339 = vadd.f32 %v6337, %v124
    %v6340 = vadd.f32 %v6338, %v125
    %v6341 = vmul.f32 %v6339, 0.5
    %v6342 = vmul.f32 %v6340, 0.5
    %v6343 = vmul.f32 %v6339, 0.70710677
    %v6344 = vmul.f32 %v6340, 0.70710677
    %v6345 = verf.f32.pop %v6343
    %v6346 = verf.f32.pop %v6344
    %v6347 = vadd.f32 %v6345, 1.0
    %v6348 = vadd.f32 %v6346, 1.0
    %v6349 = vmul.f32 %v6341, %v6347
    %v6350 = vmul.f32 %v6342, %v6348
    %6351 = vst.msk [vmem:[#allocation2] sm:$0xff] %vm163, %v6349
    %6352 = vst.msk [vmem:[#allocation2 + $0x8] sm:$0xff] %vm163, %v6350
    // Predicated region
    $region70: #{resgnn_block.1} parent=1 // pred_check
      _
    $region71: #{resgnn_block.1} parent=1 // pred_check_branch
      %6354 = sbr.rel (0) target = $region73
    $region72: #{resgnn_block.1} parent=1 // pred_region
      %s6356 = ssub.s32 256, 256
      %6357 = vsyncadd [#allocation3], %s6356
      %s6358 = sshll.u32 [#allocation2], 4
      %s6359 = int_to_ptr.vmem [resolvable:$true] %s6358
      %6364 = dma.vmem_to_hbm [thread:$0]  %s6359, 256, %s17, [#allocation3], 128, 128, 8
    $region73: #{resgnn_block.1} parent=1 // pred_fallthru
      _
    // Predicated region
    $region74: #{resgnn_block.1} parent=1 // pred_check
      _
    $region75: #{resgnn_block.1} parent=1 // pred_check_branch
      %6366 = sbr.rel (0) target = $region77
    $region76: #{resgnn_block.1} parent=1 // pred_region
      %6367 = dma.done [#allocation3], 256
    $region77: #{resgnn_block.1} parent=1 // pred_fallthru
      _
    %6368 = vsyncpa [#allocation3], 1

</llo_original>
